<compile_context>
chip_gen: v7x
topology: tpu7x:2x2x1
jax: 0.10.0
libtpu: 0.0.40
codegen_flags: <defaults>
</compile_context>

<pallas_src>
import jax
import jax.numpy as jnp
from jax import lax
from jax.experimental import pallas as pl
from jax.experimental.pallas import tpu as pltpu


def _round_up(x, m):
    return (x + m - 1) // m * m


# --------------------------------------------------------------------------
# Pallas kernels
# --------------------------------------------------------------------------

def _conv_stats_kernel(x_ref, w_ref, conv_ref, stats_ref):
    """Pass 1: fused 3x3-conv-as-matmul + per-tile BN partial statistics.

    x_ref:     (tile_rows, 9*Cin)  im2col tile
    w_ref:     (9*Cin, Cout)       folded conv weights (resident across grid)
    conv_ref:  (tile_rows, Cout)   conv output tile (pre-BN)
    stats_ref: (1, 2, Cout)        per-tile [sum, sum-of-squares]
    """
    acc = jnp.dot(x_ref[...], w_ref[...], preferred_element_type=jnp.float32)
    conv_ref[...] = acc
    s1 = jnp.sum(acc, axis=0, keepdims=True)        # (1, Cout)
    s2 = jnp.sum(acc * acc, axis=0, keepdims=True)  # (1, Cout)
    stats_ref[...] = jnp.concatenate([s1, s2], axis=0)[None]


def _bn_relu_kernel(conv_ref, scale_ref, shift_ref, o_ref):
    """Pass 2: folded BatchNorm affine + ReLU (y = max(conv*scale + shift, 0))."""
    o_ref[...] = jnp.maximum(conv_ref[...] * scale_ref[...] + shift_ref[...], 0.0)


# --------------------------------------------------------------------------
# ConvolutionLayer wrapper (NHWC in, NHWC out)
# --------------------------------------------------------------------------

def conv_bn_relu_nhwc(x, weight, gamma, beta, *, dilation=1, eps=1e-5,
                      tile_rows=256):
    """U2-Net ConvolutionLayer forward.

    x:      (N, H, W, Cin)  float32 channels-last
    weight: (Cout, Cin, 3, 3) PyTorch OIHW
    gamma, beta: (Cout,) BatchNorm affine parameters

    The Conv2d bias is intentionally not used: under training-mode BatchNorm
    the bias is exactly absorbed by the batch mean (variance is unchanged).

    tile_rows=256 exercises the multi-tile path at small test sizes; sweep
    512-1024 for production shapes.
    """
    n, h, w, c_in = x.shape
    c_out = weight.shape[0]
    d = int(dilation)
    k = 9 * c_in
    rows = n * h * w

    # Spatial zero-padding + im2col (rows, 9*Cin). Column order (kh, kw, cin)
    # matches the (3, 3, Cin, Cout) -> (9*Cin, Cout) weight fold below, so the
    # whole 3x3 conv is ONE matmul contraction of length 9*Cin.
    x_pad = jnp.pad(x.astype(jnp.float32), ((0, 0), (d, d), (d, d), (0, 0)))
    taps = [x_pad[:, kh * d:kh * d + h, kw * d:kw * d + w, :]
            for kh in range(3) for kw in range(3)]
    x_cols = jnp.stack(taps, axis=3).reshape(rows, k)

    w_cols = jnp.transpose(weight, (2, 3, 1, 0)).reshape(k, c_out)
    w_cols = w_cols.astype(jnp.float32)

    # Row tiling. Zero-padded rows contribute exactly 0 to the conv output and
    # to the BN partial sums (no conv bias), so statistics stay exact.
    tr = min(int(tile_rows), _round_up(rows, 8))
    num_tiles = pl.cdiv(rows, tr)
    rows_pad = num_tiles * tr
    if rows_pad != rows:
        x_cols = jnp.pad(x_cols, ((0, rows_pad - rows), (0, 0)))

    cparams = pltpu.CompilerParams(
        dimension_semantics=("parallel",),          # v7x: split tiles across TCs
        vmem_limit_bytes=32 * 1024 * 1024,
    )

    # ---- Pass 1: conv + per-tile partial statistics --------------------------
    conv_flat, stats = pl.pallas_call(
        _conv_stats_kernel,
        out_shape=(
            jax.ShapeDtypeStruct((rows_pad, c_out), jnp.float32),
            jax.ShapeDtypeStruct((num_tiles, 2, c_out), jnp.float32),
        ),
        grid=(num_tiles,),
        in_specs=[
            pl.BlockSpec((tr, k), lambda i: (i, 0)),
            pl.BlockSpec((k, c_out), lambda i: (0, 0)),   # weights stay resident
        ],
        out_specs=(
            pl.BlockSpec((tr, c_out), lambda i: (i, 0)),
            pl.BlockSpec((1, 2, c_out), lambda i: (i, 0, 0)),
        ),
        compiler_params=cparams,
    )(x_cols, w_cols)

    # ---- Tiny O(Cout) cross-tile combine + folded BN affine ------------------
    count = jnp.float32(rows)
    total = jnp.sum(stats, axis=0)                       # (2, Cout)
    mean = total[0] / count
    var = jnp.maximum(total[1] / count - mean * mean, 0.0)
    inv_std = lax.rsqrt(var + jnp.float32(eps))
    scale1d = gamma.astype(jnp.float32) * inv_std
    shift1d = beta.astype(jnp.float32) - mean * scale1d
    scale = scale1d.reshape(1, c_out)
    shift = shift1d.reshape(1, c_out)

    # ---- Pass 2: normalize + ReLU, written in place over the conv buffer -----
    y_flat = pl.pallas_call(
        _bn_relu_kernel,
        out_shape=jax.ShapeDtypeStruct((rows_pad, c_out), jnp.float32),
        grid=(num_tiles,),
        in_specs=[
            pl.BlockSpec((tr, c_out), lambda i: (i, 0)),
            pl.BlockSpec((1, c_out), lambda i: (0, 0)),
            pl.BlockSpec((1, c_out), lambda i: (0, 0)),
        ],
        out_specs=pl.BlockSpec((tr, c_out), lambda i: (i, 0)),
        input_output_aliases={0: 0},
        compiler_params=cparams,
    )(conv_flat, scale, shift)

    return y_flat[:rows].reshape(n, h, w, c_out)


# --------------------------------------------------------------------------
# Data-movement glue (XLA): maxpool, bilinear upsample
# --------------------------------------------------------------------------

def max_pool_2x2_nhwc(x):
    n, h, w, c = x.shape
    return jnp.max(x.reshape(n, h // 2, 2, w // 2, 2, c), axis=(2, 4))


def _bilinear_axis(out_size, in_size):
    scale = in_size / out_size
    src = (jnp.arange(out_size, dtype=jnp.float32) + 0.5) * scale - 0.5
    src = jnp.clip(src, 0.0, in_size - 1)
    lo = jnp.floor(src).astype(jnp.int32)
    hi = jnp.minimum(lo + 1, in_size - 1)
    frac = src - lo.astype(jnp.float32)
    return lo, hi, frac


def upsample_like_nhwc(src, tar_h, tar_w):
    """F.interpolate(mode='bilinear', align_corners=False) to (tar_h, tar_w)."""
    i0, i1, fi = _bilinear_axis(tar_h, src.shape[1])
    j0, j1, fj = _bilinear_axis(tar_w, src.shape[2])
    rows = (src[:, i0, :, :] * (1.0 - fi)[None, :, None, None]
            + src[:, i1, :, :] * fi[None, :, None, None])
    out = (rows[:, :, j0, :] * (1.0 - fj)[None, None, :, None]
           + rows[:, :, j1, :] * fj[None, None, :, None])
    return out


# --------------------------------------------------------------------------
# UNet4 forward (Pallas conv layers) and pure-JAX reference
# --------------------------------------------------------------------------

def _unet4_body(x_nhwc, conv_layer_fn):
    x0 = conv_layer_fn("conv0", x_nhwc, 1)
    x1 = conv_layer_fn("conv1", x0, 1)
    d1 = max_pool_2x2_nhwc(x1)
    x2 = conv_layer_fn("conv2", d1, 1)
    d2 = max_pool_2x2_nhwc(x2)
    x3 = conv_layer_fn("conv3", d2, 1)
    x4 = conv_layer_fn("conv4", x3, 2)
    x5 = conv_layer_fn("conv5", jnp.concatenate([x4, x3], axis=-1), 1)
    up1 = upsample_like_nhwc(x5, x2.shape[1], x2.shape[2])
    x6 = conv_layer_fn("conv6", jnp.concatenate([up1, x2], axis=-1), 1)
    up2 = upsample_like_nhwc(x6, x1.shape[1], x1.shape[2])
    x7 = conv_layer_fn("conv7", jnp.concatenate([up2, x1], axis=-1), 1)
    return x7 + x0


def unet4_forward(x_nchw, params):
    x = jnp.transpose(x_nchw, (0, 2, 3, 1)).astype(jnp.float32)  # NHWC end-to-end

    def layer(name, inp, dilation):
        p = params[name]
        return conv_bn_relu_nhwc(inp, p["weight"], p["gamma"], p["beta"],
                                 dilation=dilation)

    out = _unet4_body(x, layer)
    return jnp.transpose(out, (0, 3, 1, 2))                      # back to NCHW once


def _conv_bn_relu_ref(x_nhwc, weight, bias, gamma, beta, dilation, eps=1e-5):
    d = int(dilation)
    w_hwio = jnp.transpose(weight, (2, 3, 1, 0))
    out = lax.conv_general_dilated(
        x_nhwc, w_hwio, window_strides=(1, 1),
        padding=((d, d), (d, d)), rhs_dilation=(d, d),
        dimension_numbers=("NHWC", "HWIO", "NHWC"))
    out = out + bias[None, None, None, :]
    mean = out.mean(axis=(0, 1, 2), keepdims=True)
    var = ((out - mean) ** 2).mean(axis=(0, 1, 2), keepdims=True)
    y = (out - mean) * lax.rsqrt(var + eps)
    y = y * gamma[None, None, None, :] + beta[None, None, None, :]
    return jnp.maximum(y, 0.0)


def unet4_reference(x_nchw, params):
    x = jnp.transpose(x_nchw, (0, 2, 3, 1)).astype(jnp.float32)

    def layer(name, inp, dilation):
        p = params[name]
        return _conv_bn_relu_ref(inp, p["weight"], p["bias"], p["gamma"],
                                 p["beta"], dilation)

    out = _unet4_body(x, layer)
    return jnp.transpose(out, (0, 3, 1, 2))


def init_params(key, in_channels, mid_channels, out_channels):
    specs = {
        "conv0": (in_channels, out_channels),
        "conv1": (out_channels, mid_channels),
        "conv2": (mid_channels, mid_channels),
        "conv3": (mid_channels, mid_channels),
        "conv4": (mid_channels, mid_channels),
        "conv5": (2 * mid_channels, mid_channels),
        "conv6": (2 * mid_channels, mid_channels),
        "conv7": (2 * mid_channels, out_channels),
    }
    params = {}
    for name, (cin, cout) in specs.items():
        key, kw, kb, kg, kbt = jax.random.split(key, 5)
        params[name] = {
            "weight": jax.random.normal(kw, (cout, cin, 3, 3), jnp.float32) * 0.1,
            "bias": jax.random.normal(kb, (cout,), jnp.float32) * 0.1,
            "gamma": 1.0 + 0.1 * jax.random.normal(kg, (cout,), jnp.float32),
            "beta": 0.1 * jax.random.normal(kbt, (cout,), jnp.float32),
        }
    return params


if __name__ == "__main__":
    key = jax.random.PRNGKey(0)
    k_x, k_p = jax.random.split(key)

    N, Cin, H, W = 2, 4, 16, 16
    mid_channels, out_channels = 16, 8

    x = jax.random.normal(k_x, (N, Cin, H, W), dtype=jnp.float32)
    params = init_params(k_p, Cin, mid_channels, out_channels)

    out = jax.block_until_ready(jax.jit(unet4_forward)(x, params))
    ref = jax.block_until_ready(jax.jit(unet4_reference)(x, params))

    assert out.shape == (N, out_channels, H, W), out.shape
    max_err = float(jnp.max(jnp.abs(out - ref)))
    assert jnp.allclose(out, ref, atol=5e-3, rtol=5e-3), max_err

    print("KERNEL_OK")
</pallas_src>

<mosaic_0001>
module attributes {stable_mosaic.version = 11 : i64} {
  func.func @_conv_stats_kernel(%arg0: i32, %arg1: memref<256x36xf32, #tpu.memory_space<vmem>>, %arg2: memref<36x8xf32, #tpu.memory_space<vmem>>, %arg3: memref<256x8xf32, #tpu.memory_space<vmem>>, %arg4: memref<1x2x8xf32, #tpu.memory_space<vmem>>) attributes {dimension_semantics = [#tpu.dimension_semantics<parallel>], iteration_bounds = array<i64: 2>, scalar_prefetch = 0 : i64, scratch_operands = 0 : i64, tpu.core_type = #tpu.core_type<tc>, window_params = [{transform_indices = @transform_0, window_bounds = array<i64: 256, 36>}, {pipeline_mode = #tpu.pipeline_mode<synchronous>, transform_indices = @transform_1, window_bounds = array<i64: 36, 8>}, {transform_indices = @transform_2, window_bounds = array<i64: 256, 8>}, {transform_indices = @transform_3, window_bounds = array<i64: 1, 2, 8>}]} {
    %c0 = arith.constant 0 : index
    %c0_0 = arith.constant 0 : index
    %0 = vector.load %arg1[%c0, %c0_0] : memref<256x36xf32, #tpu.memory_space<vmem>>, vector<256x36xf32>
    %c0_1 = arith.constant 0 : index
    %c0_2 = arith.constant 0 : index
    %1 = vector.load %arg2[%c0_1, %c0_2] : memref<36x8xf32, #tpu.memory_space<vmem>>, vector<36x8xf32>
    %cst = arith.constant dense<0.000000e+00> : vector<256x8xf32>
    %2 = tpu.matmul %0, %1, %cst {dimension_numbers = #tpu.dot_dimension_numbers<[1], [0], [0], [1], [0, 0, 1, 1], [], []>} : vector<256x36xf32>, vector<36x8xf32>, vector<256x8xf32> -> vector<256x8xf32>
    %c0_3 = arith.constant 0 : index
    %c0_4 = arith.constant 0 : index
    %3 = vector.load %arg3[%c0_3, %c0_4] : memref<256x8xf32, #tpu.memory_space<vmem>>, vector<256x8xf32>
    tpu.vector_store %arg3[%c0_3, %c0_4], %2 {strides = array<i32>} : memref<256x8xf32, #tpu.memory_space<vmem>>, vector<256x8xf32>,
    %cst_5 = arith.constant dense<0.000000e+00> : vector<8xf32>
    %4 = vector.multi_reduction <add>, %2, %cst_5 [0] : vector<256x8xf32> to vector<8xf32>
    %5 = vector.shape_cast %4 : vector<8xf32> to vector<1x8xf32>
    %6 = arith.mulf %2, %2 : vector<256x8xf32>
    %cst_6 = arith.constant dense<0.000000e+00> : vector<8xf32>
    %7 = vector.multi_reduction <add>, %6, %cst_6 [0] : vector<256x8xf32> to vector<8xf32>
    %8 = vector.shape_cast %7 : vector<8xf32> to vector<1x8xf32>
    %9 = tpu.concatenate %5, %8 in 0 : vector<1x8xf32>, vector<1x8xf32> -> vector<2x8xf32>
    %10 = vector.shape_cast %9 : vector<2x8xf32> to vector<1x2x8xf32>
    %c0_7 = arith.constant 0 : index
    %c0_8 = arith.constant 0 : index
    %c0_9 = arith.constant 0 : index
    %11 = vector.load %arg4[%c0_7, %c0_8, %c0_9] : memref<1x2x8xf32, #tpu.memory_space<vmem>>, vector<1x2x8xf32>
    tpu.vector_store %arg4[%c0_7, %c0_8, %c0_9], %10 {strides = array<i32>} : memref<1x2x8xf32, #tpu.memory_space<vmem>>, vector<1x2x8xf32>,
    return
  }
  func.func @transform_0(%arg0: i32) -> (i32, i32) {
    %c0_i32 = arith.constant 0 : i32
    %c0_i32_0 = arith.constant 0 : i32
    return %arg0, %c0_i32 : i32, i32
  }
  func.func @transform_1(%arg0: i32) -> (i32, i32) {
    %c0_i32 = arith.constant 0 : i32
    %c0_i32_0 = arith.constant 0 : i32
    %c0_i32_1 = arith.constant 0 : i32
    return %c0_i32, %c0_i32_0 : i32, i32
  }
  func.func @transform_2(%arg0: i32) -> (i32, i32) {
    %c0_i32 = arith.constant 0 : i32
    %c0_i32_0 = arith.constant 0 : i32
    return %arg0, %c0_i32 : i32, i32
  }
  func.func @transform_3(%arg0: i32) -> (i32, i32, i32) {
    %c0_i32 = arith.constant 0 : i32
    %c0_i32_0 = arith.constant 0 : i32
    %c0_i32_1 = arith.constant 0 : i32
    return %arg0, %c0_i32, %c0_i32_0 : i32, i32, i32
  }
}

module attributes {stable_mosaic.version = 11 : i64} {
  func.func @_bn_relu_kernel(%arg0: i32, %arg1: memref<256x8xf32, #tpu.memory_space<vmem>>, %arg2: memref<1x8xf32, #tpu.memory_space<vmem>>, %arg3: memref<1x8xf32, #tpu.memory_space<vmem>>, %arg4: memref<256x8xf32, #tpu.memory_space<vmem>>) attributes {dimension_semantics = [#tpu.dimension_semantics<parallel>], iteration_bounds = array<i64: 2>, scalar_prefetch = 0 : i64, scratch_operands = 0 : i64, tpu.core_type = #tpu.core_type<tc>, window_params = [{transform_indices = @transform_0, window_bounds = array<i64: 256, 8>}, {pipeline_mode = #tpu.pipeline_mode<synchronous>, transform_indices = @transform_1, window_bounds = array<i64: 1, 8>}, {pipeline_mode = #tpu.pipeline_mode<synchronous>, transform_indices = @transform_2, window_bounds = array<i64: 1, 8>}, {transform_indices = @transform_3, window_bounds = array<i64: 256, 8>}]} {
    %c0 = arith.constant 0 : index
    %c0_0 = arith.constant 0 : index
    %0 = vector.load %arg1[%c0, %c0_0] : memref<256x8xf32, #tpu.memory_space<vmem>>, vector<256x8xf32>
    %c0_1 = arith.constant 0 : index
    %c0_2 = arith.constant 0 : index
    %1 = vector.load %arg2[%c0_1, %c0_2] : memref<1x8xf32, #tpu.memory_space<vmem>>, vector<1x8xf32>
    %2 = vector.broadcast %1 : vector<1x8xf32> to vector<256x8xf32>
    %3 = arith.mulf %0, %2 : vector<256x8xf32>
    %c0_3 = arith.constant 0 : index
    %c0_4 = arith.constant 0 : index
    %4 = vector.load %arg3[%c0_3, %c0_4] : memref<1x8xf32, #tpu.memory_space<vmem>>, vector<1x8xf32>
    %5 = vector.broadcast %4 : vector<1x8xf32> to vector<256x8xf32>
    %6 = arith.addf %3, %5 : vector<256x8xf32>
    %cst = arith.constant 0.000000e+00 : f32
    %7 = vector.broadcast %cst : f32 to vector<256x8xf32>
    %8 = arith.maximumf %6, %7 : vector<256x8xf32>
    %c0_5 = arith.constant 0 : index
    %c0_6 = arith.constant 0 : index
    %9 = vector.load %arg4[%c0_5, %c0_6] : memref<256x8xf32, #tpu.memory_space<vmem>>, vector<256x8xf32>
    tpu.vector_store %arg4[%c0_5, %c0_6], %8 {strides = array<i32>} : memref<256x8xf32, #tpu.memory_space<vmem>>, vector<256x8xf32>,
    return
  }
  func.func @transform_0(%arg0: i32) -> (i32, i32) {
    %c0_i32 = arith.constant 0 : i32
    %c0_i32_0 = arith.constant 0 : i32
    return %arg0, %c0_i32 : i32, i32
  }
  func.func @transform_1(%arg0: i32) -> (i32, i32) {
    %c0_i32 = arith.constant 0 : i32
    %c0_i32_0 = arith.constant 0 : i32
    %c0_i32_1 = arith.constant 0 : i32
    return %c0_i32, %c0_i32_0 : i32, i32
  }
  func.func @transform_2(%arg0: i32) -> (i32, i32) {
    %c0_i32 = arith.constant 0 : i32
    %c0_i32_0 = arith.constant 0 : i32
    %c0_i32_1 = arith.constant 0 : i32
    return %c0_i32, %c0_i32_0 : i32, i32
  }
  func.func @transform_3(%arg0: i32) -> (i32, i32) {
    %c0_i32 = arith.constant 0 : i32
    %c0_i32_0 = arith.constant 0 : i32
    return %arg0, %c0_i32 : i32, i32
  }
}

module attributes {stable_mosaic.version = 11 : i64} {
  func.func @_conv_stats_kernel(%arg0: i32, %arg1: memref<256x72xf32, #tpu.memory_space<vmem>>, %arg2: memref<72x16xf32, #tpu.memory_space<vmem>>, %arg3: memref<256x16xf32, #tpu.memory_space<vmem>>, %arg4: memref<1x2x16xf32, #tpu.memory_space<vmem>>) attributes {dimension_semantics = [#tpu.dimension_semantics<parallel>], iteration_bounds = array<i64: 2>, scalar_prefetch = 0 : i64, scratch_operands = 0 : i64, tpu.core_type = #tpu.core_type<tc>, window_params = [{transform_indices = @transform_0, window_bounds = array<i64: 256, 72>}, {pipeline_mode = #tpu.pipeline_mode<synchronous>, transform_indices = @transform_1, window_bounds = array<i64: 72, 16>}, {transform_indices = @transform_2, window_bounds = array<i64: 256, 16>}, {transform_indices = @transform_3, window_bounds = array<i64: 1, 2, 16>}]} {
    %c0 = arith.constant 0 : index
    %c0_0 = arith.constant 0 : index
    %0 = vector.load %arg1[%c0, %c0_0] : memref<256x72xf32, #tpu.memory_space<vmem>>, vector<256x72xf32>
    %c0_1 = arith.constant 0 : index
    %c0_2 = arith.constant 0 : index
    %1 = vector.load %arg2[%c0_1, %c0_2] : memref<72x16xf32, #tpu.memory_space<vmem>>, vector<72x16xf32>
    %cst = arith.constant dense<0.000000e+00> : vector<256x16xf32>
    %2 = tpu.matmul %0, %1, %cst {dimension_numbers = #tpu.dot_dimension_numbers<[1], [0], [0], [1], [0, 0, 1, 1], [], []>} : vector<256x72xf32>, vector<72x16xf32>, vector<256x16xf32> -> vector<256x16xf32>
    %c0_3 = arith.constant 0 : index
    %c0_4 = arith.constant 0 : index
    %3 = vector.load %arg3[%c0_3, %c0_4] : memref<256x16xf32, #tpu.memory_space<vmem>>, vector<256x16xf32>
    tpu.vector_store %arg3[%c0_3, %c0_4], %2 {strides = array<i32>} : memref<256x16xf32, #tpu.memory_space<vmem>>, vector<256x16xf32>,
    %cst_5 = arith.constant dense<0.000000e+00> : vector<16xf32>
    %4 = vector.multi_reduction <add>, %2, %cst_5 [0] : vector<256x16xf32> to vector<16xf32>
    %5 = vector.shape_cast %4 : vector<16xf32> to vector<1x16xf32>
    %6 = arith.mulf %2, %2 : vector<256x16xf32>
    %cst_6 = arith.constant dense<0.000000e+00> : vector<16xf32>
    %7 = vector.multi_reduction <add>, %6, %cst_6 [0] : vector<256x16xf32> to vector<16xf32>
    %8 = vector.shape_cast %7 : vector<16xf32> to vector<1x16xf32>
    %9 = tpu.concatenate %5, %8 in 0 : vector<1x16xf32>, vector<1x16xf32> -> vector<2x16xf32>
    %10 = vector.shape_cast %9 : vector<2x16xf32> to vector<1x2x16xf32>
    %c0_7 = arith.constant 0 : index
    %c0_8 = arith.constant 0 : index
    %c0_9 = arith.constant 0 : index
    %11 = vector.load %arg4[%c0_7, %c0_8, %c0_9] : memref<1x2x16xf32, #tpu.memory_space<vmem>>, vector<1x2x16xf32>
    tpu.vector_store %arg4[%c0_7, %c0_8, %c0_9], %10 {strides = array<i32>} : memref<1x2x16xf32, #tpu.memory_space<vmem>>, vector<1x2x16xf32>,
    return
  }
  func.func @transform_0(%arg0: i32) -> (i32, i32) {
    %c0_i32 = arith.constant 0 : i32
    %c0_i32_0 = arith.constant 0 : i32
    return %arg0, %c0_i32 : i32, i32
  }
  func.func @transform_1(%arg0: i32) -> (i32, i32) {
    %c0_i32 = arith.constant 0 : i32
    %c0_i32_0 = arith.constant 0 : i32
    %c0_i32_1 = arith.constant 0 : i32
    return %c0_i32, %c0_i32_0 : i32, i32
  }
  func.func @transform_2(%arg0: i32) -> (i32, i32) {
    %c0_i32 = arith.constant 0 : i32
    %c0_i32_0 = arith.constant 0 : i32
    return %arg0, %c0_i32 : i32, i32
  }
  func.func @transform_3(%arg0: i32) -> (i32, i32, i32) {
    %c0_i32 = arith.constant 0 : i32
    %c0_i32_0 = arith.constant 0 : i32
    %c0_i32_1 = arith.constant 0 : i32
    return %arg0, %c0_i32, %c0_i32_0 : i32, i32, i32
  }
}

module attributes {stable_mosaic.version = 11 : i64} {
  func.func @_bn_relu_kernel(%arg0: i32, %arg1: memref<256x16xf32, #tpu.memory_space<vmem>>, %arg2: memref<1x16xf32, #tpu.memory_space<vmem>>, %arg3: memref<1x16xf32, #tpu.memory_space<vmem>>, %arg4: memref<256x16xf32, #tpu.memory_space<vmem>>) attributes {dimension_semantics = [#tpu.dimension_semantics<parallel>], iteration_bounds = array<i64: 2>, scalar_prefetch = 0 : i64, scratch_operands = 0 : i64, tpu.core_type = #tpu.core_type<tc>, window_params = [{transform_indices = @transform_0, window_bounds = array<i64: 256, 16>}, {pipeline_mode = #tpu.pipeline_mode<synchronous>, transform_indices = @transform_1, window_bounds = array<i64: 1, 16>}, {pipeline_mode = #tpu.pipeline_mode<synchronous>, transform_indices = @transform_2, window_bounds = array<i64: 1, 16>}, {transform_indices = @transform_3, window_bounds = array<i64: 256, 16>}]} {
    %c0 = arith.constant 0 : index
    %c0_0 = arith.constant 0 : index
    %0 = vector.load %arg1[%c0, %c0_0] : memref<256x16xf32, #tpu.memory_space<vmem>>, vector<256x16xf32>
    %c0_1 = arith.constant 0 : index
    %c0_2 = arith.constant 0 : index
    %1 = vector.load %arg2[%c0_1, %c0_2] : memref<1x16xf32, #tpu.memory_space<vmem>>, vector<1x16xf32>
    %2 = vector.broadcast %1 : vector<1x16xf32> to vector<256x16xf32>
    %3 = arith.mulf %0, %2 : vector<256x16xf32>
    %c0_3 = arith.constant 0 : index
    %c0_4 = arith.constant 0 : index
    %4 = vector.load %arg3[%c0_3, %c0_4] : memref<1x16xf32, #tpu.memory_space<vmem>>, vector<1x16xf32>
    %5 = vector.broadcast %4 : vector<1x16xf32> to vector<256x16xf32>
    %6 = arith.addf %3, %5 : vector<256x16xf32>
    %cst = arith.constant 0.000000e+00 : f32
    %7 = vector.broadcast %cst : f32 to vector<256x16xf32>
    %8 = arith.maximumf %6, %7 : vector<256x16xf32>
    %c0_5 = arith.constant 0 : index
    %c0_6 = arith.constant 0 : index
    %9 = vector.load %arg4[%c0_5, %c0_6] : memref<256x16xf32, #tpu.memory_space<vmem>>, vector<256x16xf32>
    tpu.vector_store %arg4[%c0_5, %c0_6], %8 {strides = array<i32>} : memref<256x16xf32, #tpu.memory_space<vmem>>, vector<256x16xf32>,
    return
  }
  func.func @transform_0(%arg0: i32) -> (i32, i32) {
    %c0_i32 = arith.constant 0 : i32
    %c0_i32_0 = arith.constant 0 : i32
    return %arg0, %c0_i32 : i32, i32
  }
  func.func @transform_1(%arg0: i32) -> (i32, i32) {
    %c0_i32 = arith.constant 0 : i32
    %c0_i32_0 = arith.constant 0 : i32
    %c0_i32_1 = arith.constant 0 : i32
    return %c0_i32, %c0_i32_0 : i32, i32
  }
  func.func @transform_2(%arg0: i32) -> (i32, i32) {
    %c0_i32 = arith.constant 0 : i32
    %c0_i32_0 = arith.constant 0 : i32
    %c0_i32_1 = arith.constant 0 : i32
    return %c0_i32, %c0_i32_0 : i32, i32
  }
  func.func @transform_3(%arg0: i32) -> (i32, i32) {
    %c0_i32 = arith.constant 0 : i32
    %c0_i32_0 = arith.constant 0 : i32
    return %arg0, %c0_i32 : i32, i32
  }
}

module attributes {stable_mosaic.version = 11 : i64} {
  func.func @_conv_stats_kernel(%arg0: i32, %arg1: memref<128x144xf32, #tpu.memory_space<vmem>>, %arg2: memref<144x16xf32, #tpu.memory_space<vmem>>, %arg3: memref<128x16xf32, #tpu.memory_space<vmem>>, %arg4: memref<1x2x16xf32, #tpu.memory_space<vmem>>) attributes {dimension_semantics = [#tpu.dimension_semantics<parallel>], iteration_bounds = array<i64: 1>, scalar_prefetch = 0 : i64, scratch_operands = 0 : i64, tpu.core_type = #tpu.core_type<tc>, window_params = [{transform_indices = @transform_0, window_bounds = array<i64: 128, 144>}, {pipeline_mode = #tpu.pipeline_mode<synchronous>, transform_indices = @transform_1, window_bounds = array<i64: 144, 16>}, {transform_indices = @transform_2, window_bounds = array<i64: 128, 16>}, {transform_indices = @transform_3, window_bounds = array<i64: 1, 2, 16>}]} {
    %c0 = arith.constant 0 : index
    %c0_0 = arith.constant 0 : index
    %0 = vector.load %arg1[%c0, %c0_0] : memref<128x144xf32, #tpu.memory_space<vmem>>, vector<128x144xf32>
    %c0_1 = arith.constant 0 : index
    %c0_2 = arith.constant 0 : index
    %1 = vector.load %arg2[%c0_1, %c0_2] : memref<144x16xf32, #tpu.memory_space<vmem>>, vector<144x16xf32>
    %cst = arith.constant dense<0.000000e+00> : vector<128x16xf32>
    %2 = tpu.matmul %0, %1, %cst {dimension_numbers = #tpu.dot_dimension_numbers<[1], [0], [0], [1], [0, 0, 1, 1], [], []>} : vector<128x144xf32>, vector<144x16xf32>, vector<128x16xf32> -> vector<128x16xf32>
    %c0_3 = arith.constant 0 : index
    %c0_4 = arith.constant 0 : index
    %3 = vector.load %arg3[%c0_3, %c0_4] : memref<128x16xf32, #tpu.memory_space<vmem>>, vector<128x16xf32>
    tpu.vector_store %arg3[%c0_3, %c0_4], %2 {strides = array<i32>} : memref<128x16xf32, #tpu.memory_space<vmem>>, vector<128x16xf32>,
    %cst_5 = arith.constant dense<0.000000e+00> : vector<16xf32>
    %4 = vector.multi_reduction <add>, %2, %cst_5 [0] : vector<128x16xf32> to vector<16xf32>
    %5 = vector.shape_cast %4 : vector<16xf32> to vector<1x16xf32>
    %6 = arith.mulf %2, %2 : vector<128x16xf32>
    %cst_6 = arith.constant dense<0.000000e+00> : vector<16xf32>
    %7 = vector.multi_reduction <add>, %6, %cst_6 [0] : vector<128x16xf32> to vector<16xf32>
    %8 = vector.shape_cast %7 : vector<16xf32> to vector<1x16xf32>
    %9 = tpu.concatenate %5, %8 in 0 : vector<1x16xf32>, vector<1x16xf32> -> vector<2x16xf32>
    %10 = vector.shape_cast %9 : vector<2x16xf32> to vector<1x2x16xf32>
    %c0_7 = arith.constant 0 : index
    %c0_8 = arith.constant 0 : index
    %c0_9 = arith.constant 0 : index
    %11 = vector.load %arg4[%c0_7, %c0_8, %c0_9] : memref<1x2x16xf32, #tpu.memory_space<vmem>>, vector<1x2x16xf32>
    tpu.vector_store %arg4[%c0_7, %c0_8, %c0_9], %10 {strides = array<i32>} : memref<1x2x16xf32, #tpu.memory_space<vmem>>, vector<1x2x16xf32>,
    return
  }
  func.func @transform_0(%arg0: i32) -> (i32, i32) {
    %c0_i32 = arith.constant 0 : i32
    %c0_i32_0 = arith.constant 0 : i32
    return %arg0, %c0_i32 : i32, i32
  }
  func.func @transform_1(%arg0: i32) -> (i32, i32) {
    %c0_i32 = arith.constant 0 : i32
    %c0_i32_0 = arith.constant 0 : i32
    %c0_i32_1 = arith.constant 0 : i32
    return %c0_i32, %c0_i32_0 : i32, i32
  }
  func.func @transform_2(%arg0: i32) -> (i32, i32) {
    %c0_i32 = arith.constant 0 : i32
    %c0_i32_0 = arith.constant 0 : i32
    return %arg0, %c0_i32 : i32, i32
  }
  func.func @transform_3(%arg0: i32) -> (i32, i32, i32) {
    %c0_i32 = arith.constant 0 : i32
    %c0_i32_0 = arith.constant 0 : i32
    %c0_i32_1 = arith.constant 0 : i32
    return %arg0, %c0_i32, %c0_i32_0 : i32, i32, i32
  }
}

module attributes {stable_mosaic.version = 11 : i64} {
  func.func @_bn_relu_kernel(%arg0: i32, %arg1: memref<128x16xf32, #tpu.memory_space<vmem>>, %arg2: memref<1x16xf32, #tpu.memory_space<vmem>>, %arg3: memref<1x16xf32, #tpu.memory_space<vmem>>, %arg4: memref<128x16xf32, #tpu.memory_space<vmem>>) attributes {dimension_semantics = [#tpu.dimension_semantics<parallel>], iteration_bounds = array<i64: 1>, scalar_prefetch = 0 : i64, scratch_operands = 0 : i64, tpu.core_type = #tpu.core_type<tc>, window_params = [{transform_indices = @transform_0, window_bounds = array<i64: 128, 16>}, {pipeline_mode = #tpu.pipeline_mode<synchronous>, transform_indices = @transform_1, window_bounds = array<i64: 1, 16>}, {pipeline_mode = #tpu.pipeline_mode<synchronous>, transform_indices = @transform_2, window_bounds = array<i64: 1, 16>}, {transform_indices = @transform_3, window_bounds = array<i64: 128, 16>}]} {
    %c0 = arith.constant 0 : index
    %c0_0 = arith.constant 0 : index
    %0 = vector.load %arg1[%c0, %c0_0] : memref<128x16xf32, #tpu.memory_space<vmem>>, vector<128x16xf32>
    %c0_1 = arith.constant 0 : index
    %c0_2 = arith.constant 0 : index
    %1 = vector.load %arg2[%c0_1, %c0_2] : memref<1x16xf32, #tpu.memory_space<vmem>>, vector<1x16xf32>
    %2 = vector.broadcast %1 : vector<1x16xf32> to vector<128x16xf32>
    %3 = arith.mulf %0, %2 : vector<128x16xf32>
    %c0_3 = arith.constant 0 : index
    %c0_4 = arith.constant 0 : index
    %4 = vector.load %arg3[%c0_3, %c0_4] : memref<1x16xf32, #tpu.memory_space<vmem>>, vector<1x16xf32>
    %5 = vector.broadcast %4 : vector<1x16xf32> to vector<128x16xf32>
    %6 = arith.addf %3, %5 : vector<128x16xf32>
    %cst = arith.constant 0.000000e+00 : f32
    %7 = vector.broadcast %cst : f32 to vector<128x16xf32>
    %8 = arith.maximumf %6, %7 : vector<128x16xf32>
    %c0_5 = arith.constant 0 : index
    %c0_6 = arith.constant 0 : index
    %9 = vector.load %arg4[%c0_5, %c0_6] : memref<128x16xf32, #tpu.memory_space<vmem>>, vector<128x16xf32>
    tpu.vector_store %arg4[%c0_5, %c0_6], %8 {strides = array<i32>} : memref<128x16xf32, #tpu.memory_space<vmem>>, vector<128x16xf32>,
    return
  }
  func.func @transform_0(%arg0: i32) -> (i32, i32) {
    %c0_i32 = arith.constant 0 : i32
    %c0_i32_0 = arith.constant 0 : i32
    return %arg0, %c0_i32 : i32, i32
  }
  func.func @transform_1(%arg0: i32) -> (i32, i32) {
    %c0_i32 = arith.constant 0 : i32
    %c0_i32_0 = arith.constant 0 : i32
    %c0_i32_1 = arith.constant 0 : i32
    return %c0_i32, %c0_i32_0 : i32, i32
  }
  func.func @transform_2(%arg0: i32) -> (i32, i32) {
    %c0_i32 = arith.constant 0 : i32
    %c0_i32_0 = arith.constant 0 : i32
    %c0_i32_1 = arith.constant 0 : i32
    return %c0_i32, %c0_i32_0 : i32, i32
  }
  func.func @transform_3(%arg0: i32) -> (i32, i32) {
    %c0_i32 = arith.constant 0 : i32
    %c0_i32_0 = arith.constant 0 : i32
    return %arg0, %c0_i32 : i32, i32
  }
}

module attributes {stable_mosaic.version = 11 : i64} {
  func.func @_conv_stats_kernel(%arg0: i32, %arg1: memref<32x144xf32, #tpu.memory_space<vmem>>, %arg2: memref<144x16xf32, #tpu.memory_space<vmem>>, %arg3: memref<32x16xf32, #tpu.memory_space<vmem>>, %arg4: memref<1x2x16xf32, #tpu.memory_space<vmem>>) attributes {dimension_semantics = [#tpu.dimension_semantics<parallel>], iteration_bounds = array<i64: 1>, scalar_prefetch = 0 : i64, scratch_operands = 0 : i64, tpu.core_type = #tpu.core_type<tc>, window_params = [{transform_indices = @transform_0, window_bounds = array<i64: 32, 144>}, {pipeline_mode = #tpu.pipeline_mode<synchronous>, transform_indices = @transform_1, window_bounds = array<i64: 144, 16>}, {transform_indices = @transform_2, window_bounds = array<i64: 32, 16>}, {transform_indices = @transform_3, window_bounds = array<i64: 1, 2, 16>}]} {
    %c0 = arith.constant 0 : index
    %c0_0 = arith.constant 0 : index
    %0 = vector.load %arg1[%c0, %c0_0] : memref<32x144xf32, #tpu.memory_space<vmem>>, vector<32x144xf32>
    %c0_1 = arith.constant 0 : index
    %c0_2 = arith.constant 0 : index
    %1 = vector.load %arg2[%c0_1, %c0_2] : memref<144x16xf32, #tpu.memory_space<vmem>>, vector<144x16xf32>
    %cst = arith.constant dense<0.000000e+00> : vector<32x16xf32>
    %2 = tpu.matmul %0, %1, %cst {dimension_numbers = #tpu.dot_dimension_numbers<[1], [0], [0], [1], [0, 0, 1, 1], [], []>} : vector<32x144xf32>, vector<144x16xf32>, vector<32x16xf32> -> vector<32x16xf32>
    %c0_3 = arith.constant 0 : index
    %c0_4 = arith.constant 0 : index
    %3 = vector.load %arg3[%c0_3, %c0_4] : memref<32x16xf32, #tpu.memory_space<vmem>>, vector<32x16xf32>
    tpu.vector_store %arg3[%c0_3, %c0_4], %2 {strides = array<i32>} : memref<32x16xf32, #tpu.memory_space<vmem>>, vector<32x16xf32>,
    %cst_5 = arith.constant dense<0.000000e+00> : vector<16xf32>
    %4 = vector.multi_reduction <add>, %2, %cst_5 [0] : vector<32x16xf32> to vector<16xf32>
    %5 = vector.shape_cast %4 : vector<16xf32> to vector<1x16xf32>
    %6 = arith.mulf %2, %2 : vector<32x16xf32>
    %cst_6 = arith.constant dense<0.000000e+00> : vector<16xf32>
    %7 = vector.multi_reduction <add>, %6, %cst_6 [0] : vector<32x16xf32> to vector<16xf32>
    %8 = vector.shape_cast %7 : vector<16xf32> to vector<1x16xf32>
    %9 = tpu.concatenate %5, %8 in 0 : vector<1x16xf32>, vector<1x16xf32> -> vector<2x16xf32>
    %10 = vector.shape_cast %9 : vector<2x16xf32> to vector<1x2x16xf32>
    %c0_7 = arith.constant 0 : index
    %c0_8 = arith.constant 0 : index
    %c0_9 = arith.constant 0 : index
    %11 = vector.load %arg4[%c0_7, %c0_8, %c0_9] : memref<1x2x16xf32, #tpu.memory_space<vmem>>, vector<1x2x16xf32>
    tpu.vector_store %arg4[%c0_7, %c0_8, %c0_9], %10 {strides = array<i32>} : memref<1x2x16xf32, #tpu.memory_space<vmem>>, vector<1x2x16xf32>,
    return
  }
  func.func @transform_0(%arg0: i32) -> (i32, i32) {
    %c0_i32 = arith.constant 0 : i32
    %c0_i32_0 = arith.constant 0 : i32
    return %arg0, %c0_i32 : i32, i32
  }
  func.func @transform_1(%arg0: i32) -> (i32, i32) {
    %c0_i32 = arith.constant 0 : i32
    %c0_i32_0 = arith.constant 0 : i32
    %c0_i32_1 = arith.constant 0 : i32
    return %c0_i32, %c0_i32_0 : i32, i32
  }
  func.func @transform_2(%arg0: i32) -> (i32, i32) {
    %c0_i32 = arith.constant 0 : i32
    %c0_i32_0 = arith.constant 0 : i32
    return %arg0, %c0_i32 : i32, i32
  }
  func.func @transform_3(%arg0: i32) -> (i32, i32, i32) {
    %c0_i32 = arith.constant 0 : i32
    %c0_i32_0 = arith.constant 0 : i32
    %c0_i32_1 = arith.constant 0 : i32
    return %arg0, %c0_i32, %c0_i32_0 : i32, i32, i32
  }
}

module attributes {stable_mosaic.version = 11 : i64} {
  func.func @_bn_relu_kernel(%arg0: i32, %arg1: memref<32x16xf32, #tpu.memory_space<vmem>>, %arg2: memref<1x16xf32, #tpu.memory_space<vmem>>, %arg3: memref<1x16xf32, #tpu.memory_space<vmem>>, %arg4: memref<32x16xf32, #tpu.memory_space<vmem>>) attributes {dimension_semantics = [#tpu.dimension_semantics<parallel>], iteration_bounds = array<i64: 1>, scalar_prefetch = 0 : i64, scratch_operands = 0 : i64, tpu.core_type = #tpu.core_type<tc>, window_params = [{transform_indices = @transform_0, window_bounds = array<i64: 32, 16>}, {pipeline_mode = #tpu.pipeline_mode<synchronous>, transform_indices = @transform_1, window_bounds = array<i64: 1, 16>}, {pipeline_mode = #tpu.pipeline_mode<synchronous>, transform_indices = @transform_2, window_bounds = array<i64: 1, 16>}, {transform_indices = @transform_3, window_bounds = array<i64: 32, 16>}]} {
    %c0 = arith.constant 0 : index
    %c0_0 = arith.constant 0 : index
    %0 = vector.load %arg1[%c0, %c0_0] : memref<32x16xf32, #tpu.memory_space<vmem>>, vector<32x16xf32>
    %c0_1 = arith.constant 0 : index
    %c0_2 = arith.constant 0 : index
    %1 = vector.load %arg2[%c0_1, %c0_2] : memref<1x16xf32, #tpu.memory_space<vmem>>, vector<1x16xf32>
    %2 = vector.broadcast %1 : vector<1x16xf32> to vector<32x16xf32>
    %3 = arith.mulf %0, %2 : vector<32x16xf32>
    %c0_3 = arith.constant 0 : index
    %c0_4 = arith.constant 0 : index
    %4 = vector.load %arg3[%c0_3, %c0_4] : memref<1x16xf32, #tpu.memory_space<vmem>>, vector<1x16xf32>
    %5 = vector.broadcast %4 : vector<1x16xf32> to vector<32x16xf32>
    %6 = arith.addf %3, %5 : vector<32x16xf32>
    %cst = arith.constant 0.000000e+00 : f32
    %7 = vector.broadcast %cst : f32 to vector<32x16xf32>
    %8 = arith.maximumf %6, %7 : vector<32x16xf32>
    %c0_5 = arith.constant 0 : index
    %c0_6 = arith.constant 0 : index
    %9 = vector.load %arg4[%c0_5, %c0_6] : memref<32x16xf32, #tpu.memory_space<vmem>>, vector<32x16xf32>
    tpu.vector_store %arg4[%c0_5, %c0_6], %8 {strides = array<i32>} : memref<32x16xf32, #tpu.memory_space<vmem>>, vector<32x16xf32>,
    return
  }
  func.func @transform_0(%arg0: i32) -> (i32, i32) {
    %c0_i32 = arith.constant 0 : i32
    %c0_i32_0 = arith.constant 0 : i32
    return %arg0, %c0_i32 : i32, i32
  }
  func.func @transform_1(%arg0: i32) -> (i32, i32) {
    %c0_i32 = arith.constant 0 : i32
    %c0_i32_0 = arith.constant 0 : i32
    %c0_i32_1 = arith.constant 0 : i32
    return %c0_i32, %c0_i32_0 : i32, i32
  }
  func.func @transform_2(%arg0: i32) -> (i32, i32) {
    %c0_i32 = arith.constant 0 : i32
    %c0_i32_0 = arith.constant 0 : i32
    %c0_i32_1 = arith.constant 0 : i32
    return %c0_i32, %c0_i32_0 : i32, i32
  }
  func.func @transform_3(%arg0: i32) -> (i32, i32) {
    %c0_i32 = arith.constant 0 : i32
    %c0_i32_0 = arith.constant 0 : i32
    return %arg0, %c0_i32 : i32, i32
  }
}

module attributes {stable_mosaic.version = 11 : i64} {
  func.func @_conv_stats_kernel(%arg0: i32, %arg1: memref<32x288xf32, #tpu.memory_space<vmem>>, %arg2: memref<288x16xf32, #tpu.memory_space<vmem>>, %arg3: memref<32x16xf32, #tpu.memory_space<vmem>>, %arg4: memref<1x2x16xf32, #tpu.memory_space<vmem>>) attributes {dimension_semantics = [#tpu.dimension_semantics<parallel>], iteration_bounds = array<i64: 1>, scalar_prefetch = 0 : i64, scratch_operands = 0 : i64, tpu.core_type = #tpu.core_type<tc>, window_params = [{transform_indices = @transform_0, window_bounds = array<i64: 32, 288>}, {pipeline_mode = #tpu.pipeline_mode<synchronous>, transform_indices = @transform_1, window_bounds = array<i64: 288, 16>}, {transform_indices = @transform_2, window_bounds = array<i64: 32, 16>}, {transform_indices = @transform_3, window_bounds = array<i64: 1, 2, 16>}]} {
    %c0 = arith.constant 0 : index
    %c0_0 = arith.constant 0 : index
    %0 = vector.load %arg1[%c0, %c0_0] : memref<32x288xf32, #tpu.memory_space<vmem>>, vector<32x288xf32>
    %c0_1 = arith.constant 0 : index
    %c0_2 = arith.constant 0 : index
    %1 = vector.load %arg2[%c0_1, %c0_2] : memref<288x16xf32, #tpu.memory_space<vmem>>, vector<288x16xf32>
    %cst = arith.constant dense<0.000000e+00> : vector<32x16xf32>
    %2 = tpu.matmul %0, %1, %cst {dimension_numbers = #tpu.dot_dimension_numbers<[1], [0], [0], [1], [0, 0, 1, 1], [], []>} : vector<32x288xf32>, vector<288x16xf32>, vector<32x16xf32> -> vector<32x16xf32>
    %c0_3 = arith.constant 0 : index
    %c0_4 = arith.constant 0 : index
    %3 = vector.load %arg3[%c0_3, %c0_4] : memref<32x16xf32, #tpu.memory_space<vmem>>, vector<32x16xf32>
    tpu.vector_store %arg3[%c0_3, %c0_4], %2 {strides = array<i32>} : memref<32x16xf32, #tpu.memory_space<vmem>>, vector<32x16xf32>,
    %cst_5 = arith.constant dense<0.000000e+00> : vector<16xf32>
    %4 = vector.multi_reduction <add>, %2, %cst_5 [0] : vector<32x16xf32> to vector<16xf32>
    %5 = vector.shape_cast %4 : vector<16xf32> to vector<1x16xf32>
    %6 = arith.mulf %2, %2 : vector<32x16xf32>
    %cst_6 = arith.constant dense<0.000000e+00> : vector<16xf32>
    %7 = vector.multi_reduction <add>, %6, %cst_6 [0] : vector<32x16xf32> to vector<16xf32>
    %8 = vector.shape_cast %7 : vector<16xf32> to vector<1x16xf32>
    %9 = tpu.concatenate %5, %8 in 0 : vector<1x16xf32>, vector<1x16xf32> -> vector<2x16xf32>
    %10 = vector.shape_cast %9 : vector<2x16xf32> to vector<1x2x16xf32>
    %c0_7 = arith.constant 0 : index
    %c0_8 = arith.constant 0 : index
    %c0_9 = arith.constant 0 : index
    %11 = vector.load %arg4[%c0_7, %c0_8, %c0_9] : memref<1x2x16xf32, #tpu.memory_space<vmem>>, vector<1x2x16xf32>
    tpu.vector_store %arg4[%c0_7, %c0_8, %c0_9], %10 {strides = array<i32>} : memref<1x2x16xf32, #tpu.memory_space<vmem>>, vector<1x2x16xf32>,
    return
  }
  func.func @transform_0(%arg0: i32) -> (i32, i32) {
    %c0_i32 = arith.constant 0 : i32
    %c0_i32_0 = arith.constant 0 : i32
    return %arg0, %c0_i32 : i32, i32
  }
  func.func @transform_1(%arg0: i32) -> (i32, i32) {
    %c0_i32 = arith.constant 0 : i32
    %c0_i32_0 = arith.constant 0 : i32
    %c0_i32_1 = arith.constant 0 : i32
    return %c0_i32, %c0_i32_0 : i32, i32
  }
  func.func @transform_2(%arg0: i32) -> (i32, i32) {
    %c0_i32 = arith.constant 0 : i32
    %c0_i32_0 = arith.constant 0 : i32
    return %arg0, %c0_i32 : i32, i32
  }
  func.func @transform_3(%arg0: i32) -> (i32, i32, i32) {
    %c0_i32 = arith.constant 0 : i32
    %c0_i32_0 = arith.constant 0 : i32
    %c0_i32_1 = arith.constant 0 : i32
    return %arg0, %c0_i32, %c0_i32_0 : i32, i32, i32
  }
}

module attributes {stable_mosaic.version = 11 : i64} {
  func.func @_conv_stats_kernel(%arg0: i32, %arg1: memref<128x288xf32, #tpu.memory_space<vmem>>, %arg2: memref<288x16xf32, #tpu.memory_space<vmem>>, %arg3: memref<128x16xf32, #tpu.memory_space<vmem>>, %arg4: memref<1x2x16xf32, #tpu.memory_space<vmem>>) attributes {dimension_semantics = [#tpu.dimension_semantics<parallel>], iteration_bounds = array<i64: 1>, scalar_prefetch = 0 : i64, scratch_operands = 0 : i64, tpu.core_type = #tpu.core_type<tc>, window_params = [{transform_indices = @transform_0, window_bounds = array<i64: 128, 288>}, {pipeline_mode = #tpu.pipeline_mode<synchronous>, transform_indices = @transform_1, window_bounds = array<i64: 288, 16>}, {transform_indices = @transform_2, window_bounds = array<i64: 128, 16>}, {transform_indices = @transform_3, window_bounds = array<i64: 1, 2, 16>}]} {
    %c0 = arith.constant 0 : index
    %c0_0 = arith.constant 0 : index
    %0 = vector.load %arg1[%c0, %c0_0] : memref<128x288xf32, #tpu.memory_space<vmem>>, vector<128x288xf32>
    %c0_1 = arith.constant 0 : index
    %c0_2 = arith.constant 0 : index
    %1 = vector.load %arg2[%c0_1, %c0_2] : memref<288x16xf32, #tpu.memory_space<vmem>>, vector<288x16xf32>
    %cst = arith.constant dense<0.000000e+00> : vector<128x16xf32>
    %2 = tpu.matmul %0, %1, %cst {dimension_numbers = #tpu.dot_dimension_numbers<[1], [0], [0], [1], [0, 0, 1, 1], [], []>} : vector<128x288xf32>, vector<288x16xf32>, vector<128x16xf32> -> vector<128x16xf32>
    %c0_3 = arith.constant 0 : index
    %c0_4 = arith.constant 0 : index
    %3 = vector.load %arg3[%c0_3, %c0_4] : memref<128x16xf32, #tpu.memory_space<vmem>>, vector<128x16xf32>
    tpu.vector_store %arg3[%c0_3, %c0_4], %2 {strides = array<i32>} : memref<128x16xf32, #tpu.memory_space<vmem>>, vector<128x16xf32>,
    %cst_5 = arith.constant dense<0.000000e+00> : vector<16xf32>
    %4 = vector.multi_reduction <add>, %2, %cst_5 [0] : vector<128x16xf32> to vector<16xf32>
    %5 = vector.shape_cast %4 : vector<16xf32> to vector<1x16xf32>
    %6 = arith.mulf %2, %2 : vector<128x16xf32>
    %cst_6 = arith.constant dense<0.000000e+00> : vector<16xf32>
    %7 = vector.multi_reduction <add>, %6, %cst_6 [0] : vector<128x16xf32> to vector<16xf32>
    %8 = vector.shape_cast %7 : vector<16xf32> to vector<1x16xf32>
    %9 = tpu.concatenate %5, %8 in 0 : vector<1x16xf32>, vector<1x16xf32> -> vector<2x16xf32>
    %10 = vector.shape_cast %9 : vector<2x16xf32> to vector<1x2x16xf32>
    %c0_7 = arith.constant 0 : index
    %c0_8 = arith.constant 0 : index
    %c0_9 = arith.constant 0 : index
    %11 = vector.load %arg4[%c0_7, %c0_8, %c0_9] : memref<1x2x16xf32, #tpu.memory_space<vmem>>, vector<1x2x16xf32>
    tpu.vector_store %arg4[%c0_7, %c0_8, %c0_9], %10 {strides = array<i32>} : memref<1x2x16xf32, #tpu.memory_space<vmem>>, vector<1x2x16xf32>,
    return
  }
  func.func @transform_0(%arg0: i32) -> (i32, i32) {
    %c0_i32 = arith.constant 0 : i32
    %c0_i32_0 = arith.constant 0 : i32
    return %arg0, %c0_i32 : i32, i32
  }
  func.func @transform_1(%arg0: i32) -> (i32, i32) {
    %c0_i32 = arith.constant 0 : i32
    %c0_i32_0 = arith.constant 0 : i32
    %c0_i32_1 = arith.constant 0 : i32
    return %c0_i32, %c0_i32_0 : i32, i32
  }
  func.func @transform_2(%arg0: i32) -> (i32, i32) {
    %c0_i32 = arith.constant 0 : i32
    %c0_i32_0 = arith.constant 0 : i32
    return %arg0, %c0_i32 : i32, i32
  }
  func.func @transform_3(%arg0: i32) -> (i32, i32, i32) {
    %c0_i32 = arith.constant 0 : i32
    %c0_i32_0 = arith.constant 0 : i32
    %c0_i32_1 = arith.constant 0 : i32
    return %arg0, %c0_i32, %c0_i32_0 : i32, i32, i32
  }
}

module attributes {stable_mosaic.version = 11 : i64} {
  func.func @_conv_stats_kernel(%arg0: i32, %arg1: memref<256x288xf32, #tpu.memory_space<vmem>>, %arg2: memref<288x8xf32, #tpu.memory_space<vmem>>, %arg3: memref<256x8xf32, #tpu.memory_space<vmem>>, %arg4: memref<1x2x8xf32, #tpu.memory_space<vmem>>) attributes {dimension_semantics = [#tpu.dimension_semantics<parallel>], iteration_bounds = array<i64: 2>, scalar_prefetch = 0 : i64, scratch_operands = 0 : i64, tpu.core_type = #tpu.core_type<tc>, window_params = [{transform_indices = @transform_0, window_bounds = array<i64: 256, 288>}, {pipeline_mode = #tpu.pipeline_mode<synchronous>, transform_indices = @transform_1, window_bounds = array<i64: 288, 8>}, {transform_indices = @transform_2, window_bounds = array<i64: 256, 8>}, {transform_indices = @transform_3, window_bounds = array<i64: 1, 2, 8>}]} {
    %c0 = arith.constant 0 : index
    %c0_0 = arith.constant 0 : index
    %0 = vector.load %arg1[%c0, %c0_0] : memref<256x288xf32, #tpu.memory_space<vmem>>, vector<256x288xf32>
    %c0_1 = arith.constant 0 : index
    %c0_2 = arith.constant 0 : index
    %1 = vector.load %arg2[%c0_1, %c0_2] : memref<288x8xf32, #tpu.memory_space<vmem>>, vector<288x8xf32>
    %cst = arith.constant dense<0.000000e+00> : vector<256x8xf32>
    %2 = tpu.matmul %0, %1, %cst {dimension_numbers = #tpu.dot_dimension_numbers<[1], [0], [0], [1], [0, 0, 1, 1], [], []>} : vector<256x288xf32>, vector<288x8xf32>, vector<256x8xf32> -> vector<256x8xf32>
    %c0_3 = arith.constant 0 : index
    %c0_4 = arith.constant 0 : index
    %3 = vector.load %arg3[%c0_3, %c0_4] : memref<256x8xf32, #tpu.memory_space<vmem>>, vector<256x8xf32>
    tpu.vector_store %arg3[%c0_3, %c0_4], %2 {strides = array<i32>} : memref<256x8xf32, #tpu.memory_space<vmem>>, vector<256x8xf32>,
    %cst_5 = arith.constant dense<0.000000e+00> : vector<8xf32>
    %4 = vector.multi_reduction <add>, %2, %cst_5 [0] : vector<256x8xf32> to vector<8xf32>
    %5 = vector.shape_cast %4 : vector<8xf32> to vector<1x8xf32>
    %6 = arith.mulf %2, %2 : vector<256x8xf32>
    %cst_6 = arith.constant dense<0.000000e+00> : vector<8xf32>
    %7 = vector.multi_reduction <add>, %6, %cst_6 [0] : vector<256x8xf32> to vector<8xf32>
    %8 = vector.shape_cast %7 : vector<8xf32> to vector<1x8xf32>
    %9 = tpu.concatenate %5, %8 in 0 : vector<1x8xf32>, vector<1x8xf32> -> vector<2x8xf32>
    %10 = vector.shape_cast %9 : vector<2x8xf32> to vector<1x2x8xf32>
    %c0_7 = arith.constant 0 : index
    %c0_8 = arith.constant 0 : index
    %c0_9 = arith.constant 0 : index
    %11 = vector.load %arg4[%c0_7, %c0_8, %c0_9] : memref<1x2x8xf32, #tpu.memory_space<vmem>>, vector<1x2x8xf32>
    tpu.vector_store %arg4[%c0_7, %c0_8, %c0_9], %10 {strides = array<i32>} : memref<1x2x8xf32, #tpu.memory_space<vmem>>, vector<1x2x8xf32>,
    return
  }
  func.func @transform_0(%arg0: i32) -> (i32, i32) {
    %c0_i32 = arith.constant 0 : i32
    %c0_i32_0 = arith.constant 0 : i32
    return %arg0, %c0_i32 : i32, i32
  }
  func.func @transform_1(%arg0: i32) -> (i32, i32) {
    %c0_i32 = arith.constant 0 : i32
    %c0_i32_0 = arith.constant 0 : i32
    %c0_i32_1 = arith.constant 0 : i32
    return %c0_i32, %c0_i32_0 : i32, i32
  }
  func.func @transform_2(%arg0: i32) -> (i32, i32) {
    %c0_i32 = arith.constant 0 : i32
    %c0_i32_0 = arith.constant 0 : i32
    return %arg0, %c0_i32 : i32, i32
  }
  func.func @transform_3(%arg0: i32) -> (i32, i32, i32) {
    %c0_i32 = arith.constant 0 : i32
    %c0_i32_0 = arith.constant 0 : i32
    %c0_i32_1 = arith.constant 0 : i32
    return %arg0, %c0_i32, %c0_i32_0 : i32, i32, i32
  }
}

</mosaic_0001>

<llo_original>
// kernel: unet4_forward.17
$region0: #{unet4_forward.17}
  #allocation0 [shape = 'u32[]', space=smem, size = 0x4, offset = 0x4, fixed_abs, tag = 'smem constant byte address 0x4 - core index']
  #allocation1 [shape = 'u32[144,128]{1,0:T(1,128)}', space=vmem, size = 0x12000, scoped, tag = 'internal scratch']
  %s0 = inlined_call_operand.vmem [shape: f32[512,8], index: 0, kind: input, shape index: {}, may-alias: {0,3}]
  %s1 = inlined_call_operand.vmem [shape: f32[1,8], index: 1, kind: input, shape index: {}]
  %s2 = inlined_call_operand.vmem [shape: f32[1,8], index: 2, kind: input, shape index: {}]
  %s3 = inlined_call_operand.vmem [shape: f32[512,8], index: 3, kind: output, shape index: {}, may-alias: {0,3}]
  %s4 = sld [smem:[#allocation0]]
  $region45: #{unet4_forward.17} parent=0
    _
  %s6 = ssub.s32 1, %s4
  %s7 = scalar_select 0, %s6, %s4
  loop: start=0, step=1, limit=4
  $region2: #{unet4_forward.17} parent=0 // loop_pre_header
    _
  $region3: #{unet4_forward.17} parent=0 // loop_header
    %s9 = sphi 0, %s13
    %p10 = scmp.ge.s32.totalorder %s9, 4
    %s19 = sphi 0, %s21
    %s22 = sphi 0, %s19
    %s23 = sphi 0, %s22
    %s39 = sphi 0, %s23
    %s43 = sphi 0, %s43
    %s45 = sphi 0, %s43
    %s46 = sphi 0, %s45
    %s60 = sphi 0, %s46
    %s64 = sphi 0, %s64
    %s66 = sphi 0, %s64
    %s67 = sphi 0, %s66
    %s81 = sphi 0, %s67
    %s87 = sphi 0, %s89
    %s90 = sphi 0, %s87
    %s91 = sphi 0, %s90
    %s107 = sphi 0, %s91
  $region4: #{unet4_forward.17} parent=0 // loop_header_branch
    %12 = sbr.rel (%p10) target = $region8
  $region5: #{unet4_forward.17} parent=0 // loop_body
    %s14 = ssub.s32 %s9, 1
    %s15 = ssub.s32 %s9, 2
    %s16 = sadd.s32 %s9, 1
    %s17 = ssub.s32 %s9, %s16
    %p18 = scmp.eq.s32.totalorder %s17, 0
    %s20 = sadd.s32 %s19, 1
    %s21 = scalar_select %p18, %s19, %s20
    %p24 = pneg %p18
    %p25 = scmp.eq.s32.totalorder %s9, 1
    %p26 = por %p24, %p25
    %p27 = scmp.ne.s32.totalorder %s19, %s22
    %p28 = scmp.eq.s32.totalorder %s9, 0
    %p29 = por %p27, %p28
    %p30 = scmp.ne.s32.totalorder %s19, %s22
    %p31 = scmp.eq.s32.totalorder %s14, 1
    %p32 = por %p30, %p31
    %p33 = scmp.ne.s32.totalorder %s22, %s23
    %p34 = scmp.eq.s32.totalorder %s14, 0
    %p35 = por %p33, %p34
    %p36 = scmp.ne.s32.totalorder %s22, %s23
    %p37 = scmp.eq.s32.totalorder %s15, 1
    %p38 = por %p36, %p37
    %p40 = scmp.ne.s32.totalorder %s23, %s39
    %p41 = scmp.eq.s32.totalorder %s15, 0
    %p42 = por %p40, %p41
    %s44 = sadd.s32 %s43, 1
    %p47 = scmp.eq.s32.totalorder %s9, 1
    %p48 = scmp.ne.s32.totalorder %s43, %s45
    %p49 = scmp.eq.s32.totalorder %s9, 0
    %p50 = por %p48, %p49
    %p51 = scmp.ne.s32.totalorder %s43, %s45
    %p52 = scmp.eq.s32.totalorder %s14, 1
    %p53 = por %p51, %p52
    %p54 = scmp.ne.s32.totalorder %s45, %s46
    %p55 = scmp.eq.s32.totalorder %s14, 0
    %p56 = por %p54, %p55
    %p57 = scmp.ne.s32.totalorder %s45, %s46
    %p58 = scmp.eq.s32.totalorder %s15, 1
    %p59 = por %p57, %p58
    %p61 = scmp.ne.s32.totalorder %s46, %s60
    %p62 = scmp.eq.s32.totalorder %s15, 0
    %p63 = por %p61, %p62
    %s65 = sadd.s32 %s64, 1
    %p68 = scmp.eq.s32.totalorder %s9, 1
    %p69 = scmp.ne.s32.totalorder %s64, %s66
    %p70 = scmp.eq.s32.totalorder %s9, 0
    %p71 = por %p69, %p70
    %p72 = scmp.ne.s32.totalorder %s64, %s66
    %p73 = scmp.eq.s32.totalorder %s14, 1
    %p74 = por %p72, %p73
    %p75 = scmp.ne.s32.totalorder %s66, %s67
    %p76 = scmp.eq.s32.totalorder %s14, 0
    %p77 = por %p75, %p76
    %p78 = scmp.ne.s32.totalorder %s66, %s67
    %p79 = scmp.eq.s32.totalorder %s15, 1
    %p80 = por %p78, %p79
    %p82 = scmp.ne.s32.totalorder %s67, %s81
    %p83 = scmp.eq.s32.totalorder %s15, 0
    %p84 = por %p82, %p83
    %s85 = ssub.s32 %s9, %s16
    %p86 = scmp.eq.s32.totalorder %s85, 0
    %s88 = sadd.s32 %s87, 1
    %s89 = scalar_select %p86, %s87, %s88
    %p92 = pneg %p86
    %p93 = scmp.eq.s32.totalorder %s9, 1
    %p94 = por %p92, %p93
    %p95 = scmp.ne.s32.totalorder %s87, %s90
    %p96 = scmp.eq.s32.totalorder %s9, 0
    %p97 = por %p95, %p96
    %p98 = scmp.ne.s32.totalorder %s87, %s90
    %p99 = scmp.eq.s32.totalorder %s14, 1
    %p100 = por %p98, %p99
    %p101 = scmp.ne.s32.totalorder %s90, %s91
    %p102 = scmp.eq.s32.totalorder %s14, 0
    %p103 = por %p101, %p102
    %p104 = scmp.ne.s32.totalorder %s90, %s91
    %p105 = scmp.eq.s32.totalorder %s15, 1
    %p106 = por %p104, %p105
    %p108 = scmp.ne.s32.totalorder %s91, %s107
    %p109 = scmp.eq.s32.totalorder %s15, 0
    %p110 = por %p108, %p109
    %p111 = scmp.le.s32.totalorder 1, %s9
    %p112 = scmp.lt.s32.totalorder %s9, 3
    %p113 = pnand %p111, %p112
    %p114 = pneg %p113
    // Predicated region
    $region9: #{unet4_forward.17} parent=5 // pred_check
      _
    $region10: #{unet4_forward.17} parent=5 // pred_check_branch
      %116 = sbr.rel (%p113) target = $region12
    $region11: #{unet4_forward.17} parent=5 // pred_region
      %s117 = ssub.s32 %s9, 1
      // Predicated region
      $region13: #{unet4_forward.17} parent=11 // pred_check
        %p118 = pneg %p56
      $region14: #{unet4_forward.17} parent=11 // pred_check_branch
        %120 = sbr.rel (%p118) target = $region16
      $region15: #{unet4_forward.17} parent=11 // pred_region
        _
      $region16: #{unet4_forward.17} parent=11 // pred_fallthru
        _
      // Predicated region
      $region17: #{unet4_forward.17} parent=11 // pred_check
        %p121 = pneg %p77
      $region18: #{unet4_forward.17} parent=11 // pred_check_branch
        %123 = sbr.rel (%p121) target = $region20
      $region19: #{unet4_forward.17} parent=11 // pred_region
        _
      $region20: #{unet4_forward.17} parent=11 // pred_fallthru
        _
    $region12: #{unet4_forward.17} parent=5 // pred_fallthru
      _
    %p124 = scmp.lt.s32.totalorder %s9, 2
    // Predicated region
    $region21: #{unet4_forward.17} parent=5 // pred_check
      %p125 = pneg %p124
    $region22: #{unet4_forward.17} parent=5 // pred_check_branch
      %127 = sbr.rel (%p125) target = $region24
    $region23: #{unet4_forward.17} parent=5 // pred_region
      // Predicated region
      $region25: #{unet4_forward.17} parent=23 // pred_check
        %p128 = pneg %p29
      $region26: #{unet4_forward.17} parent=23 // pred_check_branch
        %130 = sbr.rel (%p128) target = $region28
      $region27: #{unet4_forward.17} parent=23 // pred_region
        %s131 = smul.u32 32, %s9
        %p132 = scmp.lt.s32.totalorder %s131, 63
        %s133 = scalar_select %p132, %s131, 63
        %s134 = smul.addr %s133, 8
        %s135 = scalar_lea.vmem %s0, %s134
        %s136 = smul.u32 32, %s9
      $region28: #{unet4_forward.17} parent=23 // pred_fallthru
        _
    $region24: #{unet4_forward.17} parent=5 // pred_fallthru
      _
    %p137 = scmp.le.s32.totalorder 1, %s9
    %p138 = scmp.lt.s32.totalorder %s9, 3
    %p139 = pnand %p137, %p138
    %p140 = pneg %p139
    // Predicated region
    $region29: #{unet4_forward.17} parent=5 // pred_check
      _
    $region30: #{unet4_forward.17} parent=5 // pred_check_branch
      %142 = sbr.rel (%p139) target = $region32
    $region31: #{unet4_forward.17} parent=5 // pred_region
      %s143 = ssub.s32 %s9, 1
      %s144 = smul.u32 32, %s14
      %p145 = scmp.lt.s32.totalorder %s144, 63
      %s146 = scalar_select %p145, %s144, 63
      %s147 = smul.addr %s146, 8
      %s148 = scalar_lea.vmem %s0, %s147
      %p149 = pneg %p35
      %p150 = pneg %p32
      %p151 = pneg %p56
      %p152 = pneg %p53
      %p153 = pneg %p77
      %p154 = pneg %p74
      %p155 = pneg %p103
      %p156 = pneg %p100
      %s157 = smul.u32 32, %s14
      %p158 = scmp.lt.s32.totalorder %s157, 63
      %s159 = scalar_select %p158, %s157, 63
      %s160 = smul.addr %s159, 8
      %s161 = scalar_lea.vmem %s3, %s160
      %s162 = smul.u32 32, %s14
      %p163 = scmp.lt.s32.totalorder %s162, 63
      %s164 = scalar_select %p163, %s162, 63
      %s165 = smul.addr %s164, 8
      %s166 = scalar_lea.vmem %s0, %s165
      %s167 = smul.u32 32, %s14
      %s168 = smul.u32 32, %s14
      %p169 = scmp.lt.s32.totalorder %s168, 63
      %s170 = scalar_select %p169, %s168, 63
      %s171 = smul.addr %s170, 8
      %s172 = scalar_lea.vmem %s3, %s171
      %s173 = smul.u32 32, %s14
      %v174 = vld [vmem:[%s166] sm:$0xff]
      %v175 = vld [vmem:[%s166 + $0x8] sm:$0xff]
      %v176 = vld [vmem:[%s166 + $0x10] sm:$0xff]
      %v177 = vld [vmem:[%s166 + $0x18] sm:$0xff]
      %v178 = vld [vmem:[%s166 + $0x20] sm:$0xff]
      %v179 = vld [vmem:[%s166 + $0x28] sm:$0xff]
      %v180 = vld [vmem:[%s166 + $0x30] sm:$0xff]
      %v181 = vld [vmem:[%s166 + $0x38] sm:$0xff]
      %v182 = vld [vmem:[%s166 + $0x40] sm:$0xff]
      %v183 = vld [vmem:[%s166 + $0x48] sm:$0xff]
      %v184 = vld [vmem:[%s166 + $0x50] sm:$0xff]
      %v185 = vld [vmem:[%s166 + $0x58] sm:$0xff]
      %v186 = vld [vmem:[%s166 + $0x60] sm:$0xff]
      %v187 = vld [vmem:[%s166 + $0x68] sm:$0xff]
      %v188 = vld [vmem:[%s166 + $0x70] sm:$0xff]
      %v189 = vld [vmem:[%s166 + $0x78] sm:$0xff]
      %v190 = vld [vmem:[%s166 + $0x80] sm:$0xff]
      %v191 = vld [vmem:[%s166 + $0x88] sm:$0xff]
      %v192 = vld [vmem:[%s166 + $0x90] sm:$0xff]
      %v193 = vld [vmem:[%s166 + $0x98] sm:$0xff]
      %v194 = vld [vmem:[%s166 + $0xa0] sm:$0xff]
      %v195 = vld [vmem:[%s166 + $0xa8] sm:$0xff]
      %v196 = vld [vmem:[%s166 + $0xb0] sm:$0xff]
      %v197 = vld [vmem:[%s166 + $0xb8] sm:$0xff]
      %v198 = vld [vmem:[%s166 + $0xc0] sm:$0xff]
      %v199 = vld [vmem:[%s166 + $0xc8] sm:$0xff]
      %v200 = vld [vmem:[%s166 + $0xd0] sm:$0xff]
      %v201 = vld [vmem:[%s166 + $0xd8] sm:$0xff]
      %v202 = vld [vmem:[%s166 + $0xe0] sm:$0xff]
      %v203 = vld [vmem:[%s166 + $0xe8] sm:$0xff]
      %v204 = vld [vmem:[%s166 + $0xf0] sm:$0xff]
      %v205 = vld [vmem:[%s166 + $0xf8] sm:$0xff]
      %v206 = vld [vmem:[%s1] sm:$0x1]
      %v208 = vlaneseq
      %v209 = vshrl.u32 %v208, 7
      %v210 = vsub.s32 0, %v209
      %v211 = vrot.slane %v206, %v210
      %v213 = vmul.f32 %v174, %v211
      %v214 = vmul.f32 %v175, %v211
      %v215 = vmul.f32 %v176, %v211
      %v216 = vmul.f32 %v177, %v211
      %v217 = vmul.f32 %v178, %v211
      %v218 = vmul.f32 %v179, %v211
      %v219 = vmul.f32 %v180, %v211
      %v220 = vmul.f32 %v181, %v211
      %v221 = vmul.f32 %v182, %v211
      %v222 = vmul.f32 %v183, %v211
      %v223 = vmul.f32 %v184, %v211
      %v224 = vmul.f32 %v185, %v211
      %v225 = vmul.f32 %v186, %v211
      %v226 = vmul.f32 %v187, %v211
      %v227 = vmul.f32 %v188, %v211
      %v228 = vmul.f32 %v189, %v211
      %v229 = vmul.f32 %v190, %v211
      %v230 = vmul.f32 %v191, %v211
      %v231 = vmul.f32 %v192, %v211
      %v232 = vmul.f32 %v193, %v211
      %v233 = vmul.f32 %v194, %v211
      %v234 = vmul.f32 %v195, %v211
      %v235 = vmul.f32 %v196, %v211
      %v236 = vmul.f32 %v197, %v211
      %v237 = vmul.f32 %v198, %v211
      %v238 = vmul.f32 %v199, %v211
      %v239 = vmul.f32 %v200, %v211
      %v240 = vmul.f32 %v201, %v211
      %v241 = vmul.f32 %v202, %v211
      %v242 = vmul.f32 %v203, %v211
      %v243 = vmul.f32 %v204, %v211
      %v244 = vmul.f32 %v205, %v211
      %v245 = vld [vmem:[%s2] sm:$0x1]
      %v247 = vlaneseq
      %v248 = vshrl.u32 %v247, 7
      %v249 = vsub.s32 0, %v248
      %v250 = vrot.slane %v245, %v249
      %v252 = vadd.f32 %v213, %v250
      %v253 = vadd.f32 %v214, %v250
      %v254 = vadd.f32 %v215, %v250
      %v255 = vadd.f32 %v216, %v250
      %v256 = vadd.f32 %v217, %v250
      %v257 = vadd.f32 %v218, %v250
      %v258 = vadd.f32 %v219, %v250
      %v259 = vadd.f32 %v220, %v250
      %v260 = vadd.f32 %v221, %v250
      %v261 = vadd.f32 %v222, %v250
      %v262 = vadd.f32 %v223, %v250
      %v263 = vadd.f32 %v224, %v250
      %v264 = vadd.f32 %v225, %v250
      %v265 = vadd.f32 %v226, %v250
      %v266 = vadd.f32 %v227, %v250
      %v267 = vadd.f32 %v228, %v250
      %v268 = vadd.f32 %v229, %v250
      %v269 = vadd.f32 %v230, %v250
      %v270 = vadd.f32 %v231, %v250
      %v271 = vadd.f32 %v232, %v250
      %v272 = vadd.f32 %v233, %v250
      %v273 = vadd.f32 %v234, %v250
      %v274 = vadd.f32 %v235, %v250
      %v275 = vadd.f32 %v236, %v250
      %v276 = vadd.f32 %v237, %v250
      %v277 = vadd.f32 %v238, %v250
      %v278 = vadd.f32 %v239, %v250
      %v279 = vadd.f32 %v240, %v250
      %v280 = vadd.f32 %v241, %v250
      %v281 = vadd.f32 %v242, %v250
      %v282 = vadd.f32 %v243, %v250
      %v283 = vadd.f32 %v244, %v250
      %v284 = vmax.f32 %v252, 0.0
      %v285 = vmax.f32 %v253, 0.0
      %v286 = vmax.f32 %v254, 0.0
      %v287 = vmax.f32 %v255, 0.0
      %v288 = vmax.f32 %v256, 0.0
      %v289 = vmax.f32 %v257, 0.0
      %v290 = vmax.f32 %v258, 0.0
      %v291 = vmax.f32 %v259, 0.0
      %v292 = vmax.f32 %v260, 0.0
      %v293 = vmax.f32 %v261, 0.0
      %v294 = vmax.f32 %v262, 0.0
      %v295 = vmax.f32 %v263, 0.0
      %v296 = vmax.f32 %v264, 0.0
      %v297 = vmax.f32 %v265, 0.0
      %v298 = vmax.f32 %v266, 0.0
      %v299 = vmax.f32 %v267, 0.0
      %v300 = vmax.f32 %v268, 0.0
      %v301 = vmax.f32 %v269, 0.0
      %v302 = vmax.f32 %v270, 0.0
      %v303 = vmax.f32 %v271, 0.0
      %v304 = vmax.f32 %v272, 0.0
      %v305 = vmax.f32 %v273, 0.0
      %v306 = vmax.f32 %v274, 0.0
      %v307 = vmax.f32 %v275, 0.0
      %v308 = vmax.f32 %v276, 0.0
      %v309 = vmax.f32 %v277, 0.0
      %v310 = vmax.f32 %v278, 0.0
      %v311 = vmax.f32 %v279, 0.0
      %v312 = vmax.f32 %v280, 0.0
      %v313 = vmax.f32 %v281, 0.0
      %v314 = vmax.f32 %v282, 0.0
      %v315 = vmax.f32 %v283, 0.0
      %vm316 = vcmask 64512
      %317 = vst.msk [vmem:[%s172] sm:$0xff] %vm316, %v284
      %318 = vst.msk [vmem:[%s172 + $0x8] sm:$0xff] %vm316, %v285
      %319 = vst.msk [vmem:[%s172 + $0x10] sm:$0xff] %vm316, %v286
      %320 = vst.msk [vmem:[%s172 + $0x18] sm:$0xff] %vm316, %v287
      %321 = vst.msk [vmem:[%s172 + $0x20] sm:$0xff] %vm316, %v288
      %322 = vst.msk [vmem:[%s172 + $0x28] sm:$0xff] %vm316, %v289
      %323 = vst.msk [vmem:[%s172 + $0x30] sm:$0xff] %vm316, %v290
      %324 = vst.msk [vmem:[%s172 + $0x38] sm:$0xff] %vm316, %v291
      %325 = vst.msk [vmem:[%s172 + $0x40] sm:$0xff] %vm316, %v292
      %326 = vst.msk [vmem:[%s172 + $0x48] sm:$0xff] %vm316, %v293
      %327 = vst.msk [vmem:[%s172 + $0x50] sm:$0xff] %vm316, %v294
      %328 = vst.msk [vmem:[%s172 + $0x58] sm:$0xff] %vm316, %v295
      %329 = vst.msk [vmem:[%s172 + $0x60] sm:$0xff] %vm316, %v296
      %330 = vst.msk [vmem:[%s172 + $0x68] sm:$0xff] %vm316, %v297
      %331 = vst.msk [vmem:[%s172 + $0x70] sm:$0xff] %vm316, %v298
      %332 = vst.msk [vmem:[%s172 + $0x78] sm:$0xff] %vm316, %v299
      %333 = vst.msk [vmem:[%s172 + $0x80] sm:$0xff] %vm316, %v300
      %334 = vst.msk [vmem:[%s172 + $0x88] sm:$0xff] %vm316, %v301
      %335 = vst.msk [vmem:[%s172 + $0x90] sm:$0xff] %vm316, %v302
      %336 = vst.msk [vmem:[%s172 + $0x98] sm:$0xff] %vm316, %v303
      %337 = vst.msk [vmem:[%s172 + $0xa0] sm:$0xff] %vm316, %v304
      %338 = vst.msk [vmem:[%s172 + $0xa8] sm:$0xff] %vm316, %v305
      %339 = vst.msk [vmem:[%s172 + $0xb0] sm:$0xff] %vm316, %v306
      %340 = vst.msk [vmem:[%s172 + $0xb8] sm:$0xff] %vm316, %v307
      %341 = vst.msk [vmem:[%s172 + $0xc0] sm:$0xff] %vm316, %v308
      %342 = vst.msk [vmem:[%s172 + $0xc8] sm:$0xff] %vm316, %v309
      %343 = vst.msk [vmem:[%s172 + $0xd0] sm:$0xff] %vm316, %v310
      %344 = vst.msk [vmem:[%s172 + $0xd8] sm:$0xff] %vm316, %v311
      %345 = vst.msk [vmem:[%s172 + $0xe0] sm:$0xff] %vm316, %v312
      %346 = vst.msk [vmem:[%s172 + $0xe8] sm:$0xff] %vm316, %v313
      %347 = vst.msk [vmem:[%s172 + $0xf0] sm:$0xff] %vm316, %v314
      %348 = vst.msk [vmem:[%s172 + $0xf8] sm:$0xff] %vm316, %v315
      %s349 = smul.u32 32, %s14
      %p350 = scmp.lt.s32.totalorder %s349, 63
      %s351 = scalar_select %p350, %s349, 63
      %s352 = smul.addr %s351, 8
      %s353 = scalar_lea.vmem %s3, %s352
      // Predicated region
      $region33: #{unet4_forward.17} parent=31 // pred_check
        %p354 = pneg %p100
      $region34: #{unet4_forward.17} parent=31 // pred_check_branch
        %356 = sbr.rel (%p354) target = $region36
      $region35: #{unet4_forward.17} parent=31 // pred_region
        %s357 = smul.u32 32, %s14
      $region36: #{unet4_forward.17} parent=31 // pred_fallthru
        _
    $region32: #{unet4_forward.17} parent=5 // pred_fallthru
      _
    %p358 = scmp.le.s32.totalorder 2, %s9
    // Predicated region
    $region37: #{unet4_forward.17} parent=5 // pred_check
      %p359 = pneg %p358
    $region38: #{unet4_forward.17} parent=5 // pred_check_branch
      %361 = sbr.rel (%p359) target = $region40
    $region39: #{unet4_forward.17} parent=5 // pred_region
      %s362 = ssub.s32 %s9, 2
      // Predicated region
      $region41: #{unet4_forward.17} parent=39 // pred_check
        %p363 = pneg %p106
      $region42: #{unet4_forward.17} parent=39 // pred_check_branch
        %365 = sbr.rel (%p363) target = $region44
      $region43: #{unet4_forward.17} parent=39 // pred_region
        %s366 = smul.u32 32, %s15
        %p367 = scmp.lt.s32.totalorder %s366, 63
        %s368 = scalar_select %p367, %s366, 63
        %s369 = smul.addr %s368, 8
        %s370 = scalar_lea.vmem %s3, %s369
      $region44: #{unet4_forward.17} parent=39 // pred_fallthru
        _
    $region40: #{unet4_forward.17} parent=5 // pred_fallthru
      _
  $region6: #{unet4_forward.17} parent=0 // loop_footer
    %s13 = sadd.s32 1, %s9
  $region7: #{unet4_forward.17} parent=0 // loop_footer_branch
    %8 = sbr.rel target = $region3
  $region8: #{unet4_forward.17} parent=0 // loop_exit
    _

// kernel: unet4_forward.16
$region0: #{unet4_forward.16}
  #allocation0 [shape = 'u32[]', space=smem, size = 0x4, offset = 0x4, fixed_abs, tag = 'smem constant byte address 0x4 - core index']
  #allocation1 [shape = 'u32[144,128]{1,0:T(1,128)}', space=vmem, size = 0x12000, scoped, tag = 'internal scratch']
  %s0 = inlined_call_operand.vmem [shape: f32[512,36], index: 0, kind: input, shape index: {}]
  %s1 = inlined_call_operand.vmem [shape: f32[36,8], index: 1, kind: input, shape index: {}]
  %s2 = inlined_call_operand.vmem [shape: f32[512,8], index: 2, kind: output, shape index: {0}]
  %s3 = inlined_call_operand.vmem [shape: f32[2,2,8], index: 3, kind: output, shape index: {1}]
  %4 = xla_tuple %s2, %s3
  %s5 = sld [smem:[#allocation0]]
  $region49: #{unet4_forward.16} parent=0
    _
  %s7 = ssub.s32 1, %s5
  %s8 = scalar_select 0, %s7, %s5
  loop: start=0, step=1, limit=4
  $region2: #{unet4_forward.16} parent=0 // loop_pre_header
    _
  $region3: #{unet4_forward.16} parent=0 // loop_header
    %s10 = sphi 0, %s14
    %p11 = scmp.ge.s32.totalorder %s10, 4
    %s20 = sphi 0, %s22
    %s23 = sphi 0, %s20
    %s24 = sphi 0, %s23
    %s40 = sphi 0, %s24
    %s44 = sphi 0, %s44
    %s46 = sphi 0, %s44
    %s47 = sphi 0, %s46
    %s61 = sphi 0, %s47
    %s67 = sphi 0, %s69
    %s70 = sphi 0, %s67
    %s71 = sphi 0, %s70
    %s87 = sphi 0, %s71
    %s93 = sphi 0, %s95
    %s96 = sphi 0, %s93
    %s97 = sphi 0, %s96
    %s113 = sphi 0, %s97
  $region4: #{unet4_forward.16} parent=0 // loop_header_branch
    %13 = sbr.rel (%p11) target = $region8
  $region5: #{unet4_forward.16} parent=0 // loop_body
    %s15 = ssub.s32 %s10, 1
    %s16 = ssub.s32 %s10, 2
    %s17 = sadd.s32 %s10, 1
    %s18 = ssub.s32 %s10, %s17
    %p19 = scmp.eq.s32.totalorder %s18, 0
    %s21 = sadd.s32 %s20, 1
    %s22 = scalar_select %p19, %s20, %s21
    %p25 = pneg %p19
    %p26 = scmp.eq.s32.totalorder %s10, 1
    %p27 = por %p25, %p26
    %p28 = scmp.ne.s32.totalorder %s20, %s23
    %p29 = scmp.eq.s32.totalorder %s10, 0
    %p30 = por %p28, %p29
    %p31 = scmp.ne.s32.totalorder %s20, %s23
    %p32 = scmp.eq.s32.totalorder %s15, 1
    %p33 = por %p31, %p32
    %p34 = scmp.ne.s32.totalorder %s23, %s24
    %p35 = scmp.eq.s32.totalorder %s15, 0
    %p36 = por %p34, %p35
    %p37 = scmp.ne.s32.totalorder %s23, %s24
    %p38 = scmp.eq.s32.totalorder %s16, 1
    %p39 = por %p37, %p38
    %p41 = scmp.ne.s32.totalorder %s24, %s40
    %p42 = scmp.eq.s32.totalorder %s16, 0
    %p43 = por %p41, %p42
    %s45 = sadd.s32 %s44, 1
    %p48 = scmp.eq.s32.totalorder %s10, 1
    %p49 = scmp.ne.s32.totalorder %s44, %s46
    %p50 = scmp.eq.s32.totalorder %s10, 0
    %p51 = por %p49, %p50
    %p52 = scmp.ne.s32.totalorder %s44, %s46
    %p53 = scmp.eq.s32.totalorder %s15, 1
    %p54 = por %p52, %p53
    %p55 = scmp.ne.s32.totalorder %s46, %s47
    %p56 = scmp.eq.s32.totalorder %s15, 0
    %p57 = por %p55, %p56
    %p58 = scmp.ne.s32.totalorder %s46, %s47
    %p59 = scmp.eq.s32.totalorder %s16, 1
    %p60 = por %p58, %p59
    %p62 = scmp.ne.s32.totalorder %s47, %s61
    %p63 = scmp.eq.s32.totalorder %s16, 0
    %p64 = por %p62, %p63
    %s65 = ssub.s32 %s10, %s17
    %p66 = scmp.eq.s32.totalorder %s65, 0
    %s68 = sadd.s32 %s67, 1
    %s69 = scalar_select %p66, %s67, %s68
    %p72 = pneg %p66
    %p73 = scmp.eq.s32.totalorder %s10, 1
    %p74 = por %p72, %p73
    %p75 = scmp.ne.s32.totalorder %s67, %s70
    %p76 = scmp.eq.s32.totalorder %s10, 0
    %p77 = por %p75, %p76
    %p78 = scmp.ne.s32.totalorder %s67, %s70
    %p79 = scmp.eq.s32.totalorder %s15, 1
    %p80 = por %p78, %p79
    %p81 = scmp.ne.s32.totalorder %s70, %s71
    %p82 = scmp.eq.s32.totalorder %s15, 0
    %p83 = por %p81, %p82
    %p84 = scmp.ne.s32.totalorder %s70, %s71
    %p85 = scmp.eq.s32.totalorder %s16, 1
    %p86 = por %p84, %p85
    %p88 = scmp.ne.s32.totalorder %s71, %s87
    %p89 = scmp.eq.s32.totalorder %s16, 0
    %p90 = por %p88, %p89
    %s91 = ssub.s32 %s10, %s17
    %p92 = scmp.eq.s32.totalorder %s91, 0
    %s94 = sadd.s32 %s93, 1
    %s95 = scalar_select %p92, %s93, %s94
    %p98 = pneg %p92
    %p99 = scmp.eq.s32.totalorder %s10, 1
    %p100 = por %p98, %p99
    %p101 = scmp.ne.s32.totalorder %s93, %s96
    %p102 = scmp.eq.s32.totalorder %s10, 0
    %p103 = por %p101, %p102
    %p104 = scmp.ne.s32.totalorder %s93, %s96
    %p105 = scmp.eq.s32.totalorder %s15, 1
    %p106 = por %p104, %p105
    %p107 = scmp.ne.s32.totalorder %s96, %s97
    %p108 = scmp.eq.s32.totalorder %s15, 0
    %p109 = por %p107, %p108
    %p110 = scmp.ne.s32.totalorder %s96, %s97
    %p111 = scmp.eq.s32.totalorder %s16, 1
    %p112 = por %p110, %p111
    %p114 = scmp.ne.s32.totalorder %s97, %s113
    %p115 = scmp.eq.s32.totalorder %s16, 0
    %p116 = por %p114, %p115
    %p117 = scmp.le.s32.totalorder 1, %s10
    %p118 = scmp.lt.s32.totalorder %s10, 3
    %p119 = pnand %p117, %p118
    %p120 = pneg %p119
    // Predicated region
    $region9: #{unet4_forward.16} parent=5 // pred_check
      _
    $region10: #{unet4_forward.16} parent=5 // pred_check_branch
      %122 = sbr.rel (%p119) target = $region12
    $region11: #{unet4_forward.16} parent=5 // pred_region
      %s123 = ssub.s32 %s10, 1
      // Predicated region
      $region13: #{unet4_forward.16} parent=11 // pred_check
        %p124 = pneg %p57
      $region14: #{unet4_forward.16} parent=11 // pred_check_branch
        %126 = sbr.rel (%p124) target = $region16
      $region15: #{unet4_forward.16} parent=11 // pred_region
        _
      $region16: #{unet4_forward.16} parent=11 // pred_fallthru
        _
    $region12: #{unet4_forward.16} parent=5 // pred_fallthru
      _
    %p127 = scmp.lt.s32.totalorder %s10, 2
    // Predicated region
    $region17: #{unet4_forward.16} parent=5 // pred_check
      %p128 = pneg %p127
    $region18: #{unet4_forward.16} parent=5 // pred_check_branch
      %130 = sbr.rel (%p128) target = $region20
    $region19: #{unet4_forward.16} parent=5 // pred_region
      // Predicated region
      $region21: #{unet4_forward.16} parent=19 // pred_check
        %p131 = pneg %p30
      $region22: #{unet4_forward.16} parent=19 // pred_check_branch
        %133 = sbr.rel (%p131) target = $region24
      $region23: #{unet4_forward.16} parent=19 // pred_region
        %s134 = smul.u32 32, %s10
        %p135 = scmp.lt.s32.totalorder %s134, 63
        %s136 = scalar_select %p135, %s134, 63
        %s137 = smul.addr %s136, 8
        %s138 = scalar_lea.vmem %s0, %s137
        %s139 = smul.u32 32, %s10
      $region24: #{unet4_forward.16} parent=19 // pred_fallthru
        _
    $region20: #{unet4_forward.16} parent=5 // pred_fallthru
      _
    %p140 = scmp.le.s32.totalorder 1, %s10
    %p141 = scmp.lt.s32.totalorder %s10, 3
    %p142 = pnand %p140, %p141
    %p143 = pneg %p142
    // Predicated region
    $region25: #{unet4_forward.16} parent=5 // pred_check
      _
    $region26: #{unet4_forward.16} parent=5 // pred_check_branch
      %145 = sbr.rel (%p142) target = $region28
    $region27: #{unet4_forward.16} parent=5 // pred_region
      %s146 = ssub.s32 %s10, 1
      %s147 = smul.u32 32, %s15
      %p148 = scmp.lt.s32.totalorder %s147, 63
      %s149 = scalar_select %p148, %s147, 63
      %s150 = smul.addr %s149, 8
      %s151 = scalar_lea.vmem %s0, %s150
      %p152 = pneg %p36
      %p153 = pneg %p33
      %p154 = pneg %p57
      %p155 = pneg %p54
      %p156 = pneg %p83
      %p157 = pneg %p80
      %s158 = smul.u32 32, %s15
      %p159 = scmp.lt.s32.totalorder %s158, 63
      %s160 = scalar_select %p159, %s158, 63
      %s161 = smul.addr %s160, 8
      %s162 = scalar_lea.vmem %s2, %s161
      %p163 = pneg %p109
      %p164 = pneg %p106
      %p165 = scmp.lt.s32.totalorder %s15, 1
      %s166 = scalar_select %p165, %s15, 1
      %s167 = smul.addr %s166, 2
      %s168 = scalar_lea.vmem %s3, %s167
      %s169 = smul.u32 32, %s15
      %p170 = scmp.lt.s32.totalorder %s169, 63
      %s171 = scalar_select %p170, %s169, 63
      %s172 = smul.addr %s171, 8
      %s173 = scalar_lea.vmem %s0, %s172
      %s174 = smul.u32 32, %s15
      %s175 = smul.u32 32, %s15
      %p176 = scmp.lt.s32.totalorder %s175, 63
      %s177 = scalar_select %p176, %s175, 63
      %s178 = smul.addr %s177, 8
      %s179 = scalar_lea.vmem %s2, %s178
      %s180 = smul.u32 32, %s15
      %p181 = scmp.lt.s32.totalorder %s15, 1
      %s182 = scalar_select %p181, %s15, 1
      %s183 = smul.addr %s182, 2
      %s184 = scalar_lea.vmem %s3, %s183
      %v185 = vld [vmem:[%s173] sm:$0xff]
      %v186 = vld [vmem:[%s173 + $0x8] sm:$0xff]
      %v187 = vld [vmem:[%s173 + $0x10] sm:$0xff]
      %v188 = vld [vmem:[%s173 + $0x18] sm:$0xff]
      %v189 = vld [vmem:[%s173 + $0x20] sm:$0xff]
      %v190 = vld [vmem:[%s173 + $0x28] sm:$0xff]
      %v191 = vld [vmem:[%s173 + $0x30] sm:$0xff]
      %v192 = vld [vmem:[%s173 + $0x38] sm:$0xff]
      %v193 = vld [vmem:[%s173 + $0x40] sm:$0xff]
      %v194 = vld [vmem:[%s173 + $0x48] sm:$0xff]
      %v195 = vld [vmem:[%s173 + $0x50] sm:$0xff]
      %v196 = vld [vmem:[%s173 + $0x58] sm:$0xff]
      %v197 = vld [vmem:[%s173 + $0x60] sm:$0xff]
      %v198 = vld [vmem:[%s173 + $0x68] sm:$0xff]
      %v199 = vld [vmem:[%s173 + $0x70] sm:$0xff]
      %v200 = vld [vmem:[%s173 + $0x78] sm:$0xff]
      %v201 = vld [vmem:[%s173 + $0x80] sm:$0xff]
      %v202 = vld [vmem:[%s173 + $0x88] sm:$0xff]
      %v203 = vld [vmem:[%s173 + $0x90] sm:$0xff]
      %v204 = vld [vmem:[%s173 + $0x98] sm:$0xff]
      %v205 = vld [vmem:[%s173 + $0xa0] sm:$0xff]
      %v206 = vld [vmem:[%s173 + $0xa8] sm:$0xff]
      %v207 = vld [vmem:[%s173 + $0xb0] sm:$0xff]
      %v208 = vld [vmem:[%s173 + $0xb8] sm:$0xff]
      %v209 = vld [vmem:[%s173 + $0xc0] sm:$0xff]
      %v210 = vld [vmem:[%s173 + $0xc8] sm:$0xff]
      %v211 = vld [vmem:[%s173 + $0xd0] sm:$0xff]
      %v212 = vld [vmem:[%s173 + $0xd8] sm:$0xff]
      %v213 = vld [vmem:[%s173 + $0xe0] sm:$0xff]
      %v214 = vld [vmem:[%s173 + $0xe8] sm:$0xff]
      %v215 = vld [vmem:[%s173 + $0xf0] sm:$0xff]
      %v216 = vld [vmem:[%s173 + $0xf8] sm:$0xff]
      %v217 = vld [vmem:[%s1] sm:$0xff]
      %v218 = vld [vmem:[%s1 + $0x8] sm:$0xff]
      %v219 = vld [vmem:[%s1 + $0x10] sm:$0xff]
      %v220 = vld [vmem:[%s1 + $0x18] sm:$0xff]
      %v221 = vld [vmem:[%s1 + $0x20] sm:$0xf]
      %vm222 = vcmask 293888
      %v224 = vsel %vm222, %v185, 0
      %v227 = vsel %vm222, %v186, 0
      %v230 = vsel %vm222, %v187, 0
      %v233 = vsel %vm222, %v188, 0
      %v236 = vsel %vm222, %v189, 0
      %v239 = vsel %vm222, %v190, 0
      %v242 = vsel %vm222, %v191, 0
      %v245 = vsel %vm222, %v192, 0
      %v248 = vsel %vm222, %v193, 0
      %v251 = vsel %vm222, %v194, 0
      %v254 = vsel %vm222, %v195, 0
      %v257 = vsel %vm222, %v196, 0
      %v260 = vsel %vm222, %v197, 0
      %v263 = vsel %vm222, %v198, 0
      %v266 = vsel %vm222, %v199, 0
      %v269 = vsel %vm222, %v200, 0
      %v272 = vsel %vm222, %v201, 0
      %v275 = vsel %vm222, %v202, 0
      %v278 = vsel %vm222, %v203, 0
      %v281 = vsel %vm222, %v204, 0
      %v284 = vsel %vm222, %v205, 0
      %v287 = vsel %vm222, %v206, 0
      %v290 = vsel %vm222, %v207, 0
      %v293 = vsel %vm222, %v208, 0
      %v296 = vsel %vm222, %v209, 0
      %v299 = vsel %vm222, %v210, 0
      %v302 = vsel %vm222, %v211, 0
      %v305 = vsel %vm222, %v212, 0
      %v308 = vsel %vm222, %v213, 0
      %v311 = vsel %vm222, %v214, 0
      %v314 = vsel %vm222, %v215, 0
      %v317 = vsel %vm222, %v216, 0
      %vm319 = vcmask 1043456
      %v321 = vsel %vm319, %v221, 0
      %323 = vmatprep.subr.mxu0 0.0
      %324 = vmatpush1.msra.mxu0 %v217
      %325 = vmatprep.subr.mxu0 0.0
      %326 = vmatpush1.msra.mxu0 %v218
      %327 = vmatprep.subr.mxu0 0.0
      %328 = vmatpush1.msra.mxu0 %v219
      %329 = vmatprep.subr.mxu0 0.0
      %330 = vmatpush1.msra.mxu0 %v220
      %331 = vmatprep.subr.mxu0 0.0
      %332 = vmatpush1.msra.mxu0 %v321
      %333 = vmatprep.subr.mxu0 0.0
      %334 = vmatpush1.msra.mxu0 0.0
      %335 = vmatprep.subr.mxu0 0.0
      %336 = vmatpush1.msra.mxu0 0.0
      %337 = vmatprep.subr.mxu0 0.0
      %338 = vmatpush1.msra.mxu0 0.0
      %339 = vmatprep.subr.mxu0 0.0
      %340 = vmatpush1.msra.mxu0 0.0
      %341 = vmatprep.subr.mxu0 0.0
      %342 = vmatpush1.msra.mxu0 0.0
      %343 = vmatprep.subr.mxu0 0.0
      %344 = vmatpush1.msra.mxu0 0.0
      %345 = vmatprep.subr.mxu0 0.0
      %346 = vmatpush1.msra.mxu0 0.0
      %347 = vmatprep.subr.mxu0 0.0
      %348 = vmatpush1.msra.mxu0 0.0
      %349 = vmatprep.subr.mxu0 0.0
      %350 = vmatpush1.msra.mxu0 0.0
      %351 = vmatprep.subr.mxu0 0.0
      %352 = vmatpush1.msra.mxu0 0.0
      %353 = vmatprep.subr.mxu0 0.0
      %354 = vmatpush1.msra.mxu0 0.0
      %355 = vmatprep.subr.mxu0 0.0
      %356 = vmatpush1.msra.mxu0 0.0
      %357 = vmatprep.subr.mxu0 0.0
      %358 = vmatpush1.msra.mxu0 0.0
      %359 = vmatprep.subr.mxu0 0.0
      %360 = vmatpush1.msra.mxu0 0.0
      %361 = vmatprep.subr.mxu0 0.0
      %362 = vmatpush1.msra.mxu0 0.0
      %363 = vmatprep.subr.mxu0 0.0
      %364 = vmatpush1.msra.mxu0 0.0
      %365 = vmatprep.subr.mxu0 0.0
      %366 = vmatpush1.msra.mxu0 0.0
      %367 = vmatprep.subr.mxu0 0.0
      %368 = vmatpush1.msra.mxu0 0.0
      %369 = vmatprep.subr.mxu0 0.0
      %370 = vmatpush1.msra.mxu0 0.0
      %371 = vmatprep.subr.mxu0 0.0
      %372 = vmatpush1.msra.mxu0 0.0
      %373 = vmatprep.subr.mxu0 0.0
      %374 = vmatpush1.msra.mxu0 0.0
      %375 = vmatprep.subr.mxu0 0.0
      %376 = vmatpush1.msra.mxu0 0.0
      %377 = vmatprep.subr.mxu0 0.0
      %378 = vmatpush1.msra.mxu0 0.0
      %379 = vmatprep.subr.mxu0 0.0
      %380 = vmatpush1.msra.mxu0 0.0
      %381 = vmatprep.subr.mxu0 0.0
      %382 = vmatpush1.msra.mxu0 0.0
      %383 = vmatprep.subr.mxu0 0.0
      %384 = vmatpush1.msra.mxu0 0.0
      %385 = vmatprep.subr.mxu0 0.0
      %386 = vmatpush1.msra.mxu0 0.0
      %387 = vmatprep.mubr.f32.mxu0 0.0
      %388 = vmatmul.mubr.f32.gmra.mrb[0].mxu0 %v224
      %v389 = vpop.f32.mrb[0].mxu0
      %v390 = vadd.f32 0.0, %v389
      %v391 = vpop.f32.mrb[0].mxu0
      %392 = vmatprep.mubr.f32.mxu0 0.0
      %393 = vmatmul.mubr.f32.gmra.mrb[0].mxu0 %v227
      %v394 = vpop.f32.mrb[0].mxu0
      %v395 = vadd.f32 0.0, %v394
      %v396 = vpop.f32.mrb[0].mxu0
      %397 = vmatprep.mubr.f32.mxu0 0.0
      %398 = vmatmul.mubr.f32.gmra.mrb[0].mxu0 %v230
      %v399 = vpop.f32.mrb[0].mxu0
      %v400 = vadd.f32 0.0, %v399
      %v401 = vpop.f32.mrb[0].mxu0
      %402 = vmatprep.mubr.f32.mxu0 0.0
      %403 = vmatmul.mubr.f32.gmra.mrb[0].mxu0 %v233
      %v404 = vpop.f32.mrb[0].mxu0
      %v405 = vadd.f32 0.0, %v404
      %v406 = vpop.f32.mrb[0].mxu0
      %407 = vmatprep.mubr.f32.mxu0 0.0
      %408 = vmatmul.mubr.f32.gmra.mrb[0].mxu0 %v236
      %v409 = vpop.f32.mrb[0].mxu0
      %v410 = vadd.f32 0.0, %v409
      %v411 = vpop.f32.mrb[0].mxu0
      %412 = vmatprep.mubr.f32.mxu0 0.0
      %413 = vmatmul.mubr.f32.gmra.mrb[0].mxu0 %v239
      %v414 = vpop.f32.mrb[0].mxu0
      %v415 = vadd.f32 0.0, %v414
      %v416 = vpop.f32.mrb[0].mxu0
      %417 = vmatprep.mubr.f32.mxu0 0.0
      %418 = vmatmul.mubr.f32.gmra.mrb[0].mxu0 %v242
      %v419 = vpop.f32.mrb[0].mxu0
      %v420 = vadd.f32 0.0, %v419
      %v421 = vpop.f32.mrb[0].mxu0
      %422 = vmatprep.mubr.f32.mxu0 0.0
      %423 = vmatmul.mubr.f32.gmra.mrb[0].mxu0 %v245
      %v424 = vpop.f32.mrb[0].mxu0
      %v425 = vadd.f32 0.0, %v424
      %v426 = vpop.f32.mrb[0].mxu0
      %427 = vmatprep.mubr.f32.mxu0 0.0
      %428 = vmatmul.mubr.f32.gmra.mrb[0].mxu0 %v248
      %v429 = vpop.f32.mrb[0].mxu0
      %v430 = vadd.f32 0.0, %v429
      %v431 = vpop.f32.mrb[0].mxu0
      %432 = vmatprep.mubr.f32.mxu0 0.0
      %433 = vmatmul.mubr.f32.gmra.mrb[0].mxu0 %v251
      %v434 = vpop.f32.mrb[0].mxu0
      %v435 = vadd.f32 0.0, %v434
      %v436 = vpop.f32.mrb[0].mxu0
      %437 = vmatprep.mubr.f32.mxu0 0.0
      %438 = vmatmul.mubr.f32.gmra.mrb[0].mxu0 %v254
      %v439 = vpop.f32.mrb[0].mxu0
      %v440 = vadd.f32 0.0, %v439
      %v441 = vpop.f32.mrb[0].mxu0
      %442 = vmatprep.mubr.f32.mxu0 0.0
      %443 = vmatmul.mubr.f32.gmra.mrb[0].mxu0 %v257
      %v444 = vpop.f32.mrb[0].mxu0
      %v445 = vadd.f32 0.0, %v444
      %v446 = vpop.f32.mrb[0].mxu0
      %447 = vmatprep.mubr.f32.mxu0 0.0
      %448 = vmatmul.mubr.f32.gmra.mrb[0].mxu0 %v260
      %v449 = vpop.f32.mrb[0].mxu0
      %v450 = vadd.f32 0.0, %v449
      %v451 = vpop.f32.mrb[0].mxu0
      %452 = vmatprep.mubr.f32.mxu0 0.0
      %453 = vmatmul.mubr.f32.gmra.mrb[0].mxu0 %v263
      %v454 = vpop.f32.mrb[0].mxu0
      %v455 = vadd.f32 0.0, %v454
      %v456 = vpop.f32.mrb[0].mxu0
      %457 = vmatprep.mubr.f32.mxu0 0.0
      %458 = vmatmul.mubr.f32.gmra.mrb[0].mxu0 %v266
      %v459 = vpop.f32.mrb[0].mxu0
      %v460 = vadd.f32 0.0, %v459
      %v461 = vpop.f32.mrb[0].mxu0
      %462 = vmatprep.mubr.f32.mxu0 0.0
      %463 = vmatmul.mubr.f32.gmra.mrb[0].mxu0 %v269
      %v464 = vpop.f32.mrb[0].mxu0
      %v465 = vadd.f32 0.0, %v464
      %v466 = vpop.f32.mrb[0].mxu0
      %467 = vmatprep.mubr.f32.mxu0 0.0
      %468 = vmatmul.mubr.f32.gmra.mrb[0].mxu0 %v272
      %v469 = vpop.f32.mrb[0].mxu0
      %v470 = vadd.f32 0.0, %v469
      %v471 = vpop.f32.mrb[0].mxu0
      %472 = vmatprep.mubr.f32.mxu0 0.0
      %473 = vmatmul.mubr.f32.gmra.mrb[0].mxu0 %v275
      %v474 = vpop.f32.mrb[0].mxu0
      %v475 = vadd.f32 0.0, %v474
      %v476 = vpop.f32.mrb[0].mxu0
      %477 = vmatprep.mubr.f32.mxu0 0.0
      %478 = vmatmul.mubr.f32.gmra.mrb[0].mxu0 %v278
      %v479 = vpop.f32.mrb[0].mxu0
      %v480 = vadd.f32 0.0, %v479
      %v481 = vpop.f32.mrb[0].mxu0
      %482 = vmatprep.mubr.f32.mxu0 0.0
      %483 = vmatmul.mubr.f32.gmra.mrb[0].mxu0 %v281
      %v484 = vpop.f32.mrb[0].mxu0
      %v485 = vadd.f32 0.0, %v484
      %v486 = vpop.f32.mrb[0].mxu0
      %487 = vmatprep.mubr.f32.mxu0 0.0
      %488 = vmatmul.mubr.f32.gmra.mrb[0].mxu0 %v284
      %v489 = vpop.f32.mrb[0].mxu0
      %v490 = vadd.f32 0.0, %v489
      %v491 = vpop.f32.mrb[0].mxu0
      %492 = vmatprep.mubr.f32.mxu0 0.0
      %493 = vmatmul.mubr.f32.gmra.mrb[0].mxu0 %v287
      %v494 = vpop.f32.mrb[0].mxu0
      %v495 = vadd.f32 0.0, %v494
      %v496 = vpop.f32.mrb[0].mxu0
      %497 = vmatprep.mubr.f32.mxu0 0.0
      %498 = vmatmul.mubr.f32.gmra.mrb[0].mxu0 %v290
      %v499 = vpop.f32.mrb[0].mxu0
      %v500 = vadd.f32 0.0, %v499
      %v501 = vpop.f32.mrb[0].mxu0
      %502 = vmatprep.mubr.f32.mxu0 0.0
      %503 = vmatmul.mubr.f32.gmra.mrb[0].mxu0 %v293
      %v504 = vpop.f32.mrb[0].mxu0
      %v505 = vadd.f32 0.0, %v504
      %v506 = vpop.f32.mrb[0].mxu0
      %507 = vmatprep.mubr.f32.mxu0 0.0
      %508 = vmatmul.mubr.f32.gmra.mrb[0].mxu0 %v296
      %v509 = vpop.f32.mrb[0].mxu0
      %v510 = vadd.f32 0.0, %v509
      %v511 = vpop.f32.mrb[0].mxu0
      %512 = vmatprep.mubr.f32.mxu0 0.0
      %513 = vmatmul.mubr.f32.gmra.mrb[0].mxu0 %v299
      %v514 = vpop.f32.mrb[0].mxu0
      %v515 = vadd.f32 0.0, %v514
      %v516 = vpop.f32.mrb[0].mxu0
      %517 = vmatprep.mubr.f32.mxu0 0.0
      %518 = vmatmul.mubr.f32.gmra.mrb[0].mxu0 %v302
      %v519 = vpop.f32.mrb[0].mxu0
      %v520 = vadd.f32 0.0, %v519
      %v521 = vpop.f32.mrb[0].mxu0
      %522 = vmatprep.mubr.f32.mxu0 0.0
      %523 = vmatmul.mubr.f32.gmra.mrb[0].mxu0 %v305
      %v524 = vpop.f32.mrb[0].mxu0
      %v525 = vadd.f32 0.0, %v524
      %v526 = vpop.f32.mrb[0].mxu0
      %527 = vmatprep.mubr.f32.mxu0 0.0
      %528 = vmatmul.mubr.f32.gmra.mrb[0].mxu0 %v308
      %v529 = vpop.f32.mrb[0].mxu0
      %v530 = vadd.f32 0.0, %v529
      %v531 = vpop.f32.mrb[0].mxu0
      %532 = vmatprep.mubr.f32.mxu0 0.0
      %533 = vmatmul.mubr.f32.gmra.mrb[0].mxu0 %v311
      %v534 = vpop.f32.mrb[0].mxu0
      %v535 = vadd.f32 0.0, %v534
      %v536 = vpop.f32.mrb[0].mxu0
      %537 = vmatprep.mubr.f32.mxu0 0.0
      %538 = vmatmul.mubr.f32.gmra.mrb[0].mxu0 %v314
      %v539 = vpop.f32.mrb[0].mxu0
      %v540 = vadd.f32 0.0, %v539
      %v541 = vpop.f32.mrb[0].mxu0
      %542 = vmatprep.mubr.f32.mxu0 0.0
      %543 = vmatmul.mubr.f32.gmra.mrb[0].mxu0 %v317
      %v544 = vpop.f32.mrb[0].mxu0
      %v545 = vadd.f32 0.0, %v544
      %v546 = vpop.f32.mrb[0].mxu0
      %547 = vdwg.mxu0
      %vm548 = vcmask 64512
      %549 = vst.msk [vmem:[%s179] sm:$0xff] %vm548, %v390
      %550 = vst.msk [vmem:[%s179 + $0x8] sm:$0xff] %vm548, %v395
      %551 = vst.msk [vmem:[%s179 + $0x10] sm:$0xff] %vm548, %v400
      %552 = vst.msk [vmem:[%s179 + $0x18] sm:$0xff] %vm548, %v405
      %553 = vst.msk [vmem:[%s179 + $0x20] sm:$0xff] %vm548, %v410
      %554 = vst.msk [vmem:[%s179 + $0x28] sm:$0xff] %vm548, %v415
      %555 = vst.msk [vmem:[%s179 + $0x30] sm:$0xff] %vm548, %v420
      %556 = vst.msk [vmem:[%s179 + $0x38] sm:$0xff] %vm548, %v425
      %557 = vst.msk [vmem:[%s179 + $0x40] sm:$0xff] %vm548, %v430
      %558 = vst.msk [vmem:[%s179 + $0x48] sm:$0xff] %vm548, %v435
      %559 = vst.msk [vmem:[%s179 + $0x50] sm:$0xff] %vm548, %v440
      %560 = vst.msk [vmem:[%s179 + $0x58] sm:$0xff] %vm548, %v445
      %561 = vst.msk [vmem:[%s179 + $0x60] sm:$0xff] %vm548, %v450
      %562 = vst.msk [vmem:[%s179 + $0x68] sm:$0xff] %vm548, %v455
      %563 = vst.msk [vmem:[%s179 + $0x70] sm:$0xff] %vm548, %v460
      %564 = vst.msk [vmem:[%s179 + $0x78] sm:$0xff] %vm548, %v465
      %565 = vst.msk [vmem:[%s179 + $0x80] sm:$0xff] %vm548, %v470
      %566 = vst.msk [vmem:[%s179 + $0x88] sm:$0xff] %vm548, %v475
      %567 = vst.msk [vmem:[%s179 + $0x90] sm:$0xff] %vm548, %v480
      %568 = vst.msk [vmem:[%s179 + $0x98] sm:$0xff] %vm548, %v485
      %569 = vst.msk [vmem:[%s179 + $0xa0] sm:$0xff] %vm548, %v490
      %570 = vst.msk [vmem:[%s179 + $0xa8] sm:$0xff] %vm548, %v495
      %571 = vst.msk [vmem:[%s179 + $0xb0] sm:$0xff] %vm548, %v500
      %572 = vst.msk [vmem:[%s179 + $0xb8] sm:$0xff] %vm548, %v505
      %573 = vst.msk [vmem:[%s179 + $0xc0] sm:$0xff] %vm548, %v510
      %574 = vst.msk [vmem:[%s179 + $0xc8] sm:$0xff] %vm548, %v515
      %575 = vst.msk [vmem:[%s179 + $0xd0] sm:$0xff] %vm548, %v520
      %576 = vst.msk [vmem:[%s179 + $0xd8] sm:$0xff] %vm548, %v525
      %577 = vst.msk [vmem:[%s179 + $0xe0] sm:$0xff] %vm548, %v530
      %578 = vst.msk [vmem:[%s179 + $0xe8] sm:$0xff] %vm548, %v535
      %579 = vst.msk [vmem:[%s179 + $0xf0] sm:$0xff] %vm548, %v540
      %580 = vst.msk [vmem:[%s179 + $0xf8] sm:$0xff] %vm548, %v545
      %v581 = vsel %vm548, %v390, 0.0
      %v582 = vsel %vm548, %v395, 0.0
      %v583 = vadd.f32 %v581, %v582
      %v584 = vsel %vm548, %v400, 0.0
      %v585 = vadd.f32 %v583, %v584
      %v586 = vsel %vm548, %v405, 0.0
      %v587 = vadd.f32 %v585, %v586
      %v588 = vsel %vm548, %v410, 0.0
      %v589 = vadd.f32 %v587, %v588
      %v590 = vsel %vm548, %v415, 0.0
      %v591 = vadd.f32 %v589, %v590
      %v592 = vsel %vm548, %v420, 0.0
      %v593 = vadd.f32 %v591, %v592
      %v594 = vsel %vm548, %v425, 0.0
      %v595 = vadd.f32 %v593, %v594
      %v596 = vsel %vm548, %v430, 0.0
      %v597 = vadd.f32 %v595, %v596
      %v598 = vsel %vm548, %v435, 0.0
      %v599 = vadd.f32 %v597, %v598
      %v600 = vsel %vm548, %v440, 0.0
      %v601 = vadd.f32 %v599, %v600
      %v602 = vsel %vm548, %v445, 0.0
      %v603 = vadd.f32 %v601, %v602
      %v604 = vsel %vm548, %v450, 0.0
      %v605 = vadd.f32 %v603, %v604
      %v606 = vsel %vm548, %v455, 0.0
      %v607 = vadd.f32 %v605, %v606
      %v608 = vsel %vm548, %v460, 0.0
      %v609 = vadd.f32 %v607, %v608
      %v610 = vsel %vm548, %v465, 0.0
      %v611 = vadd.f32 %v609, %v610
      %v612 = vsel %vm548, %v470, 0.0
      %v613 = vadd.f32 %v611, %v612
      %v614 = vsel %vm548, %v475, 0.0
      %v615 = vadd.f32 %v613, %v614
      %v616 = vsel %vm548, %v480, 0.0
      %v617 = vadd.f32 %v615, %v616
      %v618 = vsel %vm548, %v485, 0.0
      %v619 = vadd.f32 %v617, %v618
      %v620 = vsel %vm548, %v490, 0.0
      %v621 = vadd.f32 %v619, %v620
      %v622 = vsel %vm548, %v495, 0.0
      %v623 = vadd.f32 %v621, %v622
      %v624 = vsel %vm548, %v500, 0.0
      %v625 = vadd.f32 %v623, %v624
      %v626 = vsel %vm548, %v505, 0.0
      %v627 = vadd.f32 %v625, %v626
      %v628 = vsel %vm548, %v510, 0.0
      %v629 = vadd.f32 %v627, %v628
      %v630 = vsel %vm548, %v515, 0.0
      %v631 = vadd.f32 %v629, %v630
      %v632 = vsel %vm548, %v520, 0.0
      %v633 = vadd.f32 %v631, %v632
      %v634 = vsel %vm548, %v525, 0.0
      %v635 = vadd.f32 %v633, %v634
      %v636 = vsel %vm548, %v530, 0.0
      %v637 = vadd.f32 %v635, %v636
      %v638 = vsel %vm548, %v535, 0.0
      %v639 = vadd.f32 %v637, %v638
      %v640 = vsel %vm548, %v540, 0.0
      %v641 = vadd.f32 %v639, %v640
      %v642 = vsel %vm548, %v545, 0.0
      %v643 = vadd.f32 %v641, %v642
      %v644 = vrot.slane %v643, 4
      %v645 = vadd.f32 %v643, %v644
      %v646 = vrot.slane %v645, 2
      %v647 = vadd.f32 %v645, %v646
      %v648 = vrot.slane %v647, 1
      %v649 = vadd.f32 %v647, %v648
      %v650 = vmul.f32 %v390, %v390
      %v651 = vmul.f32 %v395, %v395
      %v652 = vmul.f32 %v400, %v400
      %v653 = vmul.f32 %v405, %v405
      %v654 = vmul.f32 %v410, %v410
      %v655 = vmul.f32 %v415, %v415
      %v656 = vmul.f32 %v420, %v420
      %v657 = vmul.f32 %v425, %v425
      %v658 = vmul.f32 %v430, %v430
      %v659 = vmul.f32 %v435, %v435
      %v660 = vmul.f32 %v440, %v440
      %v661 = vmul.f32 %v445, %v445
      %v662 = vmul.f32 %v450, %v450
      %v663 = vmul.f32 %v455, %v455
      %v664 = vmul.f32 %v460, %v460
      %v665 = vmul.f32 %v465, %v465
      %v666 = vmul.f32 %v470, %v470
      %v667 = vmul.f32 %v475, %v475
      %v668 = vmul.f32 %v480, %v480
      %v669 = vmul.f32 %v485, %v485
      %v670 = vmul.f32 %v490, %v490
      %v671 = vmul.f32 %v495, %v495
      %v672 = vmul.f32 %v500, %v500
      %v673 = vmul.f32 %v505, %v505
      %v674 = vmul.f32 %v510, %v510
      %v675 = vmul.f32 %v515, %v515
      %v676 = vmul.f32 %v520, %v520
      %v677 = vmul.f32 %v525, %v525
      %v678 = vmul.f32 %v530, %v530
      %v679 = vmul.f32 %v535, %v535
      %v680 = vmul.f32 %v540, %v540
      %v681 = vmul.f32 %v545, %v545
      %v682 = vsel %vm548, %v650, 0.0
      %v683 = vsel %vm548, %v651, 0.0
      %v684 = vadd.f32 %v682, %v683
      %v685 = vsel %vm548, %v652, 0.0
      %v686 = vadd.f32 %v684, %v685
      %v687 = vsel %vm548, %v653, 0.0
      %v688 = vadd.f32 %v686, %v687
      %v689 = vsel %vm548, %v654, 0.0
      %v690 = vadd.f32 %v688, %v689
      %v691 = vsel %vm548, %v655, 0.0
      %v692 = vadd.f32 %v690, %v691
      %v693 = vsel %vm548, %v656, 0.0
      %v694 = vadd.f32 %v692, %v693
      %v695 = vsel %vm548, %v657, 0.0
      %v696 = vadd.f32 %v694, %v695
      %v697 = vsel %vm548, %v658, 0.0
      %v698 = vadd.f32 %v696, %v697
      %v699 = vsel %vm548, %v659, 0.0
      %v700 = vadd.f32 %v698, %v699
      %v701 = vsel %vm548, %v660, 0.0
      %v702 = vadd.f32 %v700, %v701
      %v703 = vsel %vm548, %v661, 0.0
      %v704 = vadd.f32 %v702, %v703
      %v705 = vsel %vm548, %v662, 0.0
      %v706 = vadd.f32 %v704, %v705
      %v707 = vsel %vm548, %v663, 0.0
      %v708 = vadd.f32 %v706, %v707
      %v709 = vsel %vm548, %v664, 0.0
      %v710 = vadd.f32 %v708, %v709
      %v711 = vsel %vm548, %v665, 0.0
      %v712 = vadd.f32 %v710, %v711
      %v713 = vsel %vm548, %v666, 0.0
      %v714 = vadd.f32 %v712, %v713
      %v715 = vsel %vm548, %v667, 0.0
      %v716 = vadd.f32 %v714, %v715
      %v717 = vsel %vm548, %v668, 0.0
      %v718 = vadd.f32 %v716, %v717
      %v719 = vsel %vm548, %v669, 0.0
      %v720 = vadd.f32 %v718, %v719
      %v721 = vsel %vm548, %v670, 0.0
      %v722 = vadd.f32 %v720, %v721
      %v723 = vsel %vm548, %v671, 0.0
      %v724 = vadd.f32 %v722, %v723
      %v725 = vsel %vm548, %v672, 0.0
      %v726 = vadd.f32 %v724, %v725
      %v727 = vsel %vm548, %v673, 0.0
      %v728 = vadd.f32 %v726, %v727
      %v729 = vsel %vm548, %v674, 0.0
      %v730 = vadd.f32 %v728, %v729
      %v731 = vsel %vm548, %v675, 0.0
      %v732 = vadd.f32 %v730, %v731
      %v733 = vsel %vm548, %v676, 0.0
      %v734 = vadd.f32 %v732, %v733
      %v735 = vsel %vm548, %v677, 0.0
      %v736 = vadd.f32 %v734, %v735
      %v737 = vsel %vm548, %v678, 0.0
      %v738 = vadd.f32 %v736, %v737
      %v739 = vsel %vm548, %v679, 0.0
      %v740 = vadd.f32 %v738, %v739
      %v741 = vsel %vm548, %v680, 0.0
      %v742 = vadd.f32 %v740, %v741
      %v743 = vsel %vm548, %v681, 0.0
      %v744 = vadd.f32 %v742, %v743
      %v745 = vrot.slane %v744, 4
      %v746 = vadd.f32 %v744, %v745
      %v747 = vrot.slane %v746, 2
      %v748 = vadd.f32 %v746, %v747
      %v749 = vrot.slane %v748, 1
      %v750 = vadd.f32 %v748, %v749
      %vm751 = vcmask 1040384
      %v752 = vsel %vm751, %v649, %v750
      %vm753 = vcmask 58368
      %754 = vst.msk [vmem:[%s184] sm:$0x3] %vm753, %v752
      %s755 = smul.u32 32, %s15
      %p756 = scmp.lt.s32.totalorder %s755, 63
      %s757 = scalar_select %p756, %s755, 63
      %s758 = smul.addr %s757, 8
      %s759 = scalar_lea.vmem %s2, %s758
      %p760 = scmp.lt.s32.totalorder %s15, 1
      %s761 = scalar_select %p760, %s15, 1
      %s762 = smul.addr %s761, 2
      %s763 = scalar_lea.vmem %s3, %s762
      // Predicated region
      $region29: #{unet4_forward.16} parent=27 // pred_check
        %p764 = pneg %p80
      $region30: #{unet4_forward.16} parent=27 // pred_check_branch
        %766 = sbr.rel (%p764) target = $region32
      $region31: #{unet4_forward.16} parent=27 // pred_region
        %s767 = smul.u32 32, %s15
      $region32: #{unet4_forward.16} parent=27 // pred_fallthru
        _
      // Predicated region
      $region33: #{unet4_forward.16} parent=27 // pred_check
        %p768 = pneg %p106
      $region34: #{unet4_forward.16} parent=27 // pred_check_branch
        %770 = sbr.rel (%p768) target = $region36
      $region35: #{unet4_forward.16} parent=27 // pred_region
        _
      $region36: #{unet4_forward.16} parent=27 // pred_fallthru
        _
    $region28: #{unet4_forward.16} parent=5 // pred_fallthru
      _
    %p771 = scmp.le.s32.totalorder 2, %s10
    // Predicated region
    $region37: #{unet4_forward.16} parent=5 // pred_check
      %p772 = pneg %p771
    $region38: #{unet4_forward.16} parent=5 // pred_check_branch
      %774 = sbr.rel (%p772) target = $region40
    $region39: #{unet4_forward.16} parent=5 // pred_region
      %s775 = ssub.s32 %s10, 2
      // Predicated region
      $region41: #{unet4_forward.16} parent=39 // pred_check
        %p776 = pneg %p86
      $region42: #{unet4_forward.16} parent=39 // pred_check_branch
        %778 = sbr.rel (%p776) target = $region44
      $region43: #{unet4_forward.16} parent=39 // pred_region
        %s779 = smul.u32 32, %s16
        %p780 = scmp.lt.s32.totalorder %s779, 63
        %s781 = scalar_select %p780, %s779, 63
        %s782 = smul.addr %s781, 8
        %s783 = scalar_lea.vmem %s2, %s782
      $region44: #{unet4_forward.16} parent=39 // pred_fallthru
        _
      // Predicated region
      $region45: #{unet4_forward.16} parent=39 // pred_check
        %p784 = pneg %p112
      $region46: #{unet4_forward.16} parent=39 // pred_check_branch
        %786 = sbr.rel (%p784) target = $region48
      $region47: #{unet4_forward.16} parent=39 // pred_region
        %p787 = scmp.lt.s32.totalorder %s16, 1
        %s788 = scalar_select %p787, %s16, 1
        %s789 = smul.addr %s788, 2
        %s790 = scalar_lea.vmem %s3, %s789
      $region48: #{unet4_forward.16} parent=39 // pred_fallthru
        _
    $region40: #{unet4_forward.16} parent=5 // pred_fallthru
      _
  $region6: #{unet4_forward.16} parent=0 // loop_footer
    %s14 = sadd.s32 1, %s10
  $region7: #{unet4_forward.16} parent=0 // loop_footer_branch
    %9 = sbr.rel target = $region3
  $region8: #{unet4_forward.16} parent=0 // loop_exit
    _

// kernel: unet4_forward.18
$region0: #{unet4_forward.18}
  #allocation0 [shape = 'u32[]', space=smem, size = 0x4, offset = 0x4, fixed_abs, tag = 'smem constant byte address 0x4 - core index']
  #allocation1 [shape = 'u32[144,128]{1,0:T(1,128)}', space=vmem, size = 0x12000, scoped, tag = 'internal scratch']
  %s0 = inlined_call_operand.vmem [shape: f32[512,72], index: 0, kind: input, shape index: {}]
  %s1 = inlined_call_operand.vmem [shape: f32[72,16], index: 1, kind: input, shape index: {}]
  %s2 = inlined_call_operand.vmem [shape: f32[512,16], index: 2, kind: output, shape index: {0}]
  %s3 = inlined_call_operand.vmem [shape: f32[2,2,16], index: 3, kind: output, shape index: {1}]
  %4 = xla_tuple %s2, %s3
  %s5 = sld [smem:[#allocation0]]
  $region49: #{unet4_forward.18} parent=0
    _
  %s7 = ssub.s32 1, %s5
  %s8 = scalar_select 0, %s7, %s5
  loop: start=0, step=1, limit=4
  $region2: #{unet4_forward.18} parent=0 // loop_pre_header
    _
  $region3: #{unet4_forward.18} parent=0 // loop_header
    %s10 = sphi 0, %s14
    %p11 = scmp.ge.s32.totalorder %s10, 4
    %s20 = sphi 0, %s22
    %s23 = sphi 0, %s20
    %s24 = sphi 0, %s23
    %s40 = sphi 0, %s24
    %s44 = sphi 0, %s44
    %s46 = sphi 0, %s44
    %s47 = sphi 0, %s46
    %s61 = sphi 0, %s47
    %s67 = sphi 0, %s69
    %s70 = sphi 0, %s67
    %s71 = sphi 0, %s70
    %s87 = sphi 0, %s71
    %s93 = sphi 0, %s95
    %s96 = sphi 0, %s93
    %s97 = sphi 0, %s96
    %s113 = sphi 0, %s97
  $region4: #{unet4_forward.18} parent=0 // loop_header_branch
    %13 = sbr.rel (%p11) target = $region8
  $region5: #{unet4_forward.18} parent=0 // loop_body
    %s15 = ssub.s32 %s10, 1
    %s16 = ssub.s32 %s10, 2
    %s17 = sadd.s32 %s10, 1
    %s18 = ssub.s32 %s10, %s17
    %p19 = scmp.eq.s32.totalorder %s18, 0
    %s21 = sadd.s32 %s20, 1
    %s22 = scalar_select %p19, %s20, %s21
    %p25 = pneg %p19
    %p26 = scmp.eq.s32.totalorder %s10, 1
    %p27 = por %p25, %p26
    %p28 = scmp.ne.s32.totalorder %s20, %s23
    %p29 = scmp.eq.s32.totalorder %s10, 0
    %p30 = por %p28, %p29
    %p31 = scmp.ne.s32.totalorder %s20, %s23
    %p32 = scmp.eq.s32.totalorder %s15, 1
    %p33 = por %p31, %p32
    %p34 = scmp.ne.s32.totalorder %s23, %s24
    %p35 = scmp.eq.s32.totalorder %s15, 0
    %p36 = por %p34, %p35
    %p37 = scmp.ne.s32.totalorder %s23, %s24
    %p38 = scmp.eq.s32.totalorder %s16, 1
    %p39 = por %p37, %p38
    %p41 = scmp.ne.s32.totalorder %s24, %s40
    %p42 = scmp.eq.s32.totalorder %s16, 0
    %p43 = por %p41, %p42
    %s45 = sadd.s32 %s44, 1
    %p48 = scmp.eq.s32.totalorder %s10, 1
    %p49 = scmp.ne.s32.totalorder %s44, %s46
    %p50 = scmp.eq.s32.totalorder %s10, 0
    %p51 = por %p49, %p50
    %p52 = scmp.ne.s32.totalorder %s44, %s46
    %p53 = scmp.eq.s32.totalorder %s15, 1
    %p54 = por %p52, %p53
    %p55 = scmp.ne.s32.totalorder %s46, %s47
    %p56 = scmp.eq.s32.totalorder %s15, 0
    %p57 = por %p55, %p56
    %p58 = scmp.ne.s32.totalorder %s46, %s47
    %p59 = scmp.eq.s32.totalorder %s16, 1
    %p60 = por %p58, %p59
    %p62 = scmp.ne.s32.totalorder %s47, %s61
    %p63 = scmp.eq.s32.totalorder %s16, 0
    %p64 = por %p62, %p63
    %s65 = ssub.s32 %s10, %s17
    %p66 = scmp.eq.s32.totalorder %s65, 0
    %s68 = sadd.s32 %s67, 1
    %s69 = scalar_select %p66, %s67, %s68
    %p72 = pneg %p66
    %p73 = scmp.eq.s32.totalorder %s10, 1
    %p74 = por %p72, %p73
    %p75 = scmp.ne.s32.totalorder %s67, %s70
    %p76 = scmp.eq.s32.totalorder %s10, 0
    %p77 = por %p75, %p76
    %p78 = scmp.ne.s32.totalorder %s67, %s70
    %p79 = scmp.eq.s32.totalorder %s15, 1
    %p80 = por %p78, %p79
    %p81 = scmp.ne.s32.totalorder %s70, %s71
    %p82 = scmp.eq.s32.totalorder %s15, 0
    %p83 = por %p81, %p82
    %p84 = scmp.ne.s32.totalorder %s70, %s71
    %p85 = scmp.eq.s32.totalorder %s16, 1
    %p86 = por %p84, %p85
    %p88 = scmp.ne.s32.totalorder %s71, %s87
    %p89 = scmp.eq.s32.totalorder %s16, 0
    %p90 = por %p88, %p89
    %s91 = ssub.s32 %s10, %s17
    %p92 = scmp.eq.s32.totalorder %s91, 0
    %s94 = sadd.s32 %s93, 1
    %s95 = scalar_select %p92, %s93, %s94
    %p98 = pneg %p92
    %p99 = scmp.eq.s32.totalorder %s10, 1
    %p100 = por %p98, %p99
    %p101 = scmp.ne.s32.totalorder %s93, %s96
    %p102 = scmp.eq.s32.totalorder %s10, 0
    %p103 = por %p101, %p102
    %p104 = scmp.ne.s32.totalorder %s93, %s96
    %p105 = scmp.eq.s32.totalorder %s15, 1
    %p106 = por %p104, %p105
    %p107 = scmp.ne.s32.totalorder %s96, %s97
    %p108 = scmp.eq.s32.totalorder %s15, 0
    %p109 = por %p107, %p108
    %p110 = scmp.ne.s32.totalorder %s96, %s97
    %p111 = scmp.eq.s32.totalorder %s16, 1
    %p112 = por %p110, %p111
    %p114 = scmp.ne.s32.totalorder %s97, %s113
    %p115 = scmp.eq.s32.totalorder %s16, 0
    %p116 = por %p114, %p115
    %p117 = scmp.le.s32.totalorder 1, %s10
    %p118 = scmp.lt.s32.totalorder %s10, 3
    %p119 = pnand %p117, %p118
    %p120 = pneg %p119
    // Predicated region
    $region9: #{unet4_forward.18} parent=5 // pred_check
      _
    $region10: #{unet4_forward.18} parent=5 // pred_check_branch
      %122 = sbr.rel (%p119) target = $region12
    $region11: #{unet4_forward.18} parent=5 // pred_region
      %s123 = ssub.s32 %s10, 1
      // Predicated region
      $region13: #{unet4_forward.18} parent=11 // pred_check
        %p124 = pneg %p57
      $region14: #{unet4_forward.18} parent=11 // pred_check_branch
        %126 = sbr.rel (%p124) target = $region16
      $region15: #{unet4_forward.18} parent=11 // pred_region
        _
      $region16: #{unet4_forward.18} parent=11 // pred_fallthru
        _
    $region12: #{unet4_forward.18} parent=5 // pred_fallthru
      _
    %p127 = scmp.lt.s32.totalorder %s10, 2
    // Predicated region
    $region17: #{unet4_forward.18} parent=5 // pred_check
      %p128 = pneg %p127
    $region18: #{unet4_forward.18} parent=5 // pred_check_branch
      %130 = sbr.rel (%p128) target = $region20
    $region19: #{unet4_forward.18} parent=5 // pred_region
      // Predicated region
      $region21: #{unet4_forward.18} parent=19 // pred_check
        %p131 = pneg %p30
      $region22: #{unet4_forward.18} parent=19 // pred_check_branch
        %133 = sbr.rel (%p131) target = $region24
      $region23: #{unet4_forward.18} parent=19 // pred_region
        %s134 = smul.u32 32, %s10
        %p135 = scmp.lt.s32.totalorder %s134, 63
        %s136 = scalar_select %p135, %s134, 63
        %s137 = smul.addr %s136, 8
        %s138 = scalar_lea.vmem %s0, %s137
        %s139 = smul.u32 32, %s10
      $region24: #{unet4_forward.18} parent=19 // pred_fallthru
        _
    $region20: #{unet4_forward.18} parent=5 // pred_fallthru
      _
    %p140 = scmp.le.s32.totalorder 1, %s10
    %p141 = scmp.lt.s32.totalorder %s10, 3
    %p142 = pnand %p140, %p141
    %p143 = pneg %p142
    // Predicated region
    $region25: #{unet4_forward.18} parent=5 // pred_check
      _
    $region26: #{unet4_forward.18} parent=5 // pred_check_branch
      %145 = sbr.rel (%p142) target = $region28
    $region27: #{unet4_forward.18} parent=5 // pred_region
      %s146 = ssub.s32 %s10, 1
      %s147 = smul.u32 32, %s15
      %p148 = scmp.lt.s32.totalorder %s147, 63
      %s149 = scalar_select %p148, %s147, 63
      %s150 = smul.addr %s149, 8
      %s151 = scalar_lea.vmem %s0, %s150
      %p152 = pneg %p36
      %p153 = pneg %p33
      %p154 = pneg %p57
      %p155 = pneg %p54
      %p156 = pneg %p83
      %p157 = pneg %p80
      %s158 = smul.u32 32, %s15
      %p159 = scmp.lt.s32.totalorder %s158, 63
      %s160 = scalar_select %p159, %s158, 63
      %s161 = smul.addr %s160, 8
      %s162 = scalar_lea.vmem %s2, %s161
      %p163 = pneg %p109
      %p164 = pneg %p106
      %p165 = scmp.lt.s32.totalorder %s15, 1
      %s166 = scalar_select %p165, %s15, 1
      %s167 = smul.addr %s166, 2
      %s168 = scalar_lea.vmem %s3, %s167
      %s169 = smul.u32 32, %s15
      %p170 = scmp.lt.s32.totalorder %s169, 63
      %s171 = scalar_select %p170, %s169, 63
      %s172 = smul.addr %s171, 8
      %s173 = scalar_lea.vmem %s0, %s172
      %s174 = smul.u32 32, %s15
      %s175 = smul.u32 32, %s15
      %p176 = scmp.lt.s32.totalorder %s175, 63
      %s177 = scalar_select %p176, %s175, 63
      %s178 = smul.addr %s177, 8
      %s179 = scalar_lea.vmem %s2, %s178
      %s180 = smul.u32 32, %s15
      %p181 = scmp.lt.s32.totalorder %s15, 1
      %s182 = scalar_select %p181, %s15, 1
      %s183 = smul.addr %s182, 2
      %s184 = scalar_lea.vmem %s3, %s183
      %v185 = vld [vmem:[%s173] sm:$0xff]
      %v186 = vld [vmem:[%s173 + $0x8] sm:$0xff]
      %v187 = vld [vmem:[%s173 + $0x10] sm:$0xff]
      %v188 = vld [vmem:[%s173 + $0x18] sm:$0xff]
      %v189 = vld [vmem:[%s173 + $0x20] sm:$0xff]
      %v190 = vld [vmem:[%s173 + $0x28] sm:$0xff]
      %v191 = vld [vmem:[%s173 + $0x30] sm:$0xff]
      %v192 = vld [vmem:[%s173 + $0x38] sm:$0xff]
      %v193 = vld [vmem:[%s173 + $0x40] sm:$0xff]
      %v194 = vld [vmem:[%s173 + $0x48] sm:$0xff]
      %v195 = vld [vmem:[%s173 + $0x50] sm:$0xff]
      %v196 = vld [vmem:[%s173 + $0x58] sm:$0xff]
      %v197 = vld [vmem:[%s173 + $0x60] sm:$0xff]
      %v198 = vld [vmem:[%s173 + $0x68] sm:$0xff]
      %v199 = vld [vmem:[%s173 + $0x70] sm:$0xff]
      %v200 = vld [vmem:[%s173 + $0x78] sm:$0xff]
      %v201 = vld [vmem:[%s173 + $0x80] sm:$0xff]
      %v202 = vld [vmem:[%s173 + $0x88] sm:$0xff]
      %v203 = vld [vmem:[%s173 + $0x90] sm:$0xff]
      %v204 = vld [vmem:[%s173 + $0x98] sm:$0xff]
      %v205 = vld [vmem:[%s173 + $0xa0] sm:$0xff]
      %v206 = vld [vmem:[%s173 + $0xa8] sm:$0xff]
      %v207 = vld [vmem:[%s173 + $0xb0] sm:$0xff]
      %v208 = vld [vmem:[%s173 + $0xb8] sm:$0xff]
      %v209 = vld [vmem:[%s173 + $0xc0] sm:$0xff]
      %v210 = vld [vmem:[%s173 + $0xc8] sm:$0xff]
      %v211 = vld [vmem:[%s173 + $0xd0] sm:$0xff]
      %v212 = vld [vmem:[%s173 + $0xd8] sm:$0xff]
      %v213 = vld [vmem:[%s173 + $0xe0] sm:$0xff]
      %v214 = vld [vmem:[%s173 + $0xe8] sm:$0xff]
      %v215 = vld [vmem:[%s173 + $0xf0] sm:$0xff]
      %v216 = vld [vmem:[%s173 + $0xf8] sm:$0xff]
      %v217 = vld [vmem:[%s1] sm:$0xff]
      %v218 = vld [vmem:[%s1 + $0x8] sm:$0xff]
      %v219 = vld [vmem:[%s1 + $0x10] sm:$0xff]
      %v220 = vld [vmem:[%s1 + $0x18] sm:$0xff]
      %v221 = vld [vmem:[%s1 + $0x20] sm:$0xff]
      %v222 = vld [vmem:[%s1 + $0x28] sm:$0xff]
      %v223 = vld [vmem:[%s1 + $0x30] sm:$0xff]
      %v224 = vld [vmem:[%s1 + $0x38] sm:$0xff]
      %v225 = vld [vmem:[%s1 + $0x40] sm:$0xff]
      %vm226 = vcmask 588800
      %v228 = vsel %vm226, %v185, 0
      %v231 = vsel %vm226, %v186, 0
      %v234 = vsel %vm226, %v187, 0
      %v237 = vsel %vm226, %v188, 0
      %v240 = vsel %vm226, %v189, 0
      %v243 = vsel %vm226, %v190, 0
      %v246 = vsel %vm226, %v191, 0
      %v249 = vsel %vm226, %v192, 0
      %v252 = vsel %vm226, %v193, 0
      %v255 = vsel %vm226, %v194, 0
      %v258 = vsel %vm226, %v195, 0
      %v261 = vsel %vm226, %v196, 0
      %v264 = vsel %vm226, %v197, 0
      %v267 = vsel %vm226, %v198, 0
      %v270 = vsel %vm226, %v199, 0
      %v273 = vsel %vm226, %v200, 0
      %v276 = vsel %vm226, %v201, 0
      %v279 = vsel %vm226, %v202, 0
      %v282 = vsel %vm226, %v203, 0
      %v285 = vsel %vm226, %v204, 0
      %v288 = vsel %vm226, %v205, 0
      %v291 = vsel %vm226, %v206, 0
      %v294 = vsel %vm226, %v207, 0
      %v297 = vsel %vm226, %v208, 0
      %v300 = vsel %vm226, %v209, 0
      %v303 = vsel %vm226, %v210, 0
      %v306 = vsel %vm226, %v211, 0
      %v309 = vsel %vm226, %v212, 0
      %v312 = vsel %vm226, %v213, 0
      %v315 = vsel %vm226, %v214, 0
      %v318 = vsel %vm226, %v215, 0
      %v321 = vsel %vm226, %v216, 0
      %323 = vmatprep.subr.mxu0 0.0
      %324 = vmatpush1.msra.mxu0 %v217
      %325 = vmatprep.subr.mxu0 0.0
      %326 = vmatpush1.msra.mxu0 %v218
      %327 = vmatprep.subr.mxu0 0.0
      %328 = vmatpush1.msra.mxu0 %v219
      %329 = vmatprep.subr.mxu0 0.0
      %330 = vmatpush1.msra.mxu0 %v220
      %331 = vmatprep.subr.mxu0 0.0
      %332 = vmatpush1.msra.mxu0 %v221
      %333 = vmatprep.subr.mxu0 0.0
      %334 = vmatpush1.msra.mxu0 %v222
      %335 = vmatprep.subr.mxu0 0.0
      %336 = vmatpush1.msra.mxu0 %v223
      %337 = vmatprep.subr.mxu0 0.0
      %338 = vmatpush1.msra.mxu0 %v224
      %339 = vmatprep.subr.mxu0 0.0
      %340 = vmatpush1.msra.mxu0 %v225
      %341 = vmatprep.subr.mxu0 0.0
      %342 = vmatpush1.msra.mxu0 0.0
      %343 = vmatprep.subr.mxu0 0.0
      %344 = vmatpush1.msra.mxu0 0.0
      %345 = vmatprep.subr.mxu0 0.0
      %346 = vmatpush1.msra.mxu0 0.0
      %347 = vmatprep.subr.mxu0 0.0
      %348 = vmatpush1.msra.mxu0 0.0
      %349 = vmatprep.subr.mxu0 0.0
      %350 = vmatpush1.msra.mxu0 0.0
      %351 = vmatprep.subr.mxu0 0.0
      %352 = vmatpush1.msra.mxu0 0.0
      %353 = vmatprep.subr.mxu0 0.0
      %354 = vmatpush1.msra.mxu0 0.0
      %355 = vmatprep.subr.mxu0 0.0
      %356 = vmatpush1.msra.mxu0 0.0
      %357 = vmatprep.subr.mxu0 0.0
      %358 = vmatpush1.msra.mxu0 0.0
      %359 = vmatprep.subr.mxu0 0.0
      %360 = vmatpush1.msra.mxu0 0.0
      %361 = vmatprep.subr.mxu0 0.0
      %362 = vmatpush1.msra.mxu0 0.0
      %363 = vmatprep.subr.mxu0 0.0
      %364 = vmatpush1.msra.mxu0 0.0
      %365 = vmatprep.subr.mxu0 0.0
      %366 = vmatpush1.msra.mxu0 0.0
      %367 = vmatprep.subr.mxu0 0.0
      %368 = vmatpush1.msra.mxu0 0.0
      %369 = vmatprep.subr.mxu0 0.0
      %370 = vmatpush1.msra.mxu0 0.0
      %371 = vmatprep.subr.mxu0 0.0
      %372 = vmatpush1.msra.mxu0 0.0
      %373 = vmatprep.subr.mxu0 0.0
      %374 = vmatpush1.msra.mxu0 0.0
      %375 = vmatprep.subr.mxu0 0.0
      %376 = vmatpush1.msra.mxu0 0.0
      %377 = vmatprep.subr.mxu0 0.0
      %378 = vmatpush1.msra.mxu0 0.0
      %379 = vmatprep.subr.mxu0 0.0
      %380 = vmatpush1.msra.mxu0 0.0
      %381 = vmatprep.subr.mxu0 0.0
      %382 = vmatpush1.msra.mxu0 0.0
      %383 = vmatprep.subr.mxu0 0.0
      %384 = vmatpush1.msra.mxu0 0.0
      %385 = vmatprep.subr.mxu0 0.0
      %386 = vmatpush1.msra.mxu0 0.0
      %387 = vmatprep.mubr.f32.mxu0 0.0
      %388 = vmatmul.mubr.f32.gmra.mrb[0].mxu0 %v228
      %v389 = vpop.f32.mrb[0].mxu0
      %v390 = vadd.f32 0.0, %v389
      %v391 = vpop.f32.mrb[0].mxu0
      %392 = vmatprep.mubr.f32.mxu0 0.0
      %393 = vmatmul.mubr.f32.gmra.mrb[0].mxu0 %v231
      %v394 = vpop.f32.mrb[0].mxu0
      %v395 = vadd.f32 0.0, %v394
      %v396 = vpop.f32.mrb[0].mxu0
      %397 = vmatprep.mubr.f32.mxu0 0.0
      %398 = vmatmul.mubr.f32.gmra.mrb[0].mxu0 %v234
      %v399 = vpop.f32.mrb[0].mxu0
      %v400 = vadd.f32 0.0, %v399
      %v401 = vpop.f32.mrb[0].mxu0
      %402 = vmatprep.mubr.f32.mxu0 0.0
      %403 = vmatmul.mubr.f32.gmra.mrb[0].mxu0 %v237
      %v404 = vpop.f32.mrb[0].mxu0
      %v405 = vadd.f32 0.0, %v404
      %v406 = vpop.f32.mrb[0].mxu0
      %407 = vmatprep.mubr.f32.mxu0 0.0
      %408 = vmatmul.mubr.f32.gmra.mrb[0].mxu0 %v240
      %v409 = vpop.f32.mrb[0].mxu0
      %v410 = vadd.f32 0.0, %v409
      %v411 = vpop.f32.mrb[0].mxu0
      %412 = vmatprep.mubr.f32.mxu0 0.0
      %413 = vmatmul.mubr.f32.gmra.mrb[0].mxu0 %v243
      %v414 = vpop.f32.mrb[0].mxu0
      %v415 = vadd.f32 0.0, %v414
      %v416 = vpop.f32.mrb[0].mxu0
      %417 = vmatprep.mubr.f32.mxu0 0.0
      %418 = vmatmul.mubr.f32.gmra.mrb[0].mxu0 %v246
      %v419 = vpop.f32.mrb[0].mxu0
      %v420 = vadd.f32 0.0, %v419
      %v421 = vpop.f32.mrb[0].mxu0
      %422 = vmatprep.mubr.f32.mxu0 0.0
      %423 = vmatmul.mubr.f32.gmra.mrb[0].mxu0 %v249
      %v424 = vpop.f32.mrb[0].mxu0
      %v425 = vadd.f32 0.0, %v424
      %v426 = vpop.f32.mrb[0].mxu0
      %427 = vmatprep.mubr.f32.mxu0 0.0
      %428 = vmatmul.mubr.f32.gmra.mrb[0].mxu0 %v252
      %v429 = vpop.f32.mrb[0].mxu0
      %v430 = vadd.f32 0.0, %v429
      %v431 = vpop.f32.mrb[0].mxu0
      %432 = vmatprep.mubr.f32.mxu0 0.0
      %433 = vmatmul.mubr.f32.gmra.mrb[0].mxu0 %v255
      %v434 = vpop.f32.mrb[0].mxu0
      %v435 = vadd.f32 0.0, %v434
      %v436 = vpop.f32.mrb[0].mxu0
      %437 = vmatprep.mubr.f32.mxu0 0.0
      %438 = vmatmul.mubr.f32.gmra.mrb[0].mxu0 %v258
      %v439 = vpop.f32.mrb[0].mxu0
      %v440 = vadd.f32 0.0, %v439
      %v441 = vpop.f32.mrb[0].mxu0
      %442 = vmatprep.mubr.f32.mxu0 0.0
      %443 = vmatmul.mubr.f32.gmra.mrb[0].mxu0 %v261
      %v444 = vpop.f32.mrb[0].mxu0
      %v445 = vadd.f32 0.0, %v444
      %v446 = vpop.f32.mrb[0].mxu0
      %447 = vmatprep.mubr.f32.mxu0 0.0
      %448 = vmatmul.mubr.f32.gmra.mrb[0].mxu0 %v264
      %v449 = vpop.f32.mrb[0].mxu0
      %v450 = vadd.f32 0.0, %v449
      %v451 = vpop.f32.mrb[0].mxu0
      %452 = vmatprep.mubr.f32.mxu0 0.0
      %453 = vmatmul.mubr.f32.gmra.mrb[0].mxu0 %v267
      %v454 = vpop.f32.mrb[0].mxu0
      %v455 = vadd.f32 0.0, %v454
      %v456 = vpop.f32.mrb[0].mxu0
      %457 = vmatprep.mubr.f32.mxu0 0.0
      %458 = vmatmul.mubr.f32.gmra.mrb[0].mxu0 %v270
      %v459 = vpop.f32.mrb[0].mxu0
      %v460 = vadd.f32 0.0, %v459
      %v461 = vpop.f32.mrb[0].mxu0
      %462 = vmatprep.mubr.f32.mxu0 0.0
      %463 = vmatmul.mubr.f32.gmra.mrb[0].mxu0 %v273
      %v464 = vpop.f32.mrb[0].mxu0
      %v465 = vadd.f32 0.0, %v464
      %v466 = vpop.f32.mrb[0].mxu0
      %467 = vmatprep.mubr.f32.mxu0 0.0
      %468 = vmatmul.mubr.f32.gmra.mrb[0].mxu0 %v276
      %v469 = vpop.f32.mrb[0].mxu0
      %v470 = vadd.f32 0.0, %v469
      %v471 = vpop.f32.mrb[0].mxu0
      %472 = vmatprep.mubr.f32.mxu0 0.0
      %473 = vmatmul.mubr.f32.gmra.mrb[0].mxu0 %v279
      %v474 = vpop.f32.mrb[0].mxu0
      %v475 = vadd.f32 0.0, %v474
      %v476 = vpop.f32.mrb[0].mxu0
      %477 = vmatprep.mubr.f32.mxu0 0.0
      %478 = vmatmul.mubr.f32.gmra.mrb[0].mxu0 %v282
      %v479 = vpop.f32.mrb[0].mxu0
      %v480 = vadd.f32 0.0, %v479
      %v481 = vpop.f32.mrb[0].mxu0
      %482 = vmatprep.mubr.f32.mxu0 0.0
      %483 = vmatmul.mubr.f32.gmra.mrb[0].mxu0 %v285
      %v484 = vpop.f32.mrb[0].mxu0
      %v485 = vadd.f32 0.0, %v484
      %v486 = vpop.f32.mrb[0].mxu0
      %487 = vmatprep.mubr.f32.mxu0 0.0
      %488 = vmatmul.mubr.f32.gmra.mrb[0].mxu0 %v288
      %v489 = vpop.f32.mrb[0].mxu0
      %v490 = vadd.f32 0.0, %v489
      %v491 = vpop.f32.mrb[0].mxu0
      %492 = vmatprep.mubr.f32.mxu0 0.0
      %493 = vmatmul.mubr.f32.gmra.mrb[0].mxu0 %v291
      %v494 = vpop.f32.mrb[0].mxu0
      %v495 = vadd.f32 0.0, %v494
      %v496 = vpop.f32.mrb[0].mxu0
      %497 = vmatprep.mubr.f32.mxu0 0.0
      %498 = vmatmul.mubr.f32.gmra.mrb[0].mxu0 %v294
      %v499 = vpop.f32.mrb[0].mxu0
      %v500 = vadd.f32 0.0, %v499
      %v501 = vpop.f32.mrb[0].mxu0
      %502 = vmatprep.mubr.f32.mxu0 0.0
      %503 = vmatmul.mubr.f32.gmra.mrb[0].mxu0 %v297
      %v504 = vpop.f32.mrb[0].mxu0
      %v505 = vadd.f32 0.0, %v504
      %v506 = vpop.f32.mrb[0].mxu0
      %507 = vmatprep.mubr.f32.mxu0 0.0
      %508 = vmatmul.mubr.f32.gmra.mrb[0].mxu0 %v300
      %v509 = vpop.f32.mrb[0].mxu0
      %v510 = vadd.f32 0.0, %v509
      %v511 = vpop.f32.mrb[0].mxu0
      %512 = vmatprep.mubr.f32.mxu0 0.0
      %513 = vmatmul.mubr.f32.gmra.mrb[0].mxu0 %v303
      %v514 = vpop.f32.mrb[0].mxu0
      %v515 = vadd.f32 0.0, %v514
      %v516 = vpop.f32.mrb[0].mxu0
      %517 = vmatprep.mubr.f32.mxu0 0.0
      %518 = vmatmul.mubr.f32.gmra.mrb[0].mxu0 %v306
      %v519 = vpop.f32.mrb[0].mxu0
      %v520 = vadd.f32 0.0, %v519
      %v521 = vpop.f32.mrb[0].mxu0
      %522 = vmatprep.mubr.f32.mxu0 0.0
      %523 = vmatmul.mubr.f32.gmra.mrb[0].mxu0 %v309
      %v524 = vpop.f32.mrb[0].mxu0
      %v525 = vadd.f32 0.0, %v524
      %v526 = vpop.f32.mrb[0].mxu0
      %527 = vmatprep.mubr.f32.mxu0 0.0
      %528 = vmatmul.mubr.f32.gmra.mrb[0].mxu0 %v312
      %v529 = vpop.f32.mrb[0].mxu0
      %v530 = vadd.f32 0.0, %v529
      %v531 = vpop.f32.mrb[0].mxu0
      %532 = vmatprep.mubr.f32.mxu0 0.0
      %533 = vmatmul.mubr.f32.gmra.mrb[0].mxu0 %v315
      %v534 = vpop.f32.mrb[0].mxu0
      %v535 = vadd.f32 0.0, %v534
      %v536 = vpop.f32.mrb[0].mxu0
      %537 = vmatprep.mubr.f32.mxu0 0.0
      %538 = vmatmul.mubr.f32.gmra.mrb[0].mxu0 %v318
      %v539 = vpop.f32.mrb[0].mxu0
      %v540 = vadd.f32 0.0, %v539
      %v541 = vpop.f32.mrb[0].mxu0
      %542 = vmatprep.mubr.f32.mxu0 0.0
      %543 = vmatmul.mubr.f32.gmra.mrb[0].mxu0 %v321
      %v544 = vpop.f32.mrb[0].mxu0
      %v545 = vadd.f32 0.0, %v544
      %v546 = vpop.f32.mrb[0].mxu0
      %547 = vdwg.mxu0
      %vm548 = vcmask 130048
      %549 = vst.msk [vmem:[%s179] sm:$0xff] %vm548, %v390
      %550 = vst.msk [vmem:[%s179 + $0x8] sm:$0xff] %vm548, %v395
      %551 = vst.msk [vmem:[%s179 + $0x10] sm:$0xff] %vm548, %v400
      %552 = vst.msk [vmem:[%s179 + $0x18] sm:$0xff] %vm548, %v405
      %553 = vst.msk [vmem:[%s179 + $0x20] sm:$0xff] %vm548, %v410
      %554 = vst.msk [vmem:[%s179 + $0x28] sm:$0xff] %vm548, %v415
      %555 = vst.msk [vmem:[%s179 + $0x30] sm:$0xff] %vm548, %v420
      %556 = vst.msk [vmem:[%s179 + $0x38] sm:$0xff] %vm548, %v425
      %557 = vst.msk [vmem:[%s179 + $0x40] sm:$0xff] %vm548, %v430
      %558 = vst.msk [vmem:[%s179 + $0x48] sm:$0xff] %vm548, %v435
      %559 = vst.msk [vmem:[%s179 + $0x50] sm:$0xff] %vm548, %v440
      %560 = vst.msk [vmem:[%s179 + $0x58] sm:$0xff] %vm548, %v445
      %561 = vst.msk [vmem:[%s179 + $0x60] sm:$0xff] %vm548, %v450
      %562 = vst.msk [vmem:[%s179 + $0x68] sm:$0xff] %vm548, %v455
      %563 = vst.msk [vmem:[%s179 + $0x70] sm:$0xff] %vm548, %v460
      %564 = vst.msk [vmem:[%s179 + $0x78] sm:$0xff] %vm548, %v465
      %565 = vst.msk [vmem:[%s179 + $0x80] sm:$0xff] %vm548, %v470
      %566 = vst.msk [vmem:[%s179 + $0x88] sm:$0xff] %vm548, %v475
      %567 = vst.msk [vmem:[%s179 + $0x90] sm:$0xff] %vm548, %v480
      %568 = vst.msk [vmem:[%s179 + $0x98] sm:$0xff] %vm548, %v485
      %569 = vst.msk [vmem:[%s179 + $0xa0] sm:$0xff] %vm548, %v490
      %570 = vst.msk [vmem:[%s179 + $0xa8] sm:$0xff] %vm548, %v495
      %571 = vst.msk [vmem:[%s179 + $0xb0] sm:$0xff] %vm548, %v500
      %572 = vst.msk [vmem:[%s179 + $0xb8] sm:$0xff] %vm548, %v505
      %573 = vst.msk [vmem:[%s179 + $0xc0] sm:$0xff] %vm548, %v510
      %574 = vst.msk [vmem:[%s179 + $0xc8] sm:$0xff] %vm548, %v515
      %575 = vst.msk [vmem:[%s179 + $0xd0] sm:$0xff] %vm548, %v520
      %576 = vst.msk [vmem:[%s179 + $0xd8] sm:$0xff] %vm548, %v525
      %577 = vst.msk [vmem:[%s179 + $0xe0] sm:$0xff] %vm548, %v530
      %578 = vst.msk [vmem:[%s179 + $0xe8] sm:$0xff] %vm548, %v535
      %579 = vst.msk [vmem:[%s179 + $0xf0] sm:$0xff] %vm548, %v540
      %580 = vst.msk [vmem:[%s179 + $0xf8] sm:$0xff] %vm548, %v545
      %v581 = vsel %vm548, %v390, 0.0
      %v582 = vsel %vm548, %v395, 0.0
      %v583 = vadd.f32 %v581, %v582
      %v584 = vsel %vm548, %v400, 0.0
      %v585 = vadd.f32 %v583, %v584
      %v586 = vsel %vm548, %v405, 0.0
      %v587 = vadd.f32 %v585, %v586
      %v588 = vsel %vm548, %v410, 0.0
      %v589 = vadd.f32 %v587, %v588
      %v590 = vsel %vm548, %v415, 0.0
      %v591 = vadd.f32 %v589, %v590
      %v592 = vsel %vm548, %v420, 0.0
      %v593 = vadd.f32 %v591, %v592
      %v594 = vsel %vm548, %v425, 0.0
      %v595 = vadd.f32 %v593, %v594
      %v596 = vsel %vm548, %v430, 0.0
      %v597 = vadd.f32 %v595, %v596
      %v598 = vsel %vm548, %v435, 0.0
      %v599 = vadd.f32 %v597, %v598
      %v600 = vsel %vm548, %v440, 0.0
      %v601 = vadd.f32 %v599, %v600
      %v602 = vsel %vm548, %v445, 0.0
      %v603 = vadd.f32 %v601, %v602
      %v604 = vsel %vm548, %v450, 0.0
      %v605 = vadd.f32 %v603, %v604
      %v606 = vsel %vm548, %v455, 0.0
      %v607 = vadd.f32 %v605, %v606
      %v608 = vsel %vm548, %v460, 0.0
      %v609 = vadd.f32 %v607, %v608
      %v610 = vsel %vm548, %v465, 0.0
      %v611 = vadd.f32 %v609, %v610
      %v612 = vsel %vm548, %v470, 0.0
      %v613 = vadd.f32 %v611, %v612
      %v614 = vsel %vm548, %v475, 0.0
      %v615 = vadd.f32 %v613, %v614
      %v616 = vsel %vm548, %v480, 0.0
      %v617 = vadd.f32 %v615, %v616
      %v618 = vsel %vm548, %v485, 0.0
      %v619 = vadd.f32 %v617, %v618
      %v620 = vsel %vm548, %v490, 0.0
      %v621 = vadd.f32 %v619, %v620
      %v622 = vsel %vm548, %v495, 0.0
      %v623 = vadd.f32 %v621, %v622
      %v624 = vsel %vm548, %v500, 0.0
      %v625 = vadd.f32 %v623, %v624
      %v626 = vsel %vm548, %v505, 0.0
      %v627 = vadd.f32 %v625, %v626
      %v628 = vsel %vm548, %v510, 0.0
      %v629 = vadd.f32 %v627, %v628
      %v630 = vsel %vm548, %v515, 0.0
      %v631 = vadd.f32 %v629, %v630
      %v632 = vsel %vm548, %v520, 0.0
      %v633 = vadd.f32 %v631, %v632
      %v634 = vsel %vm548, %v525, 0.0
      %v635 = vadd.f32 %v633, %v634
      %v636 = vsel %vm548, %v530, 0.0
      %v637 = vadd.f32 %v635, %v636
      %v638 = vsel %vm548, %v535, 0.0
      %v639 = vadd.f32 %v637, %v638
      %v640 = vsel %vm548, %v540, 0.0
      %v641 = vadd.f32 %v639, %v640
      %v642 = vsel %vm548, %v545, 0.0
      %v643 = vadd.f32 %v641, %v642
      %v644 = vrot.slane %v643, 4
      %v645 = vadd.f32 %v643, %v644
      %v646 = vrot.slane %v645, 2
      %v647 = vadd.f32 %v645, %v646
      %v648 = vrot.slane %v647, 1
      %v649 = vadd.f32 %v647, %v648
      %v650 = vmul.f32 %v390, %v390
      %v651 = vmul.f32 %v395, %v395
      %v652 = vmul.f32 %v400, %v400
      %v653 = vmul.f32 %v405, %v405
      %v654 = vmul.f32 %v410, %v410
      %v655 = vmul.f32 %v415, %v415
      %v656 = vmul.f32 %v420, %v420
      %v657 = vmul.f32 %v425, %v425
      %v658 = vmul.f32 %v430, %v430
      %v659 = vmul.f32 %v435, %v435
      %v660 = vmul.f32 %v440, %v440
      %v661 = vmul.f32 %v445, %v445
      %v662 = vmul.f32 %v450, %v450
      %v663 = vmul.f32 %v455, %v455
      %v664 = vmul.f32 %v460, %v460
      %v665 = vmul.f32 %v465, %v465
      %v666 = vmul.f32 %v470, %v470
      %v667 = vmul.f32 %v475, %v475
      %v668 = vmul.f32 %v480, %v480
      %v669 = vmul.f32 %v485, %v485
      %v670 = vmul.f32 %v490, %v490
      %v671 = vmul.f32 %v495, %v495
      %v672 = vmul.f32 %v500, %v500
      %v673 = vmul.f32 %v505, %v505
      %v674 = vmul.f32 %v510, %v510
      %v675 = vmul.f32 %v515, %v515
      %v676 = vmul.f32 %v520, %v520
      %v677 = vmul.f32 %v525, %v525
      %v678 = vmul.f32 %v530, %v530
      %v679 = vmul.f32 %v535, %v535
      %v680 = vmul.f32 %v540, %v540
      %v681 = vmul.f32 %v545, %v545
      %v682 = vsel %vm548, %v650, 0.0
      %v683 = vsel %vm548, %v651, 0.0
      %v684 = vadd.f32 %v682, %v683
      %v685 = vsel %vm548, %v652, 0.0
      %v686 = vadd.f32 %v684, %v685
      %v687 = vsel %vm548, %v653, 0.0
      %v688 = vadd.f32 %v686, %v687
      %v689 = vsel %vm548, %v654, 0.0
      %v690 = vadd.f32 %v688, %v689
      %v691 = vsel %vm548, %v655, 0.0
      %v692 = vadd.f32 %v690, %v691
      %v693 = vsel %vm548, %v656, 0.0
      %v694 = vadd.f32 %v692, %v693
      %v695 = vsel %vm548, %v657, 0.0
      %v696 = vadd.f32 %v694, %v695
      %v697 = vsel %vm548, %v658, 0.0
      %v698 = vadd.f32 %v696, %v697
      %v699 = vsel %vm548, %v659, 0.0
      %v700 = vadd.f32 %v698, %v699
      %v701 = vsel %vm548, %v660, 0.0
      %v702 = vadd.f32 %v700, %v701
      %v703 = vsel %vm548, %v661, 0.0
      %v704 = vadd.f32 %v702, %v703
      %v705 = vsel %vm548, %v662, 0.0
      %v706 = vadd.f32 %v704, %v705
      %v707 = vsel %vm548, %v663, 0.0
      %v708 = vadd.f32 %v706, %v707
      %v709 = vsel %vm548, %v664, 0.0
      %v710 = vadd.f32 %v708, %v709
      %v711 = vsel %vm548, %v665, 0.0
      %v712 = vadd.f32 %v710, %v711
      %v713 = vsel %vm548, %v666, 0.0
      %v714 = vadd.f32 %v712, %v713
      %v715 = vsel %vm548, %v667, 0.0
      %v716 = vadd.f32 %v714, %v715
      %v717 = vsel %vm548, %v668, 0.0
      %v718 = vadd.f32 %v716, %v717
      %v719 = vsel %vm548, %v669, 0.0
      %v720 = vadd.f32 %v718, %v719
      %v721 = vsel %vm548, %v670, 0.0
      %v722 = vadd.f32 %v720, %v721
      %v723 = vsel %vm548, %v671, 0.0
      %v724 = vadd.f32 %v722, %v723
      %v725 = vsel %vm548, %v672, 0.0
      %v726 = vadd.f32 %v724, %v725
      %v727 = vsel %vm548, %v673, 0.0
      %v728 = vadd.f32 %v726, %v727
      %v729 = vsel %vm548, %v674, 0.0
      %v730 = vadd.f32 %v728, %v729
      %v731 = vsel %vm548, %v675, 0.0
      %v732 = vadd.f32 %v730, %v731
      %v733 = vsel %vm548, %v676, 0.0
      %v734 = vadd.f32 %v732, %v733
      %v735 = vsel %vm548, %v677, 0.0
      %v736 = vadd.f32 %v734, %v735
      %v737 = vsel %vm548, %v678, 0.0
      %v738 = vadd.f32 %v736, %v737
      %v739 = vsel %vm548, %v679, 0.0
      %v740 = vadd.f32 %v738, %v739
      %v741 = vsel %vm548, %v680, 0.0
      %v742 = vadd.f32 %v740, %v741
      %v743 = vsel %vm548, %v681, 0.0
      %v744 = vadd.f32 %v742, %v743
      %v745 = vrot.slane %v744, 4
      %v746 = vadd.f32 %v744, %v745
      %v747 = vrot.slane %v746, 2
      %v748 = vadd.f32 %v746, %v747
      %v749 = vrot.slane %v748, 1
      %v750 = vadd.f32 %v748, %v749
      %vm751 = vcmask 1040384
      %v752 = vsel %vm751, %v649, %v750
      %vm753 = vcmask 123904
      %754 = vst.msk [vmem:[%s184] sm:$0x3] %vm753, %v752
      %s755 = smul.u32 32, %s15
      %p756 = scmp.lt.s32.totalorder %s755, 63
      %s757 = scalar_select %p756, %s755, 63
      %s758 = smul.addr %s757, 8
      %s759 = scalar_lea.vmem %s2, %s758
      %p760 = scmp.lt.s32.totalorder %s15, 1
      %s761 = scalar_select %p760, %s15, 1
      %s762 = smul.addr %s761, 2
      %s763 = scalar_lea.vmem %s3, %s762
      // Predicated region
      $region29: #{unet4_forward.18} parent=27 // pred_check
        %p764 = pneg %p80
      $region30: #{unet4_forward.18} parent=27 // pred_check_branch
        %766 = sbr.rel (%p764) target = $region32
      $region31: #{unet4_forward.18} parent=27 // pred_region
        %s767 = smul.u32 32, %s15
      $region32: #{unet4_forward.18} parent=27 // pred_fallthru
        _
      // Predicated region
      $region33: #{unet4_forward.18} parent=27 // pred_check
        %p768 = pneg %p106
      $region34: #{unet4_forward.18} parent=27 // pred_check_branch
        %770 = sbr.rel (%p768) target = $region36
      $region35: #{unet4_forward.18} parent=27 // pred_region
        _
      $region36: #{unet4_forward.18} parent=27 // pred_fallthru
        _
    $region28: #{unet4_forward.18} parent=5 // pred_fallthru
      _
    %p771 = scmp.le.s32.totalorder 2, %s10
    // Predicated region
    $region37: #{unet4_forward.18} parent=5 // pred_check
      %p772 = pneg %p771
    $region38: #{unet4_forward.18} parent=5 // pred_check_branch
      %774 = sbr.rel (%p772) target = $region40
    $region39: #{unet4_forward.18} parent=5 // pred_region
      %s775 = ssub.s32 %s10, 2
      // Predicated region
      $region41: #{unet4_forward.18} parent=39 // pred_check
        %p776 = pneg %p86
      $region42: #{unet4_forward.18} parent=39 // pred_check_branch
        %778 = sbr.rel (%p776) target = $region44
      $region43: #{unet4_forward.18} parent=39 // pred_region
        %s779 = smul.u32 32, %s16
        %p780 = scmp.lt.s32.totalorder %s779, 63
        %s781 = scalar_select %p780, %s779, 63
        %s782 = smul.addr %s781, 8
        %s783 = scalar_lea.vmem %s2, %s782
      $region44: #{unet4_forward.18} parent=39 // pred_fallthru
        _
      // Predicated region
      $region45: #{unet4_forward.18} parent=39 // pred_check
        %p784 = pneg %p112
      $region46: #{unet4_forward.18} parent=39 // pred_check_branch
        %786 = sbr.rel (%p784) target = $region48
      $region47: #{unet4_forward.18} parent=39 // pred_region
        %p787 = scmp.lt.s32.totalorder %s16, 1
        %s788 = scalar_select %p787, %s16, 1
        %s789 = smul.addr %s788, 2
        %s790 = scalar_lea.vmem %s3, %s789
      $region48: #{unet4_forward.18} parent=39 // pred_fallthru
        _
    $region40: #{unet4_forward.18} parent=5 // pred_fallthru
      _
  $region6: #{unet4_forward.18} parent=0 // loop_footer
    %s14 = sadd.s32 1, %s10
  $region7: #{unet4_forward.18} parent=0 // loop_footer_branch
    %9 = sbr.rel target = $region3
  $region8: #{unet4_forward.18} parent=0 // loop_exit
    _

// kernel: unet4_forward.19
$region0: #{unet4_forward.19}
  #allocation0 [shape = 'u32[]', space=smem, size = 0x4, offset = 0x4, fixed_abs, tag = 'smem constant byte address 0x4 - core index']
  #allocation1 [shape = 'u32[144,128]{1,0:T(1,128)}', space=vmem, size = 0x12000, scoped, tag = 'internal scratch']
  %s0 = inlined_call_operand.vmem [shape: f32[512,16], index: 0, kind: input, shape index: {}, may-alias: {0,3}]
  %s1 = inlined_call_operand.vmem [shape: f32[1,16], index: 1, kind: input, shape index: {}]
  %s2 = inlined_call_operand.vmem [shape: f32[1,16], index: 2, kind: input, shape index: {}]
  %s3 = inlined_call_operand.vmem [shape: f32[512,16], index: 3, kind: output, shape index: {}, may-alias: {0,3}]
  %s4 = sld [smem:[#allocation0]]
  $region45: #{unet4_forward.19} parent=0
    _
  %s6 = ssub.s32 1, %s4
  %s7 = scalar_select 0, %s6, %s4
  loop: start=0, step=1, limit=4
  $region2: #{unet4_forward.19} parent=0 // loop_pre_header
    _
  $region3: #{unet4_forward.19} parent=0 // loop_header
    %s9 = sphi 0, %s13
    %p10 = scmp.ge.s32.totalorder %s9, 4
    %s19 = sphi 0, %s21
    %s22 = sphi 0, %s19
    %s23 = sphi 0, %s22
    %s39 = sphi 0, %s23
    %s43 = sphi 0, %s43
    %s45 = sphi 0, %s43
    %s46 = sphi 0, %s45
    %s60 = sphi 0, %s46
    %s64 = sphi 0, %s64
    %s66 = sphi 0, %s64
    %s67 = sphi 0, %s66
    %s81 = sphi 0, %s67
    %s87 = sphi 0, %s89
    %s90 = sphi 0, %s87
    %s91 = sphi 0, %s90
    %s107 = sphi 0, %s91
  $region4: #{unet4_forward.19} parent=0 // loop_header_branch
    %12 = sbr.rel (%p10) target = $region8
  $region5: #{unet4_forward.19} parent=0 // loop_body
    %s14 = ssub.s32 %s9, 1
    %s15 = ssub.s32 %s9, 2
    %s16 = sadd.s32 %s9, 1
    %s17 = ssub.s32 %s9, %s16
    %p18 = scmp.eq.s32.totalorder %s17, 0
    %s20 = sadd.s32 %s19, 1
    %s21 = scalar_select %p18, %s19, %s20
    %p24 = pneg %p18
    %p25 = scmp.eq.s32.totalorder %s9, 1
    %p26 = por %p24, %p25
    %p27 = scmp.ne.s32.totalorder %s19, %s22
    %p28 = scmp.eq.s32.totalorder %s9, 0
    %p29 = por %p27, %p28
    %p30 = scmp.ne.s32.totalorder %s19, %s22
    %p31 = scmp.eq.s32.totalorder %s14, 1
    %p32 = por %p30, %p31
    %p33 = scmp.ne.s32.totalorder %s22, %s23
    %p34 = scmp.eq.s32.totalorder %s14, 0
    %p35 = por %p33, %p34
    %p36 = scmp.ne.s32.totalorder %s22, %s23
    %p37 = scmp.eq.s32.totalorder %s15, 1
    %p38 = por %p36, %p37
    %p40 = scmp.ne.s32.totalorder %s23, %s39
    %p41 = scmp.eq.s32.totalorder %s15, 0
    %p42 = por %p40, %p41
    %s44 = sadd.s32 %s43, 1
    %p47 = scmp.eq.s32.totalorder %s9, 1
    %p48 = scmp.ne.s32.totalorder %s43, %s45
    %p49 = scmp.eq.s32.totalorder %s9, 0
    %p50 = por %p48, %p49
    %p51 = scmp.ne.s32.totalorder %s43, %s45
    %p52 = scmp.eq.s32.totalorder %s14, 1
    %p53 = por %p51, %p52
    %p54 = scmp.ne.s32.totalorder %s45, %s46
    %p55 = scmp.eq.s32.totalorder %s14, 0
    %p56 = por %p54, %p55
    %p57 = scmp.ne.s32.totalorder %s45, %s46
    %p58 = scmp.eq.s32.totalorder %s15, 1
    %p59 = por %p57, %p58
    %p61 = scmp.ne.s32.totalorder %s46, %s60
    %p62 = scmp.eq.s32.totalorder %s15, 0
    %p63 = por %p61, %p62
    %s65 = sadd.s32 %s64, 1
    %p68 = scmp.eq.s32.totalorder %s9, 1
    %p69 = scmp.ne.s32.totalorder %s64, %s66
    %p70 = scmp.eq.s32.totalorder %s9, 0
    %p71 = por %p69, %p70
    %p72 = scmp.ne.s32.totalorder %s64, %s66
    %p73 = scmp.eq.s32.totalorder %s14, 1
    %p74 = por %p72, %p73
    %p75 = scmp.ne.s32.totalorder %s66, %s67
    %p76 = scmp.eq.s32.totalorder %s14, 0
    %p77 = por %p75, %p76
    %p78 = scmp.ne.s32.totalorder %s66, %s67
    %p79 = scmp.eq.s32.totalorder %s15, 1
    %p80 = por %p78, %p79
    %p82 = scmp.ne.s32.totalorder %s67, %s81
    %p83 = scmp.eq.s32.totalorder %s15, 0
    %p84 = por %p82, %p83
    %s85 = ssub.s32 %s9, %s16
    %p86 = scmp.eq.s32.totalorder %s85, 0
    %s88 = sadd.s32 %s87, 1
    %s89 = scalar_select %p86, %s87, %s88
    %p92 = pneg %p86
    %p93 = scmp.eq.s32.totalorder %s9, 1
    %p94 = por %p92, %p93
    %p95 = scmp.ne.s32.totalorder %s87, %s90
    %p96 = scmp.eq.s32.totalorder %s9, 0
    %p97 = por %p95, %p96
    %p98 = scmp.ne.s32.totalorder %s87, %s90
    %p99 = scmp.eq.s32.totalorder %s14, 1
    %p100 = por %p98, %p99
    %p101 = scmp.ne.s32.totalorder %s90, %s91
    %p102 = scmp.eq.s32.totalorder %s14, 0
    %p103 = por %p101, %p102
    %p104 = scmp.ne.s32.totalorder %s90, %s91
    %p105 = scmp.eq.s32.totalorder %s15, 1
    %p106 = por %p104, %p105
    %p108 = scmp.ne.s32.totalorder %s91, %s107
    %p109 = scmp.eq.s32.totalorder %s15, 0
    %p110 = por %p108, %p109
    %p111 = scmp.le.s32.totalorder 1, %s9
    %p112 = scmp.lt.s32.totalorder %s9, 3
    %p113 = pnand %p111, %p112
    %p114 = pneg %p113
    // Predicated region
    $region9: #{unet4_forward.19} parent=5 // pred_check
      _
    $region10: #{unet4_forward.19} parent=5 // pred_check_branch
      %116 = sbr.rel (%p113) target = $region12
    $region11: #{unet4_forward.19} parent=5 // pred_region
      %s117 = ssub.s32 %s9, 1
      // Predicated region
      $region13: #{unet4_forward.19} parent=11 // pred_check
        %p118 = pneg %p56
      $region14: #{unet4_forward.19} parent=11 // pred_check_branch
        %120 = sbr.rel (%p118) target = $region16
      $region15: #{unet4_forward.19} parent=11 // pred_region
        _
      $region16: #{unet4_forward.19} parent=11 // pred_fallthru
        _
      // Predicated region
      $region17: #{unet4_forward.19} parent=11 // pred_check
        %p121 = pneg %p77
      $region18: #{unet4_forward.19} parent=11 // pred_check_branch
        %123 = sbr.rel (%p121) target = $region20
      $region19: #{unet4_forward.19} parent=11 // pred_region
        _
      $region20: #{unet4_forward.19} parent=11 // pred_fallthru
        _
    $region12: #{unet4_forward.19} parent=5 // pred_fallthru
      _
    %p124 = scmp.lt.s32.totalorder %s9, 2
    // Predicated region
    $region21: #{unet4_forward.19} parent=5 // pred_check
      %p125 = pneg %p124
    $region22: #{unet4_forward.19} parent=5 // pred_check_branch
      %127 = sbr.rel (%p125) target = $region24
    $region23: #{unet4_forward.19} parent=5 // pred_region
      // Predicated region
      $region25: #{unet4_forward.19} parent=23 // pred_check
        %p128 = pneg %p29
      $region26: #{unet4_forward.19} parent=23 // pred_check_branch
        %130 = sbr.rel (%p128) target = $region28
      $region27: #{unet4_forward.19} parent=23 // pred_region
        %s131 = smul.u32 32, %s9
        %p132 = scmp.lt.s32.totalorder %s131, 63
        %s133 = scalar_select %p132, %s131, 63
        %s134 = smul.addr %s133, 8
        %s135 = scalar_lea.vmem %s0, %s134
        %s136 = smul.u32 32, %s9
      $region28: #{unet4_forward.19} parent=23 // pred_fallthru
        _
    $region24: #{unet4_forward.19} parent=5 // pred_fallthru
      _
    %p137 = scmp.le.s32.totalorder 1, %s9
    %p138 = scmp.lt.s32.totalorder %s9, 3
    %p139 = pnand %p137, %p138
    %p140 = pneg %p139
    // Predicated region
    $region29: #{unet4_forward.19} parent=5 // pred_check
      _
    $region30: #{unet4_forward.19} parent=5 // pred_check_branch
      %142 = sbr.rel (%p139) target = $region32
    $region31: #{unet4_forward.19} parent=5 // pred_region
      %s143 = ssub.s32 %s9, 1
      %s144 = smul.u32 32, %s14
      %p145 = scmp.lt.s32.totalorder %s144, 63
      %s146 = scalar_select %p145, %s144, 63
      %s147 = smul.addr %s146, 8
      %s148 = scalar_lea.vmem %s0, %s147
      %p149 = pneg %p35
      %p150 = pneg %p32
      %p151 = pneg %p56
      %p152 = pneg %p53
      %p153 = pneg %p77
      %p154 = pneg %p74
      %p155 = pneg %p103
      %p156 = pneg %p100
      %s157 = smul.u32 32, %s14
      %p158 = scmp.lt.s32.totalorder %s157, 63
      %s159 = scalar_select %p158, %s157, 63
      %s160 = smul.addr %s159, 8
      %s161 = scalar_lea.vmem %s3, %s160
      %s162 = smul.u32 32, %s14
      %p163 = scmp.lt.s32.totalorder %s162, 63
      %s164 = scalar_select %p163, %s162, 63
      %s165 = smul.addr %s164, 8
      %s166 = scalar_lea.vmem %s0, %s165
      %s167 = smul.u32 32, %s14
      %s168 = smul.u32 32, %s14
      %p169 = scmp.lt.s32.totalorder %s168, 63
      %s170 = scalar_select %p169, %s168, 63
      %s171 = smul.addr %s170, 8
      %s172 = scalar_lea.vmem %s3, %s171
      %s173 = smul.u32 32, %s14
      %v174 = vld [vmem:[%s166] sm:$0xff]
      %v175 = vld [vmem:[%s166 + $0x8] sm:$0xff]
      %v176 = vld [vmem:[%s166 + $0x10] sm:$0xff]
      %v177 = vld [vmem:[%s166 + $0x18] sm:$0xff]
      %v178 = vld [vmem:[%s166 + $0x20] sm:$0xff]
      %v179 = vld [vmem:[%s166 + $0x28] sm:$0xff]
      %v180 = vld [vmem:[%s166 + $0x30] sm:$0xff]
      %v181 = vld [vmem:[%s166 + $0x38] sm:$0xff]
      %v182 = vld [vmem:[%s166 + $0x40] sm:$0xff]
      %v183 = vld [vmem:[%s166 + $0x48] sm:$0xff]
      %v184 = vld [vmem:[%s166 + $0x50] sm:$0xff]
      %v185 = vld [vmem:[%s166 + $0x58] sm:$0xff]
      %v186 = vld [vmem:[%s166 + $0x60] sm:$0xff]
      %v187 = vld [vmem:[%s166 + $0x68] sm:$0xff]
      %v188 = vld [vmem:[%s166 + $0x70] sm:$0xff]
      %v189 = vld [vmem:[%s166 + $0x78] sm:$0xff]
      %v190 = vld [vmem:[%s166 + $0x80] sm:$0xff]
      %v191 = vld [vmem:[%s166 + $0x88] sm:$0xff]
      %v192 = vld [vmem:[%s166 + $0x90] sm:$0xff]
      %v193 = vld [vmem:[%s166 + $0x98] sm:$0xff]
      %v194 = vld [vmem:[%s166 + $0xa0] sm:$0xff]
      %v195 = vld [vmem:[%s166 + $0xa8] sm:$0xff]
      %v196 = vld [vmem:[%s166 + $0xb0] sm:$0xff]
      %v197 = vld [vmem:[%s166 + $0xb8] sm:$0xff]
      %v198 = vld [vmem:[%s166 + $0xc0] sm:$0xff]
      %v199 = vld [vmem:[%s166 + $0xc8] sm:$0xff]
      %v200 = vld [vmem:[%s166 + $0xd0] sm:$0xff]
      %v201 = vld [vmem:[%s166 + $0xd8] sm:$0xff]
      %v202 = vld [vmem:[%s166 + $0xe0] sm:$0xff]
      %v203 = vld [vmem:[%s166 + $0xe8] sm:$0xff]
      %v204 = vld [vmem:[%s166 + $0xf0] sm:$0xff]
      %v205 = vld [vmem:[%s166 + $0xf8] sm:$0xff]
      %v206 = vld [vmem:[%s1] sm:$0x1]
      %v208 = vlaneseq
      %v209 = vshrl.u32 %v208, 7
      %v210 = vsub.s32 0, %v209
      %v211 = vrot.slane %v206, %v210
      %v213 = vmul.f32 %v174, %v211
      %v214 = vmul.f32 %v175, %v211
      %v215 = vmul.f32 %v176, %v211
      %v216 = vmul.f32 %v177, %v211
      %v217 = vmul.f32 %v178, %v211
      %v218 = vmul.f32 %v179, %v211
      %v219 = vmul.f32 %v180, %v211
      %v220 = vmul.f32 %v181, %v211
      %v221 = vmul.f32 %v182, %v211
      %v222 = vmul.f32 %v183, %v211
      %v223 = vmul.f32 %v184, %v211
      %v224 = vmul.f32 %v185, %v211
      %v225 = vmul.f32 %v186, %v211
      %v226 = vmul.f32 %v187, %v211
      %v227 = vmul.f32 %v188, %v211
      %v228 = vmul.f32 %v189, %v211
      %v229 = vmul.f32 %v190, %v211
      %v230 = vmul.f32 %v191, %v211
      %v231 = vmul.f32 %v192, %v211
      %v232 = vmul.f32 %v193, %v211
      %v233 = vmul.f32 %v194, %v211
      %v234 = vmul.f32 %v195, %v211
      %v235 = vmul.f32 %v196, %v211
      %v236 = vmul.f32 %v197, %v211
      %v237 = vmul.f32 %v198, %v211
      %v238 = vmul.f32 %v199, %v211
      %v239 = vmul.f32 %v200, %v211
      %v240 = vmul.f32 %v201, %v211
      %v241 = vmul.f32 %v202, %v211
      %v242 = vmul.f32 %v203, %v211
      %v243 = vmul.f32 %v204, %v211
      %v244 = vmul.f32 %v205, %v211
      %v245 = vld [vmem:[%s2] sm:$0x1]
      %v247 = vlaneseq
      %v248 = vshrl.u32 %v247, 7
      %v249 = vsub.s32 0, %v248
      %v250 = vrot.slane %v245, %v249
      %v252 = vadd.f32 %v213, %v250
      %v253 = vadd.f32 %v214, %v250
      %v254 = vadd.f32 %v215, %v250
      %v255 = vadd.f32 %v216, %v250
      %v256 = vadd.f32 %v217, %v250
      %v257 = vadd.f32 %v218, %v250
      %v258 = vadd.f32 %v219, %v250
      %v259 = vadd.f32 %v220, %v250
      %v260 = vadd.f32 %v221, %v250
      %v261 = vadd.f32 %v222, %v250
      %v262 = vadd.f32 %v223, %v250
      %v263 = vadd.f32 %v224, %v250
      %v264 = vadd.f32 %v225, %v250
      %v265 = vadd.f32 %v226, %v250
      %v266 = vadd.f32 %v227, %v250
      %v267 = vadd.f32 %v228, %v250
      %v268 = vadd.f32 %v229, %v250
      %v269 = vadd.f32 %v230, %v250
      %v270 = vadd.f32 %v231, %v250
      %v271 = vadd.f32 %v232, %v250
      %v272 = vadd.f32 %v233, %v250
      %v273 = vadd.f32 %v234, %v250
      %v274 = vadd.f32 %v235, %v250
      %v275 = vadd.f32 %v236, %v250
      %v276 = vadd.f32 %v237, %v250
      %v277 = vadd.f32 %v238, %v250
      %v278 = vadd.f32 %v239, %v250
      %v279 = vadd.f32 %v240, %v250
      %v280 = vadd.f32 %v241, %v250
      %v281 = vadd.f32 %v242, %v250
      %v282 = vadd.f32 %v243, %v250
      %v283 = vadd.f32 %v244, %v250
      %v284 = vmax.f32 %v252, 0.0
      %v285 = vmax.f32 %v253, 0.0
      %v286 = vmax.f32 %v254, 0.0
      %v287 = vmax.f32 %v255, 0.0
      %v288 = vmax.f32 %v256, 0.0
      %v289 = vmax.f32 %v257, 0.0
      %v290 = vmax.f32 %v258, 0.0
      %v291 = vmax.f32 %v259, 0.0
      %v292 = vmax.f32 %v260, 0.0
      %v293 = vmax.f32 %v261, 0.0
      %v294 = vmax.f32 %v262, 0.0
      %v295 = vmax.f32 %v263, 0.0
      %v296 = vmax.f32 %v264, 0.0
      %v297 = vmax.f32 %v265, 0.0
      %v298 = vmax.f32 %v266, 0.0
      %v299 = vmax.f32 %v267, 0.0
      %v300 = vmax.f32 %v268, 0.0
      %v301 = vmax.f32 %v269, 0.0
      %v302 = vmax.f32 %v270, 0.0
      %v303 = vmax.f32 %v271, 0.0
      %v304 = vmax.f32 %v272, 0.0
      %v305 = vmax.f32 %v273, 0.0
      %v306 = vmax.f32 %v274, 0.0
      %v307 = vmax.f32 %v275, 0.0
      %v308 = vmax.f32 %v276, 0.0
      %v309 = vmax.f32 %v277, 0.0
      %v310 = vmax.f32 %v278, 0.0
      %v311 = vmax.f32 %v279, 0.0
      %v312 = vmax.f32 %v280, 0.0
      %v313 = vmax.f32 %v281, 0.0
      %v314 = vmax.f32 %v282, 0.0
      %v315 = vmax.f32 %v283, 0.0
      %vm316 = vcmask 130048
      %317 = vst.msk [vmem:[%s172] sm:$0xff] %vm316, %v284
      %318 = vst.msk [vmem:[%s172 + $0x8] sm:$0xff] %vm316, %v285
      %319 = vst.msk [vmem:[%s172 + $0x10] sm:$0xff] %vm316, %v286
      %320 = vst.msk [vmem:[%s172 + $0x18] sm:$0xff] %vm316, %v287
      %321 = vst.msk [vmem:[%s172 + $0x20] sm:$0xff] %vm316, %v288
      %322 = vst.msk [vmem:[%s172 + $0x28] sm:$0xff] %vm316, %v289
      %323 = vst.msk [vmem:[%s172 + $0x30] sm:$0xff] %vm316, %v290
      %324 = vst.msk [vmem:[%s172 + $0x38] sm:$0xff] %vm316, %v291
      %325 = vst.msk [vmem:[%s172 + $0x40] sm:$0xff] %vm316, %v292
      %326 = vst.msk [vmem:[%s172 + $0x48] sm:$0xff] %vm316, %v293
      %327 = vst.msk [vmem:[%s172 + $0x50] sm:$0xff] %vm316, %v294
      %328 = vst.msk [vmem:[%s172 + $0x58] sm:$0xff] %vm316, %v295
      %329 = vst.msk [vmem:[%s172 + $0x60] sm:$0xff] %vm316, %v296
      %330 = vst.msk [vmem:[%s172 + $0x68] sm:$0xff] %vm316, %v297
      %331 = vst.msk [vmem:[%s172 + $0x70] sm:$0xff] %vm316, %v298
      %332 = vst.msk [vmem:[%s172 + $0x78] sm:$0xff] %vm316, %v299
      %333 = vst.msk [vmem:[%s172 + $0x80] sm:$0xff] %vm316, %v300
      %334 = vst.msk [vmem:[%s172 + $0x88] sm:$0xff] %vm316, %v301
      %335 = vst.msk [vmem:[%s172 + $0x90] sm:$0xff] %vm316, %v302
      %336 = vst.msk [vmem:[%s172 + $0x98] sm:$0xff] %vm316, %v303
      %337 = vst.msk [vmem:[%s172 + $0xa0] sm:$0xff] %vm316, %v304
      %338 = vst.msk [vmem:[%s172 + $0xa8] sm:$0xff] %vm316, %v305
      %339 = vst.msk [vmem:[%s172 + $0xb0] sm:$0xff] %vm316, %v306
      %340 = vst.msk [vmem:[%s172 + $0xb8] sm:$0xff] %vm316, %v307
      %341 = vst.msk [vmem:[%s172 + $0xc0] sm:$0xff] %vm316, %v308
      %342 = vst.msk [vmem:[%s172 + $0xc8] sm:$0xff] %vm316, %v309
      %343 = vst.msk [vmem:[%s172 + $0xd0] sm:$0xff] %vm316, %v310
      %344 = vst.msk [vmem:[%s172 + $0xd8] sm:$0xff] %vm316, %v311
      %345 = vst.msk [vmem:[%s172 + $0xe0] sm:$0xff] %vm316, %v312
      %346 = vst.msk [vmem:[%s172 + $0xe8] sm:$0xff] %vm316, %v313
      %347 = vst.msk [vmem:[%s172 + $0xf0] sm:$0xff] %vm316, %v314
      %348 = vst.msk [vmem:[%s172 + $0xf8] sm:$0xff] %vm316, %v315
      %s349 = smul.u32 32, %s14
      %p350 = scmp.lt.s32.totalorder %s349, 63
      %s351 = scalar_select %p350, %s349, 63
      %s352 = smul.addr %s351, 8
      %s353 = scalar_lea.vmem %s3, %s352
      // Predicated region
      $region33: #{unet4_forward.19} parent=31 // pred_check
        %p354 = pneg %p100
      $region34: #{unet4_forward.19} parent=31 // pred_check_branch
        %356 = sbr.rel (%p354) target = $region36
      $region35: #{unet4_forward.19} parent=31 // pred_region
        %s357 = smul.u32 32, %s14
      $region36: #{unet4_forward.19} parent=31 // pred_fallthru
        _
    $region32: #{unet4_forward.19} parent=5 // pred_fallthru
      _
    %p358 = scmp.le.s32.totalorder 2, %s9
    // Predicated region
    $region37: #{unet4_forward.19} parent=5 // pred_check
      %p359 = pneg %p358
    $region38: #{unet4_forward.19} parent=5 // pred_check_branch
      %361 = sbr.rel (%p359) target = $region40
    $region39: #{unet4_forward.19} parent=5 // pred_region
      %s362 = ssub.s32 %s9, 2
      // Predicated region
      $region41: #{unet4_forward.19} parent=39 // pred_check
        %p363 = pneg %p106
      $region42: #{unet4_forward.19} parent=39 // pred_check_branch
        %365 = sbr.rel (%p363) target = $region44
      $region43: #{unet4_forward.19} parent=39 // pred_region
        %s366 = smul.u32 32, %s15
        %p367 = scmp.lt.s32.totalorder %s366, 63
        %s368 = scalar_select %p367, %s366, 63
        %s369 = smul.addr %s368, 8
        %s370 = scalar_lea.vmem %s3, %s369
      $region44: #{unet4_forward.19} parent=39 // pred_fallthru
        _
    $region40: #{unet4_forward.19} parent=5 // pred_fallthru
      _
  $region6: #{unet4_forward.19} parent=0 // loop_footer
    %s13 = sadd.s32 1, %s9
  $region7: #{unet4_forward.19} parent=0 // loop_footer_branch
    %8 = sbr.rel target = $region3
  $region8: #{unet4_forward.19} parent=0 // loop_exit
    _

// kernel: unet4_forward.21
$region0: #{unet4_forward.21}
  #allocation0 [shape = 'u32[]', space=smem, size = 0x4, offset = 0x4, fixed_abs, tag = 'smem constant byte address 0x4 - core index']
  #allocation1 [shape = 'u32[144,128]{1,0:T(1,128)}', space=vmem, size = 0x12000, scoped, tag = 'internal scratch']
  %s0 = inlined_call_operand.vmem [shape: f32[128,16], index: 0, kind: input, shape index: {}, may-alias: {0,3}]
  %s1 = inlined_call_operand.vmem [shape: f32[1,16], index: 1, kind: input, shape index: {}]
  %s2 = inlined_call_operand.vmem [shape: f32[1,16], index: 2, kind: input, shape index: {}]
  %s3 = inlined_call_operand.vmem [shape: f32[128,16], index: 3, kind: output, shape index: {}, may-alias: {0,3}]
  %s4 = sld [smem:[#allocation0]]
  $region22: #{unet4_forward.21} parent=0
    _
  %s6 = ssub.s32 1, %s4
  %s7 = scalar_select 0, %s6, %s4
  // Predicated region
  $region2: #{unet4_forward.21} parent=0 // pred_check
    _
  $region3: #{unet4_forward.21} parent=0 // pred_check_branch
    %9 = sbr.rel (0) target = $region5
  $region4: #{unet4_forward.21} parent=0 // pred_region
    _
  $region5: #{unet4_forward.21} parent=0 // pred_fallthru
    _
  // Predicated region
  $region6: #{unet4_forward.21} parent=0 // pred_check
    _
  $region7: #{unet4_forward.21} parent=0 // pred_check_branch
    %11 = sbr.rel (0) target = $region9
  $region8: #{unet4_forward.21} parent=0 // pred_region
    _
  $region9: #{unet4_forward.21} parent=0 // pred_fallthru
    _
  // Predicated region
  $region10: #{unet4_forward.21} parent=0 // pred_check
    _
  $region11: #{unet4_forward.21} parent=0 // pred_check_branch
    %13 = sbr.rel (0) target = $region13
  $region12: #{unet4_forward.21} parent=0 // pred_region
    _
  $region13: #{unet4_forward.21} parent=0 // pred_fallthru
    _
  %v14 = vld [vmem:[%s0] sm:$0xff]
  %v15 = vld [vmem:[%s0 + $0x8] sm:$0xff]
  %v16 = vld [vmem:[%s0 + $0x10] sm:$0xff]
  %v17 = vld [vmem:[%s0 + $0x18] sm:$0xff]
  %v18 = vld [vmem:[%s0 + $0x20] sm:$0xff]
  %v19 = vld [vmem:[%s0 + $0x28] sm:$0xff]
  %v20 = vld [vmem:[%s0 + $0x30] sm:$0xff]
  %v21 = vld [vmem:[%s0 + $0x38] sm:$0xff]
  %v22 = vld [vmem:[%s0 + $0x40] sm:$0xff]
  %v23 = vld [vmem:[%s0 + $0x48] sm:$0xff]
  %v24 = vld [vmem:[%s0 + $0x50] sm:$0xff]
  %v25 = vld [vmem:[%s0 + $0x58] sm:$0xff]
  %v26 = vld [vmem:[%s0 + $0x60] sm:$0xff]
  %v27 = vld [vmem:[%s0 + $0x68] sm:$0xff]
  %v28 = vld [vmem:[%s0 + $0x70] sm:$0xff]
  %v29 = vld [vmem:[%s0 + $0x78] sm:$0xff]
  %v30 = vld [vmem:[%s1] sm:$0x1]
  %v32 = vlaneseq
  %v33 = vshrl.u32 %v32, 7
  %v34 = vsub.s32 0, %v33
  %v35 = vrot.slane %v30, %v34
  %v37 = vmul.f32 %v14, %v35
  %v38 = vmul.f32 %v15, %v35
  %v39 = vmul.f32 %v16, %v35
  %v40 = vmul.f32 %v17, %v35
  %v41 = vmul.f32 %v18, %v35
  %v42 = vmul.f32 %v19, %v35
  %v43 = vmul.f32 %v20, %v35
  %v44 = vmul.f32 %v21, %v35
  %v45 = vmul.f32 %v22, %v35
  %v46 = vmul.f32 %v23, %v35
  %v47 = vmul.f32 %v24, %v35
  %v48 = vmul.f32 %v25, %v35
  %v49 = vmul.f32 %v26, %v35
  %v50 = vmul.f32 %v27, %v35
  %v51 = vmul.f32 %v28, %v35
  %v52 = vmul.f32 %v29, %v35
  %v53 = vld [vmem:[%s2] sm:$0x1]
  %v55 = vlaneseq
  %v56 = vshrl.u32 %v55, 7
  %v57 = vsub.s32 0, %v56
  %v58 = vrot.slane %v53, %v57
  %v60 = vadd.f32 %v37, %v58
  %v61 = vadd.f32 %v38, %v58
  %v62 = vadd.f32 %v39, %v58
  %v63 = vadd.f32 %v40, %v58
  %v64 = vadd.f32 %v41, %v58
  %v65 = vadd.f32 %v42, %v58
  %v66 = vadd.f32 %v43, %v58
  %v67 = vadd.f32 %v44, %v58
  %v68 = vadd.f32 %v45, %v58
  %v69 = vadd.f32 %v46, %v58
  %v70 = vadd.f32 %v47, %v58
  %v71 = vadd.f32 %v48, %v58
  %v72 = vadd.f32 %v49, %v58
  %v73 = vadd.f32 %v50, %v58
  %v74 = vadd.f32 %v51, %v58
  %v75 = vadd.f32 %v52, %v58
  %v76 = vmax.f32 %v60, 0.0
  %v77 = vmax.f32 %v61, 0.0
  %v78 = vmax.f32 %v62, 0.0
  %v79 = vmax.f32 %v63, 0.0
  %v80 = vmax.f32 %v64, 0.0
  %v81 = vmax.f32 %v65, 0.0
  %v82 = vmax.f32 %v66, 0.0
  %v83 = vmax.f32 %v67, 0.0
  %v84 = vmax.f32 %v68, 0.0
  %v85 = vmax.f32 %v69, 0.0
  %v86 = vmax.f32 %v70, 0.0
  %v87 = vmax.f32 %v71, 0.0
  %v88 = vmax.f32 %v72, 0.0
  %v89 = vmax.f32 %v73, 0.0
  %v90 = vmax.f32 %v74, 0.0
  %v91 = vmax.f32 %v75, 0.0
  %vm92 = vcmask 130048
  %93 = vst.msk [vmem:[%s3] sm:$0xff] %vm92, %v76
  %94 = vst.msk [vmem:[%s3 + $0x8] sm:$0xff] %vm92, %v77
  %95 = vst.msk [vmem:[%s3 + $0x10] sm:$0xff] %vm92, %v78
  %96 = vst.msk [vmem:[%s3 + $0x18] sm:$0xff] %vm92, %v79
  %97 = vst.msk [vmem:[%s3 + $0x20] sm:$0xff] %vm92, %v80
  %98 = vst.msk [vmem:[%s3 + $0x28] sm:$0xff] %vm92, %v81
  %99 = vst.msk [vmem:[%s3 + $0x30] sm:$0xff] %vm92, %v82
  %100 = vst.msk [vmem:[%s3 + $0x38] sm:$0xff] %vm92, %v83
  %101 = vst.msk [vmem:[%s3 + $0x40] sm:$0xff] %vm92, %v84
  %102 = vst.msk [vmem:[%s3 + $0x48] sm:$0xff] %vm92, %v85
  %103 = vst.msk [vmem:[%s3 + $0x50] sm:$0xff] %vm92, %v86
  %104 = vst.msk [vmem:[%s3 + $0x58] sm:$0xff] %vm92, %v87
  %105 = vst.msk [vmem:[%s3 + $0x60] sm:$0xff] %vm92, %v88
  %106 = vst.msk [vmem:[%s3 + $0x68] sm:$0xff] %vm92, %v89
  %107 = vst.msk [vmem:[%s3 + $0x70] sm:$0xff] %vm92, %v90
  %108 = vst.msk [vmem:[%s3 + $0x78] sm:$0xff] %vm92, %v91
  // Predicated region
  $region14: #{unet4_forward.21} parent=0 // pred_check
    _
  $region15: #{unet4_forward.21} parent=0 // pred_check_branch
    %110 = sbr.rel (0) target = $region17
  $region16: #{unet4_forward.21} parent=0 // pred_region
    _
  $region17: #{unet4_forward.21} parent=0 // pred_fallthru
    _
  // Predicated region
  $region18: #{unet4_forward.21} parent=0 // pred_check
    _
  $region19: #{unet4_forward.21} parent=0 // pred_check_branch
    %112 = sbr.rel (0) target = $region21
  $region20: #{unet4_forward.21} parent=0 // pred_region
    _
  $region21: #{unet4_forward.21} parent=0 // pred_fallthru
    _

// kernel: unet4_forward.20
$region0: #{unet4_forward.20}
  #allocation0 [shape = 'u32[]', space=smem, size = 0x4, offset = 0x4, fixed_abs, tag = 'smem constant byte address 0x4 - core index']
  #allocation1 [shape = 'u32[144,128]{1,0:T(1,128)}', space=vmem, size = 0x12000, scoped, tag = 'internal scratch']
  %s0 = inlined_call_operand.vmem [shape: f32[128,144], index: 0, kind: input, shape index: {}]
  %s1 = inlined_call_operand.vmem [shape: f32[144,16], index: 1, kind: input, shape index: {}]
  %s2 = inlined_call_operand.vmem [shape: f32[128,16], index: 2, kind: output, shape index: {0}]
  %s3 = inlined_call_operand.vmem [shape: f32[1,2,16], index: 3, kind: output, shape index: {1}]
  %4 = xla_tuple %s2, %s3
  %s5 = sld [smem:[#allocation0]]
  $region26: #{unet4_forward.20} parent=0
    _
  %s7 = ssub.s32 1, %s5
  %s8 = scalar_select 0, %s7, %s5
  // Predicated region
  $region2: #{unet4_forward.20} parent=0 // pred_check
    _
  $region3: #{unet4_forward.20} parent=0 // pred_check_branch
    %10 = sbr.rel (0) target = $region5
  $region4: #{unet4_forward.20} parent=0 // pred_region
    _
  $region5: #{unet4_forward.20} parent=0 // pred_fallthru
    _
  // Predicated region
  $region6: #{unet4_forward.20} parent=0 // pred_check
    _
  $region7: #{unet4_forward.20} parent=0 // pred_check_branch
    %12 = sbr.rel (0) target = $region9
  $region8: #{unet4_forward.20} parent=0 // pred_region
    _
  $region9: #{unet4_forward.20} parent=0 // pred_fallthru
    _
  %v13 = vld [vmem:[%s0] sm:$0xff]
  %v14 = vld [vmem:[%s0 + $0x8] sm:$0xff]
  %v15 = vld [vmem:[%s0 + $0x10] sm:$0xff]
  %v16 = vld [vmem:[%s0 + $0x18] sm:$0xff]
  %v17 = vld [vmem:[%s0 + $0x20] sm:$0xff]
  %v18 = vld [vmem:[%s0 + $0x28] sm:$0xff]
  %v19 = vld [vmem:[%s0 + $0x30] sm:$0xff]
  %v20 = vld [vmem:[%s0 + $0x38] sm:$0xff]
  %v21 = vld [vmem:[%s0 + $0x40] sm:$0xff]
  %v22 = vld [vmem:[%s0 + $0x48] sm:$0xff]
  %v23 = vld [vmem:[%s0 + $0x50] sm:$0xff]
  %v24 = vld [vmem:[%s0 + $0x58] sm:$0xff]
  %v25 = vld [vmem:[%s0 + $0x60] sm:$0xff]
  %v26 = vld [vmem:[%s0 + $0x68] sm:$0xff]
  %v27 = vld [vmem:[%s0 + $0x70] sm:$0xff]
  %v28 = vld [vmem:[%s0 + $0x78] sm:$0xff]
  %v29 = vld [vmem:[%s0 + $0x80] sm:$0xff]
  %v30 = vld [vmem:[%s0 + $0x88] sm:$0xff]
  %v31 = vld [vmem:[%s0 + $0x90] sm:$0xff]
  %v32 = vld [vmem:[%s0 + $0x98] sm:$0xff]
  %v33 = vld [vmem:[%s0 + $0xa0] sm:$0xff]
  %v34 = vld [vmem:[%s0 + $0xa8] sm:$0xff]
  %v35 = vld [vmem:[%s0 + $0xb0] sm:$0xff]
  %v36 = vld [vmem:[%s0 + $0xb8] sm:$0xff]
  %v37 = vld [vmem:[%s0 + $0xc0] sm:$0xff]
  %v38 = vld [vmem:[%s0 + $0xc8] sm:$0xff]
  %v39 = vld [vmem:[%s0 + $0xd0] sm:$0xff]
  %v40 = vld [vmem:[%s0 + $0xd8] sm:$0xff]
  %v41 = vld [vmem:[%s0 + $0xe0] sm:$0xff]
  %v42 = vld [vmem:[%s0 + $0xe8] sm:$0xff]
  %v43 = vld [vmem:[%s0 + $0xf0] sm:$0xff]
  %v44 = vld [vmem:[%s0 + $0xf8] sm:$0xff]
  %v45 = vld [vmem:[%s1] sm:$0xff]
  %v46 = vld [vmem:[%s1 + $0x8] sm:$0xff]
  %v47 = vld [vmem:[%s1 + $0x10] sm:$0xff]
  %v48 = vld [vmem:[%s1 + $0x18] sm:$0xff]
  %v49 = vld [vmem:[%s1 + $0x20] sm:$0xff]
  %v50 = vld [vmem:[%s1 + $0x28] sm:$0xff]
  %v51 = vld [vmem:[%s1 + $0x30] sm:$0xff]
  %v52 = vld [vmem:[%s1 + $0x38] sm:$0xff]
  %v53 = vld [vmem:[%s1 + $0x40] sm:$0xff]
  %v54 = vld [vmem:[%s1 + $0x48] sm:$0xff]
  %v55 = vld [vmem:[%s1 + $0x50] sm:$0xff]
  %v56 = vld [vmem:[%s1 + $0x58] sm:$0xff]
  %v57 = vld [vmem:[%s1 + $0x60] sm:$0xff]
  %v58 = vld [vmem:[%s1 + $0x68] sm:$0xff]
  %v59 = vld [vmem:[%s1 + $0x70] sm:$0xff]
  %v60 = vld [vmem:[%s1 + $0x78] sm:$0xff]
  %v61 = vld [vmem:[%s1 + $0x80] sm:$0xff]
  %v62 = vld [vmem:[%s1 + $0x88] sm:$0xff]
  %vm63 = vcmask 130048
  %v65 = vsel %vm63, %v14, 0
  %v68 = vsel %vm63, %v16, 0
  %v71 = vsel %vm63, %v18, 0
  %v74 = vsel %vm63, %v20, 0
  %v77 = vsel %vm63, %v22, 0
  %v80 = vsel %vm63, %v24, 0
  %v83 = vsel %vm63, %v26, 0
  %v86 = vsel %vm63, %v28, 0
  %v89 = vsel %vm63, %v30, 0
  %v92 = vsel %vm63, %v32, 0
  %v95 = vsel %vm63, %v34, 0
  %v98 = vsel %vm63, %v36, 0
  %v101 = vsel %vm63, %v38, 0
  %v104 = vsel %vm63, %v40, 0
  %v107 = vsel %vm63, %v42, 0
  %v110 = vsel %vm63, %v44, 0
  %112 = vmatprep.subr.mxu0 0.0
  %113 = vmatpush1.msra.mxu0 %v45
  %114 = vmatprep.subr.mxu0 0.0
  %115 = vmatpush1.msra.mxu0 %v46
  %116 = vmatprep.subr.mxu0 0.0
  %117 = vmatpush1.msra.mxu0 %v47
  %118 = vmatprep.subr.mxu0 0.0
  %119 = vmatpush1.msra.mxu0 %v48
  %120 = vmatprep.subr.mxu0 0.0
  %121 = vmatpush1.msra.mxu0 %v49
  %122 = vmatprep.subr.mxu0 0.0
  %123 = vmatpush1.msra.mxu0 %v50
  %124 = vmatprep.subr.mxu0 0.0
  %125 = vmatpush1.msra.mxu0 %v51
  %126 = vmatprep.subr.mxu0 0.0
  %127 = vmatpush1.msra.mxu0 %v52
  %128 = vmatprep.subr.mxu0 0.0
  %129 = vmatpush1.msra.mxu0 %v53
  %130 = vmatprep.subr.mxu0 0.0
  %131 = vmatpush1.msra.mxu0 %v54
  %132 = vmatprep.subr.mxu0 0.0
  %133 = vmatpush1.msra.mxu0 %v55
  %134 = vmatprep.subr.mxu0 0.0
  %135 = vmatpush1.msra.mxu0 %v56
  %136 = vmatprep.subr.mxu0 0.0
  %137 = vmatpush1.msra.mxu0 %v57
  %138 = vmatprep.subr.mxu0 0.0
  %139 = vmatpush1.msra.mxu0 %v58
  %140 = vmatprep.subr.mxu0 0.0
  %141 = vmatpush1.msra.mxu0 %v59
  %142 = vmatprep.subr.mxu0 0.0
  %143 = vmatpush1.msra.mxu0 %v60
  %144 = vmatprep.subr.mxu0 0.0
  %145 = vmatpush1.msra.mxu0 %v61
  %146 = vmatprep.subr.mxu0 0.0
  %147 = vmatpush1.msra.mxu0 %v62
  %148 = vmatprep.subr.mxu0 0.0
  %149 = vmatpush1.msra.mxu0 0.0
  %150 = vmatprep.subr.mxu0 0.0
  %151 = vmatpush1.msra.mxu0 0.0
  %152 = vmatprep.subr.mxu0 0.0
  %153 = vmatpush1.msra.mxu0 0.0
  %154 = vmatprep.subr.mxu0 0.0
  %155 = vmatpush1.msra.mxu0 0.0
  %156 = vmatprep.subr.mxu0 0.0
  %157 = vmatpush1.msra.mxu0 0.0
  %158 = vmatprep.subr.mxu0 0.0
  %159 = vmatpush1.msra.mxu0 0.0
  %160 = vmatprep.subr.mxu0 0.0
  %161 = vmatpush1.msra.mxu0 0.0
  %162 = vmatprep.subr.mxu0 0.0
  %163 = vmatpush1.msra.mxu0 0.0
  %164 = vmatprep.subr.mxu0 0.0
  %165 = vmatpush1.msra.mxu0 0.0
  %166 = vmatprep.subr.mxu0 0.0
  %167 = vmatpush1.msra.mxu0 0.0
  %168 = vmatprep.subr.mxu0 0.0
  %169 = vmatpush1.msra.mxu0 0.0
  %170 = vmatprep.subr.mxu0 0.0
  %171 = vmatpush1.msra.mxu0 0.0
  %172 = vmatprep.subr.mxu0 0.0
  %173 = vmatpush1.msra.mxu0 0.0
  %174 = vmatprep.subr.mxu0 0.0
  %175 = vmatpush1.msra.mxu0 0.0
  %176 = vmatprep.mubr.f32.mxu0 %v65
  %177 = vmatmul.mubr.f32.gmra.mrb[0].mxu0 %v13
  %v178 = vpop.f32.mrb[0].mxu0
  %v179 = vadd.f32 0.0, %v178
  %v180 = vpop.f32.mrb[0].mxu0
  %181 = vmatprep.mubr.f32.mxu0 %v68
  %182 = vmatmul.mubr.f32.gmra.mrb[0].mxu0 %v15
  %v183 = vpop.f32.mrb[0].mxu0
  %v184 = vadd.f32 0.0, %v183
  %v185 = vpop.f32.mrb[0].mxu0
  %186 = vmatprep.mubr.f32.mxu0 %v71
  %187 = vmatmul.mubr.f32.gmra.mrb[0].mxu0 %v17
  %v188 = vpop.f32.mrb[0].mxu0
  %v189 = vadd.f32 0.0, %v188
  %v190 = vpop.f32.mrb[0].mxu0
  %191 = vmatprep.mubr.f32.mxu0 %v74
  %192 = vmatmul.mubr.f32.gmra.mrb[0].mxu0 %v19
  %v193 = vpop.f32.mrb[0].mxu0
  %v194 = vadd.f32 0.0, %v193
  %v195 = vpop.f32.mrb[0].mxu0
  %196 = vmatprep.mubr.f32.mxu0 %v77
  %197 = vmatmul.mubr.f32.gmra.mrb[0].mxu0 %v21
  %v198 = vpop.f32.mrb[0].mxu0
  %v199 = vadd.f32 0.0, %v198
  %v200 = vpop.f32.mrb[0].mxu0
  %201 = vmatprep.mubr.f32.mxu0 %v80
  %202 = vmatmul.mubr.f32.gmra.mrb[0].mxu0 %v23
  %v203 = vpop.f32.mrb[0].mxu0
  %v204 = vadd.f32 0.0, %v203
  %v205 = vpop.f32.mrb[0].mxu0
  %206 = vmatprep.mubr.f32.mxu0 %v83
  %207 = vmatmul.mubr.f32.gmra.mrb[0].mxu0 %v25
  %v208 = vpop.f32.mrb[0].mxu0
  %v209 = vadd.f32 0.0, %v208
  %v210 = vpop.f32.mrb[0].mxu0
  %211 = vmatprep.mubr.f32.mxu0 %v86
  %212 = vmatmul.mubr.f32.gmra.mrb[0].mxu0 %v27
  %v213 = vpop.f32.mrb[0].mxu0
  %v214 = vadd.f32 0.0, %v213
  %v215 = vpop.f32.mrb[0].mxu0
  %216 = vmatprep.mubr.f32.mxu0 %v89
  %217 = vmatmul.mubr.f32.gmra.mrb[0].mxu0 %v29
  %v218 = vpop.f32.mrb[0].mxu0
  %v219 = vadd.f32 0.0, %v218
  %v220 = vpop.f32.mrb[0].mxu0
  %221 = vmatprep.mubr.f32.mxu0 %v92
  %222 = vmatmul.mubr.f32.gmra.mrb[0].mxu0 %v31
  %v223 = vpop.f32.mrb[0].mxu0
  %v224 = vadd.f32 0.0, %v223
  %v225 = vpop.f32.mrb[0].mxu0
  %226 = vmatprep.mubr.f32.mxu0 %v95
  %227 = vmatmul.mubr.f32.gmra.mrb[0].mxu0 %v33
  %v228 = vpop.f32.mrb[0].mxu0
  %v229 = vadd.f32 0.0, %v228
  %v230 = vpop.f32.mrb[0].mxu0
  %231 = vmatprep.mubr.f32.mxu0 %v98
  %232 = vmatmul.mubr.f32.gmra.mrb[0].mxu0 %v35
  %v233 = vpop.f32.mrb[0].mxu0
  %v234 = vadd.f32 0.0, %v233
  %v235 = vpop.f32.mrb[0].mxu0
  %236 = vmatprep.mubr.f32.mxu0 %v101
  %237 = vmatmul.mubr.f32.gmra.mrb[0].mxu0 %v37
  %v238 = vpop.f32.mrb[0].mxu0
  %v239 = vadd.f32 0.0, %v238
  %v240 = vpop.f32.mrb[0].mxu0
  %241 = vmatprep.mubr.f32.mxu0 %v104
  %242 = vmatmul.mubr.f32.gmra.mrb[0].mxu0 %v39
  %v243 = vpop.f32.mrb[0].mxu0
  %v244 = vadd.f32 0.0, %v243
  %v245 = vpop.f32.mrb[0].mxu0
  %246 = vmatprep.mubr.f32.mxu0 %v107
  %247 = vmatmul.mubr.f32.gmra.mrb[0].mxu0 %v41
  %v248 = vpop.f32.mrb[0].mxu0
  %v249 = vadd.f32 0.0, %v248
  %v250 = vpop.f32.mrb[0].mxu0
  %251 = vmatprep.mubr.f32.mxu0 %v110
  %252 = vmatmul.mubr.f32.gmra.mrb[0].mxu0 %v43
  %v253 = vpop.f32.mrb[0].mxu0
  %v254 = vadd.f32 0.0, %v253
  %v255 = vpop.f32.mrb[0].mxu0
  %256 = vdwg.mxu0
  %257 = vst.msk [vmem:[%s2] sm:$0xff] %vm63, %v179
  %258 = vst.msk [vmem:[%s2 + $0x8] sm:$0xff] %vm63, %v184
  %259 = vst.msk [vmem:[%s2 + $0x10] sm:$0xff] %vm63, %v189
  %260 = vst.msk [vmem:[%s2 + $0x18] sm:$0xff] %vm63, %v194
  %261 = vst.msk [vmem:[%s2 + $0x20] sm:$0xff] %vm63, %v199
  %262 = vst.msk [vmem:[%s2 + $0x28] sm:$0xff] %vm63, %v204
  %263 = vst.msk [vmem:[%s2 + $0x30] sm:$0xff] %vm63, %v209
  %264 = vst.msk [vmem:[%s2 + $0x38] sm:$0xff] %vm63, %v214
  %265 = vst.msk [vmem:[%s2 + $0x40] sm:$0xff] %vm63, %v219
  %266 = vst.msk [vmem:[%s2 + $0x48] sm:$0xff] %vm63, %v224
  %267 = vst.msk [vmem:[%s2 + $0x50] sm:$0xff] %vm63, %v229
  %268 = vst.msk [vmem:[%s2 + $0x58] sm:$0xff] %vm63, %v234
  %269 = vst.msk [vmem:[%s2 + $0x60] sm:$0xff] %vm63, %v239
  %270 = vst.msk [vmem:[%s2 + $0x68] sm:$0xff] %vm63, %v244
  %271 = vst.msk [vmem:[%s2 + $0x70] sm:$0xff] %vm63, %v249
  %272 = vst.msk [vmem:[%s2 + $0x78] sm:$0xff] %vm63, %v254
  %v273 = vsel %vm63, %v179, 0.0
  %v274 = vsel %vm63, %v184, 0.0
  %v275 = vadd.f32 %v273, %v274
  %v276 = vsel %vm63, %v189, 0.0
  %v277 = vadd.f32 %v275, %v276
  %v278 = vsel %vm63, %v194, 0.0
  %v279 = vadd.f32 %v277, %v278
  %v280 = vsel %vm63, %v199, 0.0
  %v281 = vadd.f32 %v279, %v280
  %v282 = vsel %vm63, %v204, 0.0
  %v283 = vadd.f32 %v281, %v282
  %v284 = vsel %vm63, %v209, 0.0
  %v285 = vadd.f32 %v283, %v284
  %v286 = vsel %vm63, %v214, 0.0
  %v287 = vadd.f32 %v285, %v286
  %v288 = vsel %vm63, %v219, 0.0
  %v289 = vadd.f32 %v287, %v288
  %v290 = vsel %vm63, %v224, 0.0
  %v291 = vadd.f32 %v289, %v290
  %v292 = vsel %vm63, %v229, 0.0
  %v293 = vadd.f32 %v291, %v292
  %v294 = vsel %vm63, %v234, 0.0
  %v295 = vadd.f32 %v293, %v294
  %v296 = vsel %vm63, %v239, 0.0
  %v297 = vadd.f32 %v295, %v296
  %v298 = vsel %vm63, %v244, 0.0
  %v299 = vadd.f32 %v297, %v298
  %v300 = vsel %vm63, %v249, 0.0
  %v301 = vadd.f32 %v299, %v300
  %v302 = vsel %vm63, %v254, 0.0
  %v303 = vadd.f32 %v301, %v302
  %v304 = vrot.slane %v303, 4
  %v305 = vadd.f32 %v303, %v304
  %v306 = vrot.slane %v305, 2
  %v307 = vadd.f32 %v305, %v306
  %v308 = vrot.slane %v307, 1
  %v309 = vadd.f32 %v307, %v308
  %v310 = vmul.f32 %v179, %v179
  %v311 = vmul.f32 %v184, %v184
  %v312 = vmul.f32 %v189, %v189
  %v313 = vmul.f32 %v194, %v194
  %v314 = vmul.f32 %v199, %v199
  %v315 = vmul.f32 %v204, %v204
  %v316 = vmul.f32 %v209, %v209
  %v317 = vmul.f32 %v214, %v214
  %v318 = vmul.f32 %v219, %v219
  %v319 = vmul.f32 %v224, %v224
  %v320 = vmul.f32 %v229, %v229
  %v321 = vmul.f32 %v234, %v234
  %v322 = vmul.f32 %v239, %v239
  %v323 = vmul.f32 %v244, %v244
  %v324 = vmul.f32 %v249, %v249
  %v325 = vmul.f32 %v254, %v254
  %v326 = vsel %vm63, %v310, 0.0
  %v327 = vsel %vm63, %v311, 0.0
  %v328 = vadd.f32 %v326, %v327
  %v329 = vsel %vm63, %v312, 0.0
  %v330 = vadd.f32 %v328, %v329
  %v331 = vsel %vm63, %v313, 0.0
  %v332 = vadd.f32 %v330, %v331
  %v333 = vsel %vm63, %v314, 0.0
  %v334 = vadd.f32 %v332, %v333
  %v335 = vsel %vm63, %v315, 0.0
  %v336 = vadd.f32 %v334, %v335
  %v337 = vsel %vm63, %v316, 0.0
  %v338 = vadd.f32 %v336, %v337
  %v339 = vsel %vm63, %v317, 0.0
  %v340 = vadd.f32 %v338, %v339
  %v341 = vsel %vm63, %v318, 0.0
  %v342 = vadd.f32 %v340, %v341
  %v343 = vsel %vm63, %v319, 0.0
  %v344 = vadd.f32 %v342, %v343
  %v345 = vsel %vm63, %v320, 0.0
  %v346 = vadd.f32 %v344, %v345
  %v347 = vsel %vm63, %v321, 0.0
  %v348 = vadd.f32 %v346, %v347
  %v349 = vsel %vm63, %v322, 0.0
  %v350 = vadd.f32 %v348, %v349
  %v351 = vsel %vm63, %v323, 0.0
  %v352 = vadd.f32 %v350, %v351
  %v353 = vsel %vm63, %v324, 0.0
  %v354 = vadd.f32 %v352, %v353
  %v355 = vsel %vm63, %v325, 0.0
  %v356 = vadd.f32 %v354, %v355
  %v357 = vrot.slane %v356, 4
  %v358 = vadd.f32 %v356, %v357
  %v359 = vrot.slane %v358, 2
  %v360 = vadd.f32 %v358, %v359
  %v361 = vrot.slane %v360, 1
  %v362 = vadd.f32 %v360, %v361
  %vm363 = vcmask 1040384
  %v364 = vsel %vm363, %v309, %v362
  %vm365 = vcmask 123904
  %366 = vst.msk [vmem:[%s3] sm:$0x3] %vm365, %v364
  // Predicated region
  $region10: #{unet4_forward.20} parent=0 // pred_check
    _
  $region11: #{unet4_forward.20} parent=0 // pred_check_branch
    %368 = sbr.rel (0) target = $region13
  $region12: #{unet4_forward.20} parent=0 // pred_region
    _
  $region13: #{unet4_forward.20} parent=0 // pred_fallthru
    _
  // Predicated region
  $region14: #{unet4_forward.20} parent=0 // pred_check
    _
  $region15: #{unet4_forward.20} parent=0 // pred_check_branch
    %370 = sbr.rel (0) target = $region17
  $region16: #{unet4_forward.20} parent=0 // pred_region
    _
  $region17: #{unet4_forward.20} parent=0 // pred_fallthru
    _
  // Predicated region
  $region18: #{unet4_forward.20} parent=0 // pred_check
    _
  $region19: #{unet4_forward.20} parent=0 // pred_check_branch
    %372 = sbr.rel (0) target = $region21
  $region20: #{unet4_forward.20} parent=0 // pred_region
    _
  $region21: #{unet4_forward.20} parent=0 // pred_fallthru
    _
  // Predicated region
  $region22: #{unet4_forward.20} parent=0 // pred_check
    _
  $region23: #{unet4_forward.20} parent=0 // pred_check_branch
    %374 = sbr.rel (0) target = $region25
  $region24: #{unet4_forward.20} parent=0 // pred_region
    _
  $region25: #{unet4_forward.20} parent=0 // pred_fallthru
    _

// kernel: unet4_forward.22
$region0: #{unet4_forward.22}
  #allocation0 [shape = 'u32[]', space=smem, size = 0x4, offset = 0x4, fixed_abs, tag = 'smem constant byte address 0x4 - core index']
  #allocation1 [shape = 'u32[144,128]{1,0:T(1,128)}', space=vmem, size = 0x12000, scoped, tag = 'internal scratch']
  %s0 = inlined_call_operand.vmem [shape: f32[32,144], index: 0, kind: input, shape index: {}]
  %s1 = inlined_call_operand.vmem [shape: f32[144,16], index: 1, kind: input, shape index: {}]
  %s2 = inlined_call_operand.vmem [shape: f32[32,16], index: 2, kind: output, shape index: {0}]
  %s3 = inlined_call_operand.vmem [shape: f32[1,2,16], index: 3, kind: output, shape index: {1}]
  %4 = xla_tuple %s2, %s3
  %s5 = sld [smem:[#allocation0]]
  $region26: #{unet4_forward.22} parent=0
    _
  %s7 = ssub.s32 1, %s5
  %s8 = scalar_select 0, %s7, %s5
  // Predicated region
  $region2: #{unet4_forward.22} parent=0 // pred_check
    _
  $region3: #{unet4_forward.22} parent=0 // pred_check_branch
    %10 = sbr.rel (0) target = $region5
  $region4: #{unet4_forward.22} parent=0 // pred_region
    _
  $region5: #{unet4_forward.22} parent=0 // pred_fallthru
    _
  // Predicated region
  $region6: #{unet4_forward.22} parent=0 // pred_check
    _
  $region7: #{unet4_forward.22} parent=0 // pred_check_branch
    %12 = sbr.rel (0) target = $region9
  $region8: #{unet4_forward.22} parent=0 // pred_region
    _
  $region9: #{unet4_forward.22} parent=0 // pred_fallthru
    _
  %v13 = vld [vmem:[%s0] sm:$0xff]
  %v14 = vld [vmem:[%s0 + $0x8] sm:$0xff]
  %v15 = vld [vmem:[%s0 + $0x10] sm:$0xff]
  %v16 = vld [vmem:[%s0 + $0x18] sm:$0xff]
  %v17 = vld [vmem:[%s0 + $0x20] sm:$0xff]
  %v18 = vld [vmem:[%s0 + $0x28] sm:$0xff]
  %v19 = vld [vmem:[%s0 + $0x30] sm:$0xff]
  %v20 = vld [vmem:[%s0 + $0x38] sm:$0xff]
  %v21 = vld [vmem:[%s1] sm:$0xff]
  %v22 = vld [vmem:[%s1 + $0x8] sm:$0xff]
  %v23 = vld [vmem:[%s1 + $0x10] sm:$0xff]
  %v24 = vld [vmem:[%s1 + $0x18] sm:$0xff]
  %v25 = vld [vmem:[%s1 + $0x20] sm:$0xff]
  %v26 = vld [vmem:[%s1 + $0x28] sm:$0xff]
  %v27 = vld [vmem:[%s1 + $0x30] sm:$0xff]
  %v28 = vld [vmem:[%s1 + $0x38] sm:$0xff]
  %v29 = vld [vmem:[%s1 + $0x40] sm:$0xff]
  %v30 = vld [vmem:[%s1 + $0x48] sm:$0xff]
  %v31 = vld [vmem:[%s1 + $0x50] sm:$0xff]
  %v32 = vld [vmem:[%s1 + $0x58] sm:$0xff]
  %v33 = vld [vmem:[%s1 + $0x60] sm:$0xff]
  %v34 = vld [vmem:[%s1 + $0x68] sm:$0xff]
  %v35 = vld [vmem:[%s1 + $0x70] sm:$0xff]
  %v36 = vld [vmem:[%s1 + $0x78] sm:$0xff]
  %v37 = vld [vmem:[%s1 + $0x80] sm:$0xff]
  %v38 = vld [vmem:[%s1 + $0x88] sm:$0xff]
  %vm39 = vcmask 130048
  %v41 = vsel %vm39, %v14, 0
  %v44 = vsel %vm39, %v16, 0
  %v47 = vsel %vm39, %v18, 0
  %v50 = vsel %vm39, %v20, 0
  %52 = vmatprep.subr.mxu0 0.0
  %53 = vmatpush1.msra.mxu0 %v21
  %54 = vmatprep.subr.mxu0 0.0
  %55 = vmatpush1.msra.mxu0 %v22
  %56 = vmatprep.subr.mxu0 0.0
  %57 = vmatpush1.msra.mxu0 %v23
  %58 = vmatprep.subr.mxu0 0.0
  %59 = vmatpush1.msra.mxu0 %v24
  %60 = vmatprep.subr.mxu0 0.0
  %61 = vmatpush1.msra.mxu0 %v25
  %62 = vmatprep.subr.mxu0 0.0
  %63 = vmatpush1.msra.mxu0 %v26
  %64 = vmatprep.subr.mxu0 0.0
  %65 = vmatpush1.msra.mxu0 %v27
  %66 = vmatprep.subr.mxu0 0.0
  %67 = vmatpush1.msra.mxu0 %v28
  %68 = vmatprep.subr.mxu0 0.0
  %69 = vmatpush1.msra.mxu0 %v29
  %70 = vmatprep.subr.mxu0 0.0
  %71 = vmatpush1.msra.mxu0 %v30
  %72 = vmatprep.subr.mxu0 0.0
  %73 = vmatpush1.msra.mxu0 %v31
  %74 = vmatprep.subr.mxu0 0.0
  %75 = vmatpush1.msra.mxu0 %v32
  %76 = vmatprep.subr.mxu0 0.0
  %77 = vmatpush1.msra.mxu0 %v33
  %78 = vmatprep.subr.mxu0 0.0
  %79 = vmatpush1.msra.mxu0 %v34
  %80 = vmatprep.subr.mxu0 0.0
  %81 = vmatpush1.msra.mxu0 %v35
  %82 = vmatprep.subr.mxu0 0.0
  %83 = vmatpush1.msra.mxu0 %v36
  %84 = vmatprep.subr.mxu0 0.0
  %85 = vmatpush1.msra.mxu0 %v37
  %86 = vmatprep.subr.mxu0 0.0
  %87 = vmatpush1.msra.mxu0 %v38
  %88 = vmatprep.subr.mxu0 0.0
  %89 = vmatpush1.msra.mxu0 0.0
  %90 = vmatprep.subr.mxu0 0.0
  %91 = vmatpush1.msra.mxu0 0.0
  %92 = vmatprep.subr.mxu0 0.0
  %93 = vmatpush1.msra.mxu0 0.0
  %94 = vmatprep.subr.mxu0 0.0
  %95 = vmatpush1.msra.mxu0 0.0
  %96 = vmatprep.subr.mxu0 0.0
  %97 = vmatpush1.msra.mxu0 0.0
  %98 = vmatprep.subr.mxu0 0.0
  %99 = vmatpush1.msra.mxu0 0.0
  %100 = vmatprep.subr.mxu0 0.0
  %101 = vmatpush1.msra.mxu0 0.0
  %102 = vmatprep.subr.mxu0 0.0
  %103 = vmatpush1.msra.mxu0 0.0
  %104 = vmatprep.subr.mxu0 0.0
  %105 = vmatpush1.msra.mxu0 0.0
  %106 = vmatprep.subr.mxu0 0.0
  %107 = vmatpush1.msra.mxu0 0.0
  %108 = vmatprep.subr.mxu0 0.0
  %109 = vmatpush1.msra.mxu0 0.0
  %110 = vmatprep.subr.mxu0 0.0
  %111 = vmatpush1.msra.mxu0 0.0
  %112 = vmatprep.subr.mxu0 0.0
  %113 = vmatpush1.msra.mxu0 0.0
  %114 = vmatprep.subr.mxu0 0.0
  %115 = vmatpush1.msra.mxu0 0.0
  %116 = vmatprep.mubr.f32.mxu0 %v41
  %117 = vmatmul.mubr.f32.gmra.mrb[0].mxu0 %v13
  %v118 = vpop.f32.mrb[0].mxu0
  %v119 = vadd.f32 0.0, %v118
  %v120 = vpop.f32.mrb[0].mxu0
  %121 = vmatprep.mubr.f32.mxu0 %v44
  %122 = vmatmul.mubr.f32.gmra.mrb[0].mxu0 %v15
  %v123 = vpop.f32.mrb[0].mxu0
  %v124 = vadd.f32 0.0, %v123
  %v125 = vpop.f32.mrb[0].mxu0
  %126 = vmatprep.mubr.f32.mxu0 %v47
  %127 = vmatmul.mubr.f32.gmra.mrb[0].mxu0 %v17
  %v128 = vpop.f32.mrb[0].mxu0
  %v129 = vadd.f32 0.0, %v128
  %v130 = vpop.f32.mrb[0].mxu0
  %131 = vmatprep.mubr.f32.mxu0 %v50
  %132 = vmatmul.mubr.f32.gmra.mrb[0].mxu0 %v19
  %v133 = vpop.f32.mrb[0].mxu0
  %v134 = vadd.f32 0.0, %v133
  %v135 = vpop.f32.mrb[0].mxu0
  %136 = vdwg.mxu0
  %137 = vst.msk [vmem:[%s2] sm:$0xff] %vm39, %v119
  %138 = vst.msk [vmem:[%s2 + $0x8] sm:$0xff] %vm39, %v124
  %139 = vst.msk [vmem:[%s2 + $0x10] sm:$0xff] %vm39, %v129
  %140 = vst.msk [vmem:[%s2 + $0x18] sm:$0xff] %vm39, %v134
  %v141 = vsel %vm39, %v119, 0.0
  %v142 = vsel %vm39, %v124, 0.0
  %v143 = vadd.f32 %v141, %v142
  %v144 = vsel %vm39, %v129, 0.0
  %v145 = vadd.f32 %v143, %v144
  %v146 = vsel %vm39, %v134, 0.0
  %v147 = vadd.f32 %v145, %v146
  %v148 = vrot.slane %v147, 4
  %v149 = vadd.f32 %v147, %v148
  %v150 = vrot.slane %v149, 2
  %v151 = vadd.f32 %v149, %v150
  %v152 = vrot.slane %v151, 1
  %v153 = vadd.f32 %v151, %v152
  %v154 = vmul.f32 %v119, %v119
  %v155 = vmul.f32 %v124, %v124
  %v156 = vmul.f32 %v129, %v129
  %v157 = vmul.f32 %v134, %v134
  %v158 = vsel %vm39, %v154, 0.0
  %v159 = vsel %vm39, %v155, 0.0
  %v160 = vadd.f32 %v158, %v159
  %v161 = vsel %vm39, %v156, 0.0
  %v162 = vadd.f32 %v160, %v161
  %v163 = vsel %vm39, %v157, 0.0
  %v164 = vadd.f32 %v162, %v163
  %v165 = vrot.slane %v164, 4
  %v166 = vadd.f32 %v164, %v165
  %v167 = vrot.slane %v166, 2
  %v168 = vadd.f32 %v166, %v167
  %v169 = vrot.slane %v168, 1
  %v170 = vadd.f32 %v168, %v169
  %vm171 = vcmask 1040384
  %v172 = vsel %vm171, %v153, %v170
  %vm173 = vcmask 123904
  %174 = vst.msk [vmem:[%s3] sm:$0x3] %vm173, %v172
  // Predicated region
  $region10: #{unet4_forward.22} parent=0 // pred_check
    _
  $region11: #{unet4_forward.22} parent=0 // pred_check_branch
    %176 = sbr.rel (0) target = $region13
  $region12: #{unet4_forward.22} parent=0 // pred_region
    _
  $region13: #{unet4_forward.22} parent=0 // pred_fallthru
    _
  // Predicated region
  $region14: #{unet4_forward.22} parent=0 // pred_check
    _
  $region15: #{unet4_forward.22} parent=0 // pred_check_branch
    %178 = sbr.rel (0) target = $region17
  $region16: #{unet4_forward.22} parent=0 // pred_region
    _
  $region17: #{unet4_forward.22} parent=0 // pred_fallthru
    _
  // Predicated region
  $region18: #{unet4_forward.22} parent=0 // pred_check
    _
  $region19: #{unet4_forward.22} parent=0 // pred_check_branch
    %180 = sbr.rel (0) target = $region21
  $region20: #{unet4_forward.22} parent=0 // pred_region
    _
  $region21: #{unet4_forward.22} parent=0 // pred_fallthru
    _
  // Predicated region
  $region22: #{unet4_forward.22} parent=0 // pred_check
    _
  $region23: #{unet4_forward.22} parent=0 // pred_check_branch
    %182 = sbr.rel (0) target = $region25
  $region24: #{unet4_forward.22} parent=0 // pred_region
    _
  $region25: #{unet4_forward.22} parent=0 // pred_fallthru
    _

// kernel: unet4_forward.23
$region0: #{unet4_forward.23}
  #allocation0 [shape = 'u32[]', space=smem, size = 0x4, offset = 0x4, fixed_abs, tag = 'smem constant byte address 0x4 - core index']
  #allocation1 [shape = 'u32[144,128]{1,0:T(1,128)}', space=vmem, size = 0x12000, scoped, tag = 'internal scratch']
  %s0 = inlined_call_operand.vmem [shape: f32[32,16], index: 0, kind: input, shape index: {}, may-alias: {0,3}]
  %s1 = inlined_call_operand.vmem [shape: f32[1,16], index: 1, kind: input, shape index: {}]
  %s2 = inlined_call_operand.vmem [shape: f32[1,16], index: 2, kind: input, shape index: {}]
  %s3 = inlined_call_operand.vmem [shape: f32[32,16], index: 3, kind: output, shape index: {}, may-alias: {0,3}]
  %s4 = sld [smem:[#allocation0]]
  $region22: #{unet4_forward.23} parent=0
    _
  %s6 = ssub.s32 1, %s4
  %s7 = scalar_select 0, %s6, %s4
  // Predicated region
  $region2: #{unet4_forward.23} parent=0 // pred_check
    _
  $region3: #{unet4_forward.23} parent=0 // pred_check_branch
    %9 = sbr.rel (0) target = $region5
  $region4: #{unet4_forward.23} parent=0 // pred_region
    _
  $region5: #{unet4_forward.23} parent=0 // pred_fallthru
    _
  // Predicated region
  $region6: #{unet4_forward.23} parent=0 // pred_check
    _
  $region7: #{unet4_forward.23} parent=0 // pred_check_branch
    %11 = sbr.rel (0) target = $region9
  $region8: #{unet4_forward.23} parent=0 // pred_region
    _
  $region9: #{unet4_forward.23} parent=0 // pred_fallthru
    _
  // Predicated region
  $region10: #{unet4_forward.23} parent=0 // pred_check
    _
  $region11: #{unet4_forward.23} parent=0 // pred_check_branch
    %13 = sbr.rel (0) target = $region13
  $region12: #{unet4_forward.23} parent=0 // pred_region
    _
  $region13: #{unet4_forward.23} parent=0 // pred_fallthru
    _
  %v14 = vld [vmem:[%s0] sm:$0xff]
  %v15 = vld [vmem:[%s0 + $0x8] sm:$0xff]
  %v16 = vld [vmem:[%s0 + $0x10] sm:$0xff]
  %v17 = vld [vmem:[%s0 + $0x18] sm:$0xff]
  %v18 = vld [vmem:[%s1] sm:$0x1]
  %v20 = vlaneseq
  %v21 = vshrl.u32 %v20, 7
  %v22 = vsub.s32 0, %v21
  %v23 = vrot.slane %v18, %v22
  %v25 = vmul.f32 %v14, %v23
  %v26 = vmul.f32 %v15, %v23
  %v27 = vmul.f32 %v16, %v23
  %v28 = vmul.f32 %v17, %v23
  %v29 = vld [vmem:[%s2] sm:$0x1]
  %v31 = vlaneseq
  %v32 = vshrl.u32 %v31, 7
  %v33 = vsub.s32 0, %v32
  %v34 = vrot.slane %v29, %v33
  %v36 = vadd.f32 %v25, %v34
  %v37 = vadd.f32 %v26, %v34
  %v38 = vadd.f32 %v27, %v34
  %v39 = vadd.f32 %v28, %v34
  %v40 = vmax.f32 %v36, 0.0
  %v41 = vmax.f32 %v37, 0.0
  %v42 = vmax.f32 %v38, 0.0
  %v43 = vmax.f32 %v39, 0.0
  %vm44 = vcmask 130048
  %45 = vst.msk [vmem:[%s3] sm:$0xff] %vm44, %v40
  %46 = vst.msk [vmem:[%s3 + $0x8] sm:$0xff] %vm44, %v41
  %47 = vst.msk [vmem:[%s3 + $0x10] sm:$0xff] %vm44, %v42
  %48 = vst.msk [vmem:[%s3 + $0x18] sm:$0xff] %vm44, %v43
  // Predicated region
  $region14: #{unet4_forward.23} parent=0 // pred_check
    _
  $region15: #{unet4_forward.23} parent=0 // pred_check_branch
    %50 = sbr.rel (0) target = $region17
  $region16: #{unet4_forward.23} parent=0 // pred_region
    _
  $region17: #{unet4_forward.23} parent=0 // pred_fallthru
    _
  // Predicated region
  $region18: #{unet4_forward.23} parent=0 // pred_check
    _
  $region19: #{unet4_forward.23} parent=0 // pred_check_branch
    %52 = sbr.rel (0) target = $region21
  $region20: #{unet4_forward.23} parent=0 // pred_region
    _
  $region21: #{unet4_forward.23} parent=0 // pred_fallthru
    _

// kernel: unet4_forward.26
$region0: #{unet4_forward.26}
  #allocation0 [shape = 'u32[]', space=smem, size = 0x4, offset = 0x4, fixed_abs, tag = 'smem constant byte address 0x4 - core index']
  #allocation1 [shape = 'u32[144,128]{1,0:T(1,128)}', space=vmem, size = 0x12000, scoped, tag = 'internal scratch']
  %s0 = inlined_call_operand.vmem [shape: f32[32,288], index: 0, kind: input, shape index: {}]
  %s1 = inlined_call_operand.vmem [shape: f32[288,16], index: 1, kind: input, shape index: {}]
  %s2 = inlined_call_operand.vmem [shape: f32[32,16], index: 2, kind: output, shape index: {0}]
  %s3 = inlined_call_operand.vmem [shape: f32[1,2,16], index: 3, kind: output, shape index: {1}]
  %4 = xla_tuple %s2, %s3
  %s5 = sld [smem:[#allocation0]]
  $region26: #{unet4_forward.26} parent=0
    _
  %s7 = ssub.s32 1, %s5
  %s8 = scalar_select 0, %s7, %s5
  // Predicated region
  $region2: #{unet4_forward.26} parent=0 // pred_check
    _
  $region3: #{unet4_forward.26} parent=0 // pred_check_branch
    %10 = sbr.rel (0) target = $region5
  $region4: #{unet4_forward.26} parent=0 // pred_region
    _
  $region5: #{unet4_forward.26} parent=0 // pred_fallthru
    _
  // Predicated region
  $region6: #{unet4_forward.26} parent=0 // pred_check
    _
  $region7: #{unet4_forward.26} parent=0 // pred_check_branch
    %12 = sbr.rel (0) target = $region9
  $region8: #{unet4_forward.26} parent=0 // pred_region
    _
  $region9: #{unet4_forward.26} parent=0 // pred_fallthru
    _
  %v13 = vld [vmem:[%s0] sm:$0xff]
  %v14 = vld [vmem:[%s0 + $0x8] sm:$0xff]
  %v15 = vld [vmem:[%s0 + $0x10] sm:$0xff]
  %v16 = vld [vmem:[%s0 + $0x18] sm:$0xff]
  %v17 = vld [vmem:[%s0 + $0x20] sm:$0xff]
  %v18 = vld [vmem:[%s0 + $0x28] sm:$0xff]
  %v19 = vld [vmem:[%s0 + $0x30] sm:$0xff]
  %v20 = vld [vmem:[%s0 + $0x38] sm:$0xff]
  %v21 = vld [vmem:[%s0 + $0x40] sm:$0xff]
  %v22 = vld [vmem:[%s0 + $0x48] sm:$0xff]
  %v23 = vld [vmem:[%s0 + $0x50] sm:$0xff]
  %v24 = vld [vmem:[%s0 + $0x58] sm:$0xff]
  %v25 = vld [vmem:[%s1] sm:$0xff]
  %v26 = vld [vmem:[%s1 + $0x8] sm:$0xff]
  %v27 = vld [vmem:[%s1 + $0x10] sm:$0xff]
  %v28 = vld [vmem:[%s1 + $0x18] sm:$0xff]
  %v29 = vld [vmem:[%s1 + $0x20] sm:$0xff]
  %v30 = vld [vmem:[%s1 + $0x28] sm:$0xff]
  %v31 = vld [vmem:[%s1 + $0x30] sm:$0xff]
  %v32 = vld [vmem:[%s1 + $0x38] sm:$0xff]
  %v33 = vld [vmem:[%s1 + $0x40] sm:$0xff]
  %v34 = vld [vmem:[%s1 + $0x48] sm:$0xff]
  %v35 = vld [vmem:[%s1 + $0x50] sm:$0xff]
  %v36 = vld [vmem:[%s1 + $0x58] sm:$0xff]
  %v37 = vld [vmem:[%s1 + $0x60] sm:$0xff]
  %v38 = vld [vmem:[%s1 + $0x68] sm:$0xff]
  %v39 = vld [vmem:[%s1 + $0x70] sm:$0xff]
  %v40 = vld [vmem:[%s1 + $0x78] sm:$0xff]
  %v41 = vld [vmem:[%s1 + $0x80] sm:$0xff]
  %v42 = vld [vmem:[%s1 + $0x88] sm:$0xff]
  %v43 = vld [vmem:[%s1 + $0x90] sm:$0xff]
  %v44 = vld [vmem:[%s1 + $0x98] sm:$0xff]
  %v45 = vld [vmem:[%s1 + $0xa0] sm:$0xff]
  %v46 = vld [vmem:[%s1 + $0xa8] sm:$0xff]
  %v47 = vld [vmem:[%s1 + $0xb0] sm:$0xff]
  %v48 = vld [vmem:[%s1 + $0xb8] sm:$0xff]
  %v49 = vld [vmem:[%s1 + $0xc0] sm:$0xff]
  %v50 = vld [vmem:[%s1 + $0xc8] sm:$0xff]
  %v51 = vld [vmem:[%s1 + $0xd0] sm:$0xff]
  %v52 = vld [vmem:[%s1 + $0xd8] sm:$0xff]
  %v53 = vld [vmem:[%s1 + $0xe0] sm:$0xff]
  %v54 = vld [vmem:[%s1 + $0xe8] sm:$0xff]
  %v55 = vld [vmem:[%s1 + $0xf0] sm:$0xff]
  %v56 = vld [vmem:[%s1 + $0xf8] sm:$0xff]
  %v57 = vld [vmem:[%s1 + $0x100] sm:$0xff]
  %v58 = vld [vmem:[%s1 + $0x108] sm:$0xff]
  %v59 = vld [vmem:[%s1 + $0x110] sm:$0xff]
  %v60 = vld [vmem:[%s1 + $0x118] sm:$0xff]
  %vm61 = vcmask 261120
  %v63 = vsel %vm61, %v15, 0
  %v66 = vsel %vm61, %v18, 0
  %v69 = vsel %vm61, %v21, 0
  %v72 = vsel %vm61, %v24, 0
  %74 = vmatprep.subr.mxu0 0.0
  %75 = vmatpush1.msra.mxu0 %v25
  %76 = vmatprep.subr.mxu0 0.0
  %77 = vmatpush1.msra.mxu0 %v26
  %78 = vmatprep.subr.mxu0 0.0
  %79 = vmatpush1.msra.mxu0 %v27
  %80 = vmatprep.subr.mxu0 0.0
  %81 = vmatpush1.msra.mxu0 %v28
  %82 = vmatprep.subr.mxu0 0.0
  %83 = vmatpush1.msra.mxu0 %v29
  %84 = vmatprep.subr.mxu0 0.0
  %85 = vmatpush1.msra.mxu0 %v30
  %86 = vmatprep.subr.mxu0 0.0
  %87 = vmatpush1.msra.mxu0 %v31
  %88 = vmatprep.subr.mxu0 0.0
  %89 = vmatpush1.msra.mxu0 %v32
  %90 = vmatprep.subr.mxu0 0.0
  %91 = vmatpush1.msra.mxu0 %v33
  %92 = vmatprep.subr.mxu0 0.0
  %93 = vmatpush1.msra.mxu0 %v34
  %94 = vmatprep.subr.mxu0 0.0
  %95 = vmatpush1.msra.mxu0 %v35
  %96 = vmatprep.subr.mxu0 0.0
  %97 = vmatpush1.msra.mxu0 %v36
  %98 = vmatprep.subr.mxu0 0.0
  %99 = vmatpush1.msra.mxu0 %v37
  %100 = vmatprep.subr.mxu0 0.0
  %101 = vmatpush1.msra.mxu0 %v38
  %102 = vmatprep.subr.mxu0 0.0
  %103 = vmatpush1.msra.mxu0 %v39
  %104 = vmatprep.subr.mxu0 0.0
  %105 = vmatpush1.msra.mxu0 %v40
  %106 = vmatprep.subr.mxu0 0.0
  %107 = vmatpush1.msra.mxu0 %v41
  %108 = vmatprep.subr.mxu0 0.0
  %109 = vmatpush1.msra.mxu0 %v42
  %110 = vmatprep.subr.mxu0 0.0
  %111 = vmatpush1.msra.mxu0 %v43
  %112 = vmatprep.subr.mxu0 0.0
  %113 = vmatpush1.msra.mxu0 %v44
  %114 = vmatprep.subr.mxu0 0.0
  %115 = vmatpush1.msra.mxu0 %v45
  %116 = vmatprep.subr.mxu0 0.0
  %117 = vmatpush1.msra.mxu0 %v46
  %118 = vmatprep.subr.mxu0 0.0
  %119 = vmatpush1.msra.mxu0 %v47
  %120 = vmatprep.subr.mxu0 0.0
  %121 = vmatpush1.msra.mxu0 %v48
  %122 = vmatprep.subr.mxu0 0.0
  %123 = vmatpush1.msra.mxu0 %v49
  %124 = vmatprep.subr.mxu0 0.0
  %125 = vmatpush1.msra.mxu0 %v50
  %126 = vmatprep.subr.mxu0 0.0
  %127 = vmatpush1.msra.mxu0 %v51
  %128 = vmatprep.subr.mxu0 0.0
  %129 = vmatpush1.msra.mxu0 %v52
  %130 = vmatprep.subr.mxu0 0.0
  %131 = vmatpush1.msra.mxu0 %v53
  %132 = vmatprep.subr.mxu0 0.0
  %133 = vmatpush1.msra.mxu0 %v54
  %134 = vmatprep.subr.mxu0 0.0
  %135 = vmatpush1.msra.mxu0 %v55
  %136 = vmatprep.subr.mxu0 0.0
  %137 = vmatpush1.msra.mxu0 %v56
  %138 = vmatprep.mubr.f32.mxu0 %v14
  %139 = vmatmul.mubr.f32.gmra.mrb[0].mxu0 %v13
  %v140 = vpop.f32.mrb[0].mxu0
  %v141 = vadd.f32 0.0, %v140
  %v142 = vpop.f32.mrb[0].mxu0
  %143 = vmatprep.mubr.f32.mxu0 %v17
  %144 = vmatmul.mubr.f32.gmra.mrb[0].mxu0 %v16
  %v145 = vpop.f32.mrb[0].mxu0
  %v146 = vadd.f32 0.0, %v145
  %v147 = vpop.f32.mrb[0].mxu0
  %148 = vmatprep.mubr.f32.mxu0 %v20
  %149 = vmatmul.mubr.f32.gmra.mrb[0].mxu0 %v19
  %v150 = vpop.f32.mrb[0].mxu0
  %v151 = vadd.f32 0.0, %v150
  %v152 = vpop.f32.mrb[0].mxu0
  %153 = vmatprep.mubr.f32.mxu0 %v23
  %154 = vmatmul.mubr.f32.gmra.mrb[0].mxu0 %v22
  %v155 = vpop.f32.mrb[0].mxu0
  %v156 = vadd.f32 0.0, %v155
  %v157 = vpop.f32.mrb[0].mxu0
  %158 = vdwg.mxu0
  %159 = vmatprep.subr.mxu0 0.0
  %160 = vmatpush1.msra.mxu0 %v57
  %161 = vmatprep.subr.mxu0 0.0
  %162 = vmatpush1.msra.mxu0 %v58
  %163 = vmatprep.subr.mxu0 0.0
  %164 = vmatpush1.msra.mxu0 %v59
  %165 = vmatprep.subr.mxu0 0.0
  %166 = vmatpush1.msra.mxu0 %v60
  %167 = vmatprep.subr.mxu0 0.0
  %168 = vmatpush1.msra.mxu0 0.0
  %169 = vmatprep.subr.mxu0 0.0
  %170 = vmatpush1.msra.mxu0 0.0
  %171 = vmatprep.subr.mxu0 0.0
  %172 = vmatpush1.msra.mxu0 0.0
  %173 = vmatprep.subr.mxu0 0.0
  %174 = vmatpush1.msra.mxu0 0.0
  %175 = vmatprep.subr.mxu0 0.0
  %176 = vmatpush1.msra.mxu0 0.0
  %177 = vmatprep.subr.mxu0 0.0
  %178 = vmatpush1.msra.mxu0 0.0
  %179 = vmatprep.subr.mxu0 0.0
  %180 = vmatpush1.msra.mxu0 0.0
  %181 = vmatprep.subr.mxu0 0.0
  %182 = vmatpush1.msra.mxu0 0.0
  %183 = vmatprep.subr.mxu0 0.0
  %184 = vmatpush1.msra.mxu0 0.0
  %185 = vmatprep.subr.mxu0 0.0
  %186 = vmatpush1.msra.mxu0 0.0
  %187 = vmatprep.subr.mxu0 0.0
  %188 = vmatpush1.msra.mxu0 0.0
  %189 = vmatprep.subr.mxu0 0.0
  %190 = vmatpush1.msra.mxu0 0.0
  %191 = vmatprep.subr.mxu0 0.0
  %192 = vmatpush1.msra.mxu0 0.0
  %193 = vmatprep.subr.mxu0 0.0
  %194 = vmatpush1.msra.mxu0 0.0
  %195 = vmatprep.subr.mxu0 0.0
  %196 = vmatpush1.msra.mxu0 0.0
  %197 = vmatprep.subr.mxu0 0.0
  %198 = vmatpush1.msra.mxu0 0.0
  %199 = vmatprep.subr.mxu0 0.0
  %200 = vmatpush1.msra.mxu0 0.0
  %201 = vmatprep.subr.mxu0 0.0
  %202 = vmatpush1.msra.mxu0 0.0
  %203 = vmatprep.subr.mxu0 0.0
  %204 = vmatpush1.msra.mxu0 0.0
  %205 = vmatprep.subr.mxu0 0.0
  %206 = vmatpush1.msra.mxu0 0.0
  %207 = vmatprep.subr.mxu0 0.0
  %208 = vmatpush1.msra.mxu0 0.0
  %209 = vmatprep.subr.mxu0 0.0
  %210 = vmatpush1.msra.mxu0 0.0
  %211 = vmatprep.subr.mxu0 0.0
  %212 = vmatpush1.msra.mxu0 0.0
  %213 = vmatprep.subr.mxu0 0.0
  %214 = vmatpush1.msra.mxu0 0.0
  %215 = vmatprep.subr.mxu0 0.0
  %216 = vmatpush1.msra.mxu0 0.0
  %217 = vmatprep.subr.mxu0 0.0
  %218 = vmatpush1.msra.mxu0 0.0
  %219 = vmatprep.subr.mxu0 0.0
  %220 = vmatpush1.msra.mxu0 0.0
  %221 = vmatprep.subr.mxu0 0.0
  %222 = vmatpush1.msra.mxu0 0.0
  %223 = vmatprep.mubr.f32.mxu0 0.0
  %224 = vmatmul.mubr.f32.gmra.mrb[0].mxu0 %v63
  %v225 = vpop.f32.mrb[0].mxu0
  %v226 = vadd.f32 %v141, %v225
  %v227 = vpop.f32.mrb[0].mxu0
  %228 = vmatprep.mubr.f32.mxu0 0.0
  %229 = vmatmul.mubr.f32.gmra.mrb[0].mxu0 %v66
  %v230 = vpop.f32.mrb[0].mxu0
  %v231 = vadd.f32 %v146, %v230
  %v232 = vpop.f32.mrb[0].mxu0
  %233 = vmatprep.mubr.f32.mxu0 0.0
  %234 = vmatmul.mubr.f32.gmra.mrb[0].mxu0 %v69
  %v235 = vpop.f32.mrb[0].mxu0
  %v236 = vadd.f32 %v151, %v235
  %v237 = vpop.f32.mrb[0].mxu0
  %238 = vmatprep.mubr.f32.mxu0 0.0
  %239 = vmatmul.mubr.f32.gmra.mrb[0].mxu0 %v72
  %v240 = vpop.f32.mrb[0].mxu0
  %v241 = vadd.f32 %v156, %v240
  %v242 = vpop.f32.mrb[0].mxu0
  %243 = vdwg.mxu0
  %vm244 = vcmask 130048
  %245 = vst.msk [vmem:[%s2] sm:$0xff] %vm244, %v226
  %246 = vst.msk [vmem:[%s2 + $0x8] sm:$0xff] %vm244, %v231
  %247 = vst.msk [vmem:[%s2 + $0x10] sm:$0xff] %vm244, %v236
  %248 = vst.msk [vmem:[%s2 + $0x18] sm:$0xff] %vm244, %v241
  %v249 = vsel %vm244, %v226, 0.0
  %v250 = vsel %vm244, %v231, 0.0
  %v251 = vadd.f32 %v249, %v250
  %v252 = vsel %vm244, %v236, 0.0
  %v253 = vadd.f32 %v251, %v252
  %v254 = vsel %vm244, %v241, 0.0
  %v255 = vadd.f32 %v253, %v254
  %v256 = vrot.slane %v255, 4
  %v257 = vadd.f32 %v255, %v256
  %v258 = vrot.slane %v257, 2
  %v259 = vadd.f32 %v257, %v258
  %v260 = vrot.slane %v259, 1
  %v261 = vadd.f32 %v259, %v260
  %v262 = vmul.f32 %v226, %v226
  %v263 = vmul.f32 %v231, %v231
  %v264 = vmul.f32 %v236, %v236
  %v265 = vmul.f32 %v241, %v241
  %v266 = vsel %vm244, %v262, 0.0
  %v267 = vsel %vm244, %v263, 0.0
  %v268 = vadd.f32 %v266, %v267
  %v269 = vsel %vm244, %v264, 0.0
  %v270 = vadd.f32 %v268, %v269
  %v271 = vsel %vm244, %v265, 0.0
  %v272 = vadd.f32 %v270, %v271
  %v273 = vrot.slane %v272, 4
  %v274 = vadd.f32 %v272, %v273
  %v275 = vrot.slane %v274, 2
  %v276 = vadd.f32 %v274, %v275
  %v277 = vrot.slane %v276, 1
  %v278 = vadd.f32 %v276, %v277
  %vm279 = vcmask 1040384
  %v280 = vsel %vm279, %v261, %v278
  %vm281 = vcmask 123904
  %282 = vst.msk [vmem:[%s3] sm:$0x3] %vm281, %v280
  // Predicated region
  $region10: #{unet4_forward.26} parent=0 // pred_check
    _
  $region11: #{unet4_forward.26} parent=0 // pred_check_branch
    %284 = sbr.rel (0) target = $region13
  $region12: #{unet4_forward.26} parent=0 // pred_region
    _
  $region13: #{unet4_forward.26} parent=0 // pred_fallthru
    _
  // Predicated region
  $region14: #{unet4_forward.26} parent=0 // pred_check
    _
  $region15: #{unet4_forward.26} parent=0 // pred_check_branch
    %286 = sbr.rel (0) target = $region17
  $region16: #{unet4_forward.26} parent=0 // pred_region
    _
  $region17: #{unet4_forward.26} parent=0 // pred_fallthru
    _
  // Predicated region
  $region18: #{unet4_forward.26} parent=0 // pred_check
    _
  $region19: #{unet4_forward.26} parent=0 // pred_check_branch
    %288 = sbr.rel (0) target = $region21
  $region20: #{unet4_forward.26} parent=0 // pred_region
    _
  $region21: #{unet4_forward.26} parent=0 // pred_fallthru
    _
  // Predicated region
  $region22: #{unet4_forward.26} parent=0 // pred_check
    _
  $region23: #{unet4_forward.26} parent=0 // pred_check_branch
    %290 = sbr.rel (0) target = $region25
  $region24: #{unet4_forward.26} parent=0 // pred_region
    _
  $region25: #{unet4_forward.26} parent=0 // pred_fallthru
    _

// kernel: unet4_forward.28
$region0: #{unet4_forward.28}
  #allocation0 [shape = 'u32[]', space=smem, size = 0x4, offset = 0x4, fixed_abs, tag = 'smem constant byte address 0x4 - core index']
  #allocation1 [shape = 'u32[144,128]{1,0:T(1,128)}', space=vmem, size = 0x12000, scoped, tag = 'internal scratch']
  %s0 = inlined_call_operand.vmem [shape: f32[128,288], index: 0, kind: input, shape index: {}]
  %s1 = inlined_call_operand.vmem [shape: f32[288,16], index: 1, kind: input, shape index: {}]
  %s2 = inlined_call_operand.vmem [shape: f32[128,16], index: 2, kind: output, shape index: {0}]
  %s3 = inlined_call_operand.vmem [shape: f32[1,2,16], index: 3, kind: output, shape index: {1}]
  %4 = xla_tuple %s2, %s3
  %s5 = sld [smem:[#allocation0]]
  $region26: #{unet4_forward.28} parent=0
    _
  %s7 = ssub.s32 1, %s5
  %s8 = scalar_select 0, %s7, %s5
  // Predicated region
  $region2: #{unet4_forward.28} parent=0 // pred_check
    _
  $region3: #{unet4_forward.28} parent=0 // pred_check_branch
    %10 = sbr.rel (0) target = $region5
  $region4: #{unet4_forward.28} parent=0 // pred_region
    _
  $region5: #{unet4_forward.28} parent=0 // pred_fallthru
    _
  // Predicated region
  $region6: #{unet4_forward.28} parent=0 // pred_check
    _
  $region7: #{unet4_forward.28} parent=0 // pred_check_branch
    %12 = sbr.rel (0) target = $region9
  $region8: #{unet4_forward.28} parent=0 // pred_region
    _
  $region9: #{unet4_forward.28} parent=0 // pred_fallthru
    _
  %v13 = vld [vmem:[%s0] sm:$0xff]
  %v14 = vld [vmem:[%s0 + $0x8] sm:$0xff]
  %v15 = vld [vmem:[%s0 + $0x10] sm:$0xff]
  %v16 = vld [vmem:[%s0 + $0x18] sm:$0xff]
  %v17 = vld [vmem:[%s0 + $0x20] sm:$0xff]
  %v18 = vld [vmem:[%s0 + $0x28] sm:$0xff]
  %v19 = vld [vmem:[%s0 + $0x30] sm:$0xff]
  %v20 = vld [vmem:[%s0 + $0x38] sm:$0xff]
  %v21 = vld [vmem:[%s0 + $0x40] sm:$0xff]
  %v22 = vld [vmem:[%s0 + $0x48] sm:$0xff]
  %v23 = vld [vmem:[%s0 + $0x50] sm:$0xff]
  %v24 = vld [vmem:[%s0 + $0x58] sm:$0xff]
  %v25 = vld [vmem:[%s0 + $0x60] sm:$0xff]
  %v26 = vld [vmem:[%s0 + $0x68] sm:$0xff]
  %v27 = vld [vmem:[%s0 + $0x70] sm:$0xff]
  %v28 = vld [vmem:[%s0 + $0x78] sm:$0xff]
  %v29 = vld [vmem:[%s0 + $0x80] sm:$0xff]
  %v30 = vld [vmem:[%s0 + $0x88] sm:$0xff]
  %v31 = vld [vmem:[%s0 + $0x90] sm:$0xff]
  %v32 = vld [vmem:[%s0 + $0x98] sm:$0xff]
  %v33 = vld [vmem:[%s0 + $0xa0] sm:$0xff]
  %v34 = vld [vmem:[%s0 + $0xa8] sm:$0xff]
  %v35 = vld [vmem:[%s0 + $0xb0] sm:$0xff]
  %v36 = vld [vmem:[%s0 + $0xb8] sm:$0xff]
  %v37 = vld [vmem:[%s0 + $0xc0] sm:$0xff]
  %v38 = vld [vmem:[%s0 + $0xc8] sm:$0xff]
  %v39 = vld [vmem:[%s0 + $0xd0] sm:$0xff]
  %v40 = vld [vmem:[%s0 + $0xd8] sm:$0xff]
  %v41 = vld [vmem:[%s0 + $0xe0] sm:$0xff]
  %v42 = vld [vmem:[%s0 + $0xe8] sm:$0xff]
  %v43 = vld [vmem:[%s0 + $0xf0] sm:$0xff]
  %v44 = vld [vmem:[%s0 + $0xf8] sm:$0xff]
  %v45 = vld [vmem:[%s0 + $0x100] sm:$0xff]
  %v46 = vld [vmem:[%s0 + $0x108] sm:$0xff]
  %v47 = vld [vmem:[%s0 + $0x110] sm:$0xff]
  %v48 = vld [vmem:[%s0 + $0x118] sm:$0xff]
  %v49 = vld [vmem:[%s0 + $0x120] sm:$0xff]
  %v50 = vld [vmem:[%s0 + $0x128] sm:$0xff]
  %v51 = vld [vmem:[%s0 + $0x130] sm:$0xff]
  %v52 = vld [vmem:[%s0 + $0x138] sm:$0xff]
  %v53 = vld [vmem:[%s0 + $0x140] sm:$0xff]
  %v54 = vld [vmem:[%s0 + $0x148] sm:$0xff]
  %v55 = vld [vmem:[%s0 + $0x150] sm:$0xff]
  %v56 = vld [vmem:[%s0 + $0x158] sm:$0xff]
  %v57 = vld [vmem:[%s0 + $0x160] sm:$0xff]
  %v58 = vld [vmem:[%s0 + $0x168] sm:$0xff]
  %v59 = vld [vmem:[%s0 + $0x170] sm:$0xff]
  %v60 = vld [vmem:[%s0 + $0x178] sm:$0xff]
  %v61 = vld [vmem:[%s1] sm:$0xff]
  %v62 = vld [vmem:[%s1 + $0x8] sm:$0xff]
  %v63 = vld [vmem:[%s1 + $0x10] sm:$0xff]
  %v64 = vld [vmem:[%s1 + $0x18] sm:$0xff]
  %v65 = vld [vmem:[%s1 + $0x20] sm:$0xff]
  %v66 = vld [vmem:[%s1 + $0x28] sm:$0xff]
  %v67 = vld [vmem:[%s1 + $0x30] sm:$0xff]
  %v68 = vld [vmem:[%s1 + $0x38] sm:$0xff]
  %v69 = vld [vmem:[%s1 + $0x40] sm:$0xff]
  %v70 = vld [vmem:[%s1 + $0x48] sm:$0xff]
  %v71 = vld [vmem:[%s1 + $0x50] sm:$0xff]
  %v72 = vld [vmem:[%s1 + $0x58] sm:$0xff]
  %v73 = vld [vmem:[%s1 + $0x60] sm:$0xff]
  %v74 = vld [vmem:[%s1 + $0x68] sm:$0xff]
  %v75 = vld [vmem:[%s1 + $0x70] sm:$0xff]
  %v76 = vld [vmem:[%s1 + $0x78] sm:$0xff]
  %v77 = vld [vmem:[%s1 + $0x80] sm:$0xff]
  %v78 = vld [vmem:[%s1 + $0x88] sm:$0xff]
  %v79 = vld [vmem:[%s1 + $0x90] sm:$0xff]
  %v80 = vld [vmem:[%s1 + $0x98] sm:$0xff]
  %v81 = vld [vmem:[%s1 + $0xa0] sm:$0xff]
  %v82 = vld [vmem:[%s1 + $0xa8] sm:$0xff]
  %v83 = vld [vmem:[%s1 + $0xb0] sm:$0xff]
  %v84 = vld [vmem:[%s1 + $0xb8] sm:$0xff]
  %v85 = vld [vmem:[%s1 + $0xc0] sm:$0xff]
  %v86 = vld [vmem:[%s1 + $0xc8] sm:$0xff]
  %v87 = vld [vmem:[%s1 + $0xd0] sm:$0xff]
  %v88 = vld [vmem:[%s1 + $0xd8] sm:$0xff]
  %v89 = vld [vmem:[%s1 + $0xe0] sm:$0xff]
  %v90 = vld [vmem:[%s1 + $0xe8] sm:$0xff]
  %v91 = vld [vmem:[%s1 + $0xf0] sm:$0xff]
  %v92 = vld [vmem:[%s1 + $0xf8] sm:$0xff]
  %v93 = vld [vmem:[%s1 + $0x100] sm:$0xff]
  %v94 = vld [vmem:[%s1 + $0x108] sm:$0xff]
  %v95 = vld [vmem:[%s1 + $0x110] sm:$0xff]
  %v96 = vld [vmem:[%s1 + $0x118] sm:$0xff]
  %vm97 = vcmask 261120
  %v99 = vsel %vm97, %v15, 0
  %v102 = vsel %vm97, %v18, 0
  %v105 = vsel %vm97, %v21, 0
  %v108 = vsel %vm97, %v24, 0
  %v111 = vsel %vm97, %v27, 0
  %v114 = vsel %vm97, %v30, 0
  %v117 = vsel %vm97, %v33, 0
  %v120 = vsel %vm97, %v36, 0
  %v123 = vsel %vm97, %v39, 0
  %v126 = vsel %vm97, %v42, 0
  %v129 = vsel %vm97, %v45, 0
  %v132 = vsel %vm97, %v48, 0
  %v135 = vsel %vm97, %v51, 0
  %v138 = vsel %vm97, %v54, 0
  %v141 = vsel %vm97, %v57, 0
  %v144 = vsel %vm97, %v60, 0
  %146 = vmatprep.subr.mxu0 0.0
  %147 = vmatpush1.msra.mxu0 %v61
  %148 = vmatprep.subr.mxu0 0.0
  %149 = vmatpush1.msra.mxu0 %v62
  %150 = vmatprep.subr.mxu0 0.0
  %151 = vmatpush1.msra.mxu0 %v63
  %152 = vmatprep.subr.mxu0 0.0
  %153 = vmatpush1.msra.mxu0 %v64
  %154 = vmatprep.subr.mxu0 0.0
  %155 = vmatpush1.msra.mxu0 %v65
  %156 = vmatprep.subr.mxu0 0.0
  %157 = vmatpush1.msra.mxu0 %v66
  %158 = vmatprep.subr.mxu0 0.0
  %159 = vmatpush1.msra.mxu0 %v67
  %160 = vmatprep.subr.mxu0 0.0
  %161 = vmatpush1.msra.mxu0 %v68
  %162 = vmatprep.subr.mxu0 0.0
  %163 = vmatpush1.msra.mxu0 %v69
  %164 = vmatprep.subr.mxu0 0.0
  %165 = vmatpush1.msra.mxu0 %v70
  %166 = vmatprep.subr.mxu0 0.0
  %167 = vmatpush1.msra.mxu0 %v71
  %168 = vmatprep.subr.mxu0 0.0
  %169 = vmatpush1.msra.mxu0 %v72
  %170 = vmatprep.subr.mxu0 0.0
  %171 = vmatpush1.msra.mxu0 %v73
  %172 = vmatprep.subr.mxu0 0.0
  %173 = vmatpush1.msra.mxu0 %v74
  %174 = vmatprep.subr.mxu0 0.0
  %175 = vmatpush1.msra.mxu0 %v75
  %176 = vmatprep.subr.mxu0 0.0
  %177 = vmatpush1.msra.mxu0 %v76
  %178 = vmatprep.subr.mxu0 0.0
  %179 = vmatpush1.msra.mxu0 %v77
  %180 = vmatprep.subr.mxu0 0.0
  %181 = vmatpush1.msra.mxu0 %v78
  %182 = vmatprep.subr.mxu0 0.0
  %183 = vmatpush1.msra.mxu0 %v79
  %184 = vmatprep.subr.mxu0 0.0
  %185 = vmatpush1.msra.mxu0 %v80
  %186 = vmatprep.subr.mxu0 0.0
  %187 = vmatpush1.msra.mxu0 %v81
  %188 = vmatprep.subr.mxu0 0.0
  %189 = vmatpush1.msra.mxu0 %v82
  %190 = vmatprep.subr.mxu0 0.0
  %191 = vmatpush1.msra.mxu0 %v83
  %192 = vmatprep.subr.mxu0 0.0
  %193 = vmatpush1.msra.mxu0 %v84
  %194 = vmatprep.subr.mxu0 0.0
  %195 = vmatpush1.msra.mxu0 %v85
  %196 = vmatprep.subr.mxu0 0.0
  %197 = vmatpush1.msra.mxu0 %v86
  %198 = vmatprep.subr.mxu0 0.0
  %199 = vmatpush1.msra.mxu0 %v87
  %200 = vmatprep.subr.mxu0 0.0
  %201 = vmatpush1.msra.mxu0 %v88
  %202 = vmatprep.subr.mxu0 0.0
  %203 = vmatpush1.msra.mxu0 %v89
  %204 = vmatprep.subr.mxu0 0.0
  %205 = vmatpush1.msra.mxu0 %v90
  %206 = vmatprep.subr.mxu0 0.0
  %207 = vmatpush1.msra.mxu0 %v91
  %208 = vmatprep.subr.mxu0 0.0
  %209 = vmatpush1.msra.mxu0 %v92
  %210 = vmatprep.mubr.f32.mxu0 %v14
  %211 = vmatmul.mubr.f32.gmra.mrb[0].mxu0 %v13
  %v212 = vpop.f32.mrb[0].mxu0
  %v213 = vadd.f32 0.0, %v212
  %v214 = vpop.f32.mrb[0].mxu0
  %215 = vmatprep.mubr.f32.mxu0 %v17
  %216 = vmatmul.mubr.f32.gmra.mrb[0].mxu0 %v16
  %v217 = vpop.f32.mrb[0].mxu0
  %v218 = vadd.f32 0.0, %v217
  %v219 = vpop.f32.mrb[0].mxu0
  %220 = vmatprep.mubr.f32.mxu0 %v20
  %221 = vmatmul.mubr.f32.gmra.mrb[0].mxu0 %v19
  %v222 = vpop.f32.mrb[0].mxu0
  %v223 = vadd.f32 0.0, %v222
  %v224 = vpop.f32.mrb[0].mxu0
  %225 = vmatprep.mubr.f32.mxu0 %v23
  %226 = vmatmul.mubr.f32.gmra.mrb[0].mxu0 %v22
  %v227 = vpop.f32.mrb[0].mxu0
  %v228 = vadd.f32 0.0, %v227
  %v229 = vpop.f32.mrb[0].mxu0
  %230 = vmatprep.mubr.f32.mxu0 %v26
  %231 = vmatmul.mubr.f32.gmra.mrb[0].mxu0 %v25
  %v232 = vpop.f32.mrb[0].mxu0
  %v233 = vadd.f32 0.0, %v232
  %v234 = vpop.f32.mrb[0].mxu0
  %235 = vmatprep.mubr.f32.mxu0 %v29
  %236 = vmatmul.mubr.f32.gmra.mrb[0].mxu0 %v28
  %v237 = vpop.f32.mrb[0].mxu0
  %v238 = vadd.f32 0.0, %v237
  %v239 = vpop.f32.mrb[0].mxu0
  %240 = vmatprep.mubr.f32.mxu0 %v32
  %241 = vmatmul.mubr.f32.gmra.mrb[0].mxu0 %v31
  %v242 = vpop.f32.mrb[0].mxu0
  %v243 = vadd.f32 0.0, %v242
  %v244 = vpop.f32.mrb[0].mxu0
  %245 = vmatprep.mubr.f32.mxu0 %v35
  %246 = vmatmul.mubr.f32.gmra.mrb[0].mxu0 %v34
  %v247 = vpop.f32.mrb[0].mxu0
  %v248 = vadd.f32 0.0, %v247
  %v249 = vpop.f32.mrb[0].mxu0
  %250 = vmatprep.mubr.f32.mxu0 %v38
  %251 = vmatmul.mubr.f32.gmra.mrb[0].mxu0 %v37
  %v252 = vpop.f32.mrb[0].mxu0
  %v253 = vadd.f32 0.0, %v252
  %v254 = vpop.f32.mrb[0].mxu0
  %255 = vmatprep.mubr.f32.mxu0 %v41
  %256 = vmatmul.mubr.f32.gmra.mrb[0].mxu0 %v40
  %v257 = vpop.f32.mrb[0].mxu0
  %v258 = vadd.f32 0.0, %v257
  %v259 = vpop.f32.mrb[0].mxu0
  %260 = vmatprep.mubr.f32.mxu0 %v44
  %261 = vmatmul.mubr.f32.gmra.mrb[0].mxu0 %v43
  %v262 = vpop.f32.mrb[0].mxu0
  %v263 = vadd.f32 0.0, %v262
  %v264 = vpop.f32.mrb[0].mxu0
  %265 = vmatprep.mubr.f32.mxu0 %v47
  %266 = vmatmul.mubr.f32.gmra.mrb[0].mxu0 %v46
  %v267 = vpop.f32.mrb[0].mxu0
  %v268 = vadd.f32 0.0, %v267
  %v269 = vpop.f32.mrb[0].mxu0
  %270 = vmatprep.mubr.f32.mxu0 %v50
  %271 = vmatmul.mubr.f32.gmra.mrb[0].mxu0 %v49
  %v272 = vpop.f32.mrb[0].mxu0
  %v273 = vadd.f32 0.0, %v272
  %v274 = vpop.f32.mrb[0].mxu0
  %275 = vmatprep.mubr.f32.mxu0 %v53
  %276 = vmatmul.mubr.f32.gmra.mrb[0].mxu0 %v52
  %v277 = vpop.f32.mrb[0].mxu0
  %v278 = vadd.f32 0.0, %v277
  %v279 = vpop.f32.mrb[0].mxu0
  %280 = vmatprep.mubr.f32.mxu0 %v56
  %281 = vmatmul.mubr.f32.gmra.mrb[0].mxu0 %v55
  %v282 = vpop.f32.mrb[0].mxu0
  %v283 = vadd.f32 0.0, %v282
  %v284 = vpop.f32.mrb[0].mxu0
  %285 = vmatprep.mubr.f32.mxu0 %v59
  %286 = vmatmul.mubr.f32.gmra.mrb[0].mxu0 %v58
  %v287 = vpop.f32.mrb[0].mxu0
  %v288 = vadd.f32 0.0, %v287
  %v289 = vpop.f32.mrb[0].mxu0
  %290 = vdwg.mxu0
  %291 = vmatprep.subr.mxu0 0.0
  %292 = vmatpush1.msra.mxu0 %v93
  %293 = vmatprep.subr.mxu0 0.0
  %294 = vmatpush1.msra.mxu0 %v94
  %295 = vmatprep.subr.mxu0 0.0
  %296 = vmatpush1.msra.mxu0 %v95
  %297 = vmatprep.subr.mxu0 0.0
  %298 = vmatpush1.msra.mxu0 %v96
  %299 = vmatprep.subr.mxu0 0.0
  %300 = vmatpush1.msra.mxu0 0.0
  %301 = vmatprep.subr.mxu0 0.0
  %302 = vmatpush1.msra.mxu0 0.0
  %303 = vmatprep.subr.mxu0 0.0
  %304 = vmatpush1.msra.mxu0 0.0
  %305 = vmatprep.subr.mxu0 0.0
  %306 = vmatpush1.msra.mxu0 0.0
  %307 = vmatprep.subr.mxu0 0.0
  %308 = vmatpush1.msra.mxu0 0.0
  %309 = vmatprep.subr.mxu0 0.0
  %310 = vmatpush1.msra.mxu0 0.0
  %311 = vmatprep.subr.mxu0 0.0
  %312 = vmatpush1.msra.mxu0 0.0
  %313 = vmatprep.subr.mxu0 0.0
  %314 = vmatpush1.msra.mxu0 0.0
  %315 = vmatprep.subr.mxu0 0.0
  %316 = vmatpush1.msra.mxu0 0.0
  %317 = vmatprep.subr.mxu0 0.0
  %318 = vmatpush1.msra.mxu0 0.0
  %319 = vmatprep.subr.mxu0 0.0
  %320 = vmatpush1.msra.mxu0 0.0
  %321 = vmatprep.subr.mxu0 0.0
  %322 = vmatpush1.msra.mxu0 0.0
  %323 = vmatprep.subr.mxu0 0.0
  %324 = vmatpush1.msra.mxu0 0.0
  %325 = vmatprep.subr.mxu0 0.0
  %326 = vmatpush1.msra.mxu0 0.0
  %327 = vmatprep.subr.mxu0 0.0
  %328 = vmatpush1.msra.mxu0 0.0
  %329 = vmatprep.subr.mxu0 0.0
  %330 = vmatpush1.msra.mxu0 0.0
  %331 = vmatprep.subr.mxu0 0.0
  %332 = vmatpush1.msra.mxu0 0.0
  %333 = vmatprep.subr.mxu0 0.0
  %334 = vmatpush1.msra.mxu0 0.0
  %335 = vmatprep.subr.mxu0 0.0
  %336 = vmatpush1.msra.mxu0 0.0
  %337 = vmatprep.subr.mxu0 0.0
  %338 = vmatpush1.msra.mxu0 0.0
  %339 = vmatprep.subr.mxu0 0.0
  %340 = vmatpush1.msra.mxu0 0.0
  %341 = vmatprep.subr.mxu0 0.0
  %342 = vmatpush1.msra.mxu0 0.0
  %343 = vmatprep.subr.mxu0 0.0
  %344 = vmatpush1.msra.mxu0 0.0
  %345 = vmatprep.subr.mxu0 0.0
  %346 = vmatpush1.msra.mxu0 0.0
  %347 = vmatprep.subr.mxu0 0.0
  %348 = vmatpush1.msra.mxu0 0.0
  %349 = vmatprep.subr.mxu0 0.0
  %350 = vmatpush1.msra.mxu0 0.0
  %351 = vmatprep.subr.mxu0 0.0
  %352 = vmatpush1.msra.mxu0 0.0
  %353 = vmatprep.subr.mxu0 0.0
  %354 = vmatpush1.msra.mxu0 0.0
  %355 = vmatprep.mubr.f32.mxu0 0.0
  %356 = vmatmul.mubr.f32.gmra.mrb[0].mxu0 %v99
  %v357 = vpop.f32.mrb[0].mxu0
  %v358 = vadd.f32 %v213, %v357
  %v359 = vpop.f32.mrb[0].mxu0
  %360 = vmatprep.mubr.f32.mxu0 0.0
  %361 = vmatmul.mubr.f32.gmra.mrb[0].mxu0 %v102
  %v362 = vpop.f32.mrb[0].mxu0
  %v363 = vadd.f32 %v218, %v362
  %v364 = vpop.f32.mrb[0].mxu0
  %365 = vmatprep.mubr.f32.mxu0 0.0
  %366 = vmatmul.mubr.f32.gmra.mrb[0].mxu0 %v105
  %v367 = vpop.f32.mrb[0].mxu0
  %v368 = vadd.f32 %v223, %v367
  %v369 = vpop.f32.mrb[0].mxu0
  %370 = vmatprep.mubr.f32.mxu0 0.0
  %371 = vmatmul.mubr.f32.gmra.mrb[0].mxu0 %v108
  %v372 = vpop.f32.mrb[0].mxu0
  %v373 = vadd.f32 %v228, %v372
  %v374 = vpop.f32.mrb[0].mxu0
  %375 = vmatprep.mubr.f32.mxu0 0.0
  %376 = vmatmul.mubr.f32.gmra.mrb[0].mxu0 %v111
  %v377 = vpop.f32.mrb[0].mxu0
  %v378 = vadd.f32 %v233, %v377
  %v379 = vpop.f32.mrb[0].mxu0
  %380 = vmatprep.mubr.f32.mxu0 0.0
  %381 = vmatmul.mubr.f32.gmra.mrb[0].mxu0 %v114
  %v382 = vpop.f32.mrb[0].mxu0
  %v383 = vadd.f32 %v238, %v382
  %v384 = vpop.f32.mrb[0].mxu0
  %385 = vmatprep.mubr.f32.mxu0 0.0
  %386 = vmatmul.mubr.f32.gmra.mrb[0].mxu0 %v117
  %v387 = vpop.f32.mrb[0].mxu0
  %v388 = vadd.f32 %v243, %v387
  %v389 = vpop.f32.mrb[0].mxu0
  %390 = vmatprep.mubr.f32.mxu0 0.0
  %391 = vmatmul.mubr.f32.gmra.mrb[0].mxu0 %v120
  %v392 = vpop.f32.mrb[0].mxu0
  %v393 = vadd.f32 %v248, %v392
  %v394 = vpop.f32.mrb[0].mxu0
  %395 = vmatprep.mubr.f32.mxu0 0.0
  %396 = vmatmul.mubr.f32.gmra.mrb[0].mxu0 %v123
  %v397 = vpop.f32.mrb[0].mxu0
  %v398 = vadd.f32 %v253, %v397
  %v399 = vpop.f32.mrb[0].mxu0
  %400 = vmatprep.mubr.f32.mxu0 0.0
  %401 = vmatmul.mubr.f32.gmra.mrb[0].mxu0 %v126
  %v402 = vpop.f32.mrb[0].mxu0
  %v403 = vadd.f32 %v258, %v402
  %v404 = vpop.f32.mrb[0].mxu0
  %405 = vmatprep.mubr.f32.mxu0 0.0
  %406 = vmatmul.mubr.f32.gmra.mrb[0].mxu0 %v129
  %v407 = vpop.f32.mrb[0].mxu0
  %v408 = vadd.f32 %v263, %v407
  %v409 = vpop.f32.mrb[0].mxu0
  %410 = vmatprep.mubr.f32.mxu0 0.0
  %411 = vmatmul.mubr.f32.gmra.mrb[0].mxu0 %v132
  %v412 = vpop.f32.mrb[0].mxu0
  %v413 = vadd.f32 %v268, %v412
  %v414 = vpop.f32.mrb[0].mxu0
  %415 = vmatprep.mubr.f32.mxu0 0.0
  %416 = vmatmul.mubr.f32.gmra.mrb[0].mxu0 %v135
  %v417 = vpop.f32.mrb[0].mxu0
  %v418 = vadd.f32 %v273, %v417
  %v419 = vpop.f32.mrb[0].mxu0
  %420 = vmatprep.mubr.f32.mxu0 0.0
  %421 = vmatmul.mubr.f32.gmra.mrb[0].mxu0 %v138
  %v422 = vpop.f32.mrb[0].mxu0
  %v423 = vadd.f32 %v278, %v422
  %v424 = vpop.f32.mrb[0].mxu0
  %425 = vmatprep.mubr.f32.mxu0 0.0
  %426 = vmatmul.mubr.f32.gmra.mrb[0].mxu0 %v141
  %v427 = vpop.f32.mrb[0].mxu0
  %v428 = vadd.f32 %v283, %v427
  %v429 = vpop.f32.mrb[0].mxu0
  %430 = vmatprep.mubr.f32.mxu0 0.0
  %431 = vmatmul.mubr.f32.gmra.mrb[0].mxu0 %v144
  %v432 = vpop.f32.mrb[0].mxu0
  %v433 = vadd.f32 %v288, %v432
  %v434 = vpop.f32.mrb[0].mxu0
  %435 = vdwg.mxu0
  %vm436 = vcmask 130048
  %437 = vst.msk [vmem:[%s2] sm:$0xff] %vm436, %v358
  %438 = vst.msk [vmem:[%s2 + $0x8] sm:$0xff] %vm436, %v363
  %439 = vst.msk [vmem:[%s2 + $0x10] sm:$0xff] %vm436, %v368
  %440 = vst.msk [vmem:[%s2 + $0x18] sm:$0xff] %vm436, %v373
  %441 = vst.msk [vmem:[%s2 + $0x20] sm:$0xff] %vm436, %v378
  %442 = vst.msk [vmem:[%s2 + $0x28] sm:$0xff] %vm436, %v383
  %443 = vst.msk [vmem:[%s2 + $0x30] sm:$0xff] %vm436, %v388
  %444 = vst.msk [vmem:[%s2 + $0x38] sm:$0xff] %vm436, %v393
  %445 = vst.msk [vmem:[%s2 + $0x40] sm:$0xff] %vm436, %v398
  %446 = vst.msk [vmem:[%s2 + $0x48] sm:$0xff] %vm436, %v403
  %447 = vst.msk [vmem:[%s2 + $0x50] sm:$0xff] %vm436, %v408
  %448 = vst.msk [vmem:[%s2 + $0x58] sm:$0xff] %vm436, %v413
  %449 = vst.msk [vmem:[%s2 + $0x60] sm:$0xff] %vm436, %v418
  %450 = vst.msk [vmem:[%s2 + $0x68] sm:$0xff] %vm436, %v423
  %451 = vst.msk [vmem:[%s2 + $0x70] sm:$0xff] %vm436, %v428
  %452 = vst.msk [vmem:[%s2 + $0x78] sm:$0xff] %vm436, %v433
  %v453 = vsel %vm436, %v358, 0.0
  %v454 = vsel %vm436, %v363, 0.0
  %v455 = vadd.f32 %v453, %v454
  %v456 = vsel %vm436, %v368, 0.0
  %v457 = vadd.f32 %v455, %v456
  %v458 = vsel %vm436, %v373, 0.0
  %v459 = vadd.f32 %v457, %v458
  %v460 = vsel %vm436, %v378, 0.0
  %v461 = vadd.f32 %v459, %v460
  %v462 = vsel %vm436, %v383, 0.0
  %v463 = vadd.f32 %v461, %v462
  %v464 = vsel %vm436, %v388, 0.0
  %v465 = vadd.f32 %v463, %v464
  %v466 = vsel %vm436, %v393, 0.0
  %v467 = vadd.f32 %v465, %v466
  %v468 = vsel %vm436, %v398, 0.0
  %v469 = vadd.f32 %v467, %v468
  %v470 = vsel %vm436, %v403, 0.0
  %v471 = vadd.f32 %v469, %v470
  %v472 = vsel %vm436, %v408, 0.0
  %v473 = vadd.f32 %v471, %v472
  %v474 = vsel %vm436, %v413, 0.0
  %v475 = vadd.f32 %v473, %v474
  %v476 = vsel %vm436, %v418, 0.0
  %v477 = vadd.f32 %v475, %v476
  %v478 = vsel %vm436, %v423, 0.0
  %v479 = vadd.f32 %v477, %v478
  %v480 = vsel %vm436, %v428, 0.0
  %v481 = vadd.f32 %v479, %v480
  %v482 = vsel %vm436, %v433, 0.0
  %v483 = vadd.f32 %v481, %v482
  %v484 = vrot.slane %v483, 4
  %v485 = vadd.f32 %v483, %v484
  %v486 = vrot.slane %v485, 2
  %v487 = vadd.f32 %v485, %v486
  %v488 = vrot.slane %v487, 1
  %v489 = vadd.f32 %v487, %v488
  %v490 = vmul.f32 %v358, %v358
  %v491 = vmul.f32 %v363, %v363
  %v492 = vmul.f32 %v368, %v368
  %v493 = vmul.f32 %v373, %v373
  %v494 = vmul.f32 %v378, %v378
  %v495 = vmul.f32 %v383, %v383
  %v496 = vmul.f32 %v388, %v388
  %v497 = vmul.f32 %v393, %v393
  %v498 = vmul.f32 %v398, %v398
  %v499 = vmul.f32 %v403, %v403
  %v500 = vmul.f32 %v408, %v408
  %v501 = vmul.f32 %v413, %v413
  %v502 = vmul.f32 %v418, %v418
  %v503 = vmul.f32 %v423, %v423
  %v504 = vmul.f32 %v428, %v428
  %v505 = vmul.f32 %v433, %v433
  %v506 = vsel %vm436, %v490, 0.0
  %v507 = vsel %vm436, %v491, 0.0
  %v508 = vadd.f32 %v506, %v507
  %v509 = vsel %vm436, %v492, 0.0
  %v510 = vadd.f32 %v508, %v509
  %v511 = vsel %vm436, %v493, 0.0
  %v512 = vadd.f32 %v510, %v511
  %v513 = vsel %vm436, %v494, 0.0
  %v514 = vadd.f32 %v512, %v513
  %v515 = vsel %vm436, %v495, 0.0
  %v516 = vadd.f32 %v514, %v515
  %v517 = vsel %vm436, %v496, 0.0
  %v518 = vadd.f32 %v516, %v517
  %v519 = vsel %vm436, %v497, 0.0
  %v520 = vadd.f32 %v518, %v519
  %v521 = vsel %vm436, %v498, 0.0
  %v522 = vadd.f32 %v520, %v521
  %v523 = vsel %vm436, %v499, 0.0
  %v524 = vadd.f32 %v522, %v523
  %v525 = vsel %vm436, %v500, 0.0
  %v526 = vadd.f32 %v524, %v525
  %v527 = vsel %vm436, %v501, 0.0
  %v528 = vadd.f32 %v526, %v527
  %v529 = vsel %vm436, %v502, 0.0
  %v530 = vadd.f32 %v528, %v529
  %v531 = vsel %vm436, %v503, 0.0
  %v532 = vadd.f32 %v530, %v531
  %v533 = vsel %vm436, %v504, 0.0
  %v534 = vadd.f32 %v532, %v533
  %v535 = vsel %vm436, %v505, 0.0
  %v536 = vadd.f32 %v534, %v535
  %v537 = vrot.slane %v536, 4
  %v538 = vadd.f32 %v536, %v537
  %v539 = vrot.slane %v538, 2
  %v540 = vadd.f32 %v538, %v539
  %v541 = vrot.slane %v540, 1
  %v542 = vadd.f32 %v540, %v541
  %vm543 = vcmask 1040384
  %v544 = vsel %vm543, %v489, %v542
  %vm545 = vcmask 123904
  %546 = vst.msk [vmem:[%s3] sm:$0x3] %vm545, %v544
  // Predicated region
  $region10: #{unet4_forward.28} parent=0 // pred_check
    _
  $region11: #{unet4_forward.28} parent=0 // pred_check_branch
    %548 = sbr.rel (0) target = $region13
  $region12: #{unet4_forward.28} parent=0 // pred_region
    _
  $region13: #{unet4_forward.28} parent=0 // pred_fallthru
    _
  // Predicated region
  $region14: #{unet4_forward.28} parent=0 // pred_check
    _
  $region15: #{unet4_forward.28} parent=0 // pred_check_branch
    %550 = sbr.rel (0) target = $region17
  $region16: #{unet4_forward.28} parent=0 // pred_region
    _
  $region17: #{unet4_forward.28} parent=0 // pred_fallthru
    _
  // Predicated region
  $region18: #{unet4_forward.28} parent=0 // pred_check
    _
  $region19: #{unet4_forward.28} parent=0 // pred_check_branch
    %552 = sbr.rel (0) target = $region21
  $region20: #{unet4_forward.28} parent=0 // pred_region
    _
  $region21: #{unet4_forward.28} parent=0 // pred_fallthru
    _
  // Predicated region
  $region22: #{unet4_forward.28} parent=0 // pred_check
    _
  $region23: #{unet4_forward.28} parent=0 // pred_check_branch
    %554 = sbr.rel (0) target = $region25
  $region24: #{unet4_forward.28} parent=0 // pred_region
    _
  $region25: #{unet4_forward.28} parent=0 // pred_fallthru
    _

// kernel: unet4_forward.30
$region0: #{unet4_forward.30}
  #allocation0 [shape = 'u32[]', space=smem, size = 0x4, offset = 0x4, fixed_abs, tag = 'smem constant byte address 0x4 - core index']
  #allocation1 [shape = 'u32[144,128]{1,0:T(1,128)}', space=vmem, size = 0x12000, scoped, tag = 'internal scratch']
  %s0 = inlined_call_operand.vmem [shape: f32[512,288], index: 0, kind: input, shape index: {}]
  %s1 = inlined_call_operand.vmem [shape: f32[288,8], index: 1, kind: input, shape index: {}]
  %s2 = inlined_call_operand.vmem [shape: f32[512,8], index: 2, kind: output, shape index: {0}]
  %s3 = inlined_call_operand.vmem [shape: f32[2,2,8], index: 3, kind: output, shape index: {1}]
  %4 = xla_tuple %s2, %s3
  %s5 = sld [smem:[#allocation0]]
  $region49: #{unet4_forward.30} parent=0
    _
  %s7 = ssub.s32 1, %s5
  %s8 = scalar_select 0, %s7, %s5
  loop: start=0, step=1, limit=4
  $region2: #{unet4_forward.30} parent=0 // loop_pre_header
    _
  $region3: #{unet4_forward.30} parent=0 // loop_header
    %s10 = sphi 0, %s14
    %p11 = scmp.ge.s32.totalorder %s10, 4
    %s20 = sphi 0, %s22
    %s23 = sphi 0, %s20
    %s24 = sphi 0, %s23
    %s40 = sphi 0, %s24
    %s44 = sphi 0, %s44
    %s46 = sphi 0, %s44
    %s47 = sphi 0, %s46
    %s61 = sphi 0, %s47
    %s67 = sphi 0, %s69
    %s70 = sphi 0, %s67
    %s71 = sphi 0, %s70
    %s87 = sphi 0, %s71
    %s93 = sphi 0, %s95
    %s96 = sphi 0, %s93
    %s97 = sphi 0, %s96
    %s113 = sphi 0, %s97
  $region4: #{unet4_forward.30} parent=0 // loop_header_branch
    %13 = sbr.rel (%p11) target = $region8
  $region5: #{unet4_forward.30} parent=0 // loop_body
    %s15 = ssub.s32 %s10, 1
    %s16 = ssub.s32 %s10, 2
    %s17 = sadd.s32 %s10, 1
    %s18 = ssub.s32 %s10, %s17
    %p19 = scmp.eq.s32.totalorder %s18, 0
    %s21 = sadd.s32 %s20, 1
    %s22 = scalar_select %p19, %s20, %s21
    %p25 = pneg %p19
    %p26 = scmp.eq.s32.totalorder %s10, 1
    %p27 = por %p25, %p26
    %p28 = scmp.ne.s32.totalorder %s20, %s23
    %p29 = scmp.eq.s32.totalorder %s10, 0
    %p30 = por %p28, %p29
    %p31 = scmp.ne.s32.totalorder %s20, %s23
    %p32 = scmp.eq.s32.totalorder %s15, 1
    %p33 = por %p31, %p32
    %p34 = scmp.ne.s32.totalorder %s23, %s24
    %p35 = scmp.eq.s32.totalorder %s15, 0
    %p36 = por %p34, %p35
    %p37 = scmp.ne.s32.totalorder %s23, %s24
    %p38 = scmp.eq.s32.totalorder %s16, 1
    %p39 = por %p37, %p38
    %p41 = scmp.ne.s32.totalorder %s24, %s40
    %p42 = scmp.eq.s32.totalorder %s16, 0
    %p43 = por %p41, %p42
    %s45 = sadd.s32 %s44, 1
    %p48 = scmp.eq.s32.totalorder %s10, 1
    %p49 = scmp.ne.s32.totalorder %s44, %s46
    %p50 = scmp.eq.s32.totalorder %s10, 0
    %p51 = por %p49, %p50
    %p52 = scmp.ne.s32.totalorder %s44, %s46
    %p53 = scmp.eq.s32.totalorder %s15, 1
    %p54 = por %p52, %p53
    %p55 = scmp.ne.s32.totalorder %s46, %s47
    %p56 = scmp.eq.s32.totalorder %s15, 0
    %p57 = por %p55, %p56
    %p58 = scmp.ne.s32.totalorder %s46, %s47
    %p59 = scmp.eq.s32.totalorder %s16, 1
    %p60 = por %p58, %p59
    %p62 = scmp.ne.s32.totalorder %s47, %s61
    %p63 = scmp.eq.s32.totalorder %s16, 0
    %p64 = por %p62, %p63
    %s65 = ssub.s32 %s10, %s17
    %p66 = scmp.eq.s32.totalorder %s65, 0
    %s68 = sadd.s32 %s67, 1
    %s69 = scalar_select %p66, %s67, %s68
    %p72 = pneg %p66
    %p73 = scmp.eq.s32.totalorder %s10, 1
    %p74 = por %p72, %p73
    %p75 = scmp.ne.s32.totalorder %s67, %s70
    %p76 = scmp.eq.s32.totalorder %s10, 0
    %p77 = por %p75, %p76
    %p78 = scmp.ne.s32.totalorder %s67, %s70
    %p79 = scmp.eq.s32.totalorder %s15, 1
    %p80 = por %p78, %p79
    %p81 = scmp.ne.s32.totalorder %s70, %s71
    %p82 = scmp.eq.s32.totalorder %s15, 0
    %p83 = por %p81, %p82
    %p84 = scmp.ne.s32.totalorder %s70, %s71
    %p85 = scmp.eq.s32.totalorder %s16, 1
    %p86 = por %p84, %p85
    %p88 = scmp.ne.s32.totalorder %s71, %s87
    %p89 = scmp.eq.s32.totalorder %s16, 0
    %p90 = por %p88, %p89
    %s91 = ssub.s32 %s10, %s17
    %p92 = scmp.eq.s32.totalorder %s91, 0
    %s94 = sadd.s32 %s93, 1
    %s95 = scalar_select %p92, %s93, %s94
    %p98 = pneg %p92
    %p99 = scmp.eq.s32.totalorder %s10, 1
    %p100 = por %p98, %p99
    %p101 = scmp.ne.s32.totalorder %s93, %s96
    %p102 = scmp.eq.s32.totalorder %s10, 0
    %p103 = por %p101, %p102
    %p104 = scmp.ne.s32.totalorder %s93, %s96
    %p105 = scmp.eq.s32.totalorder %s15, 1
    %p106 = por %p104, %p105
    %p107 = scmp.ne.s32.totalorder %s96, %s97
    %p108 = scmp.eq.s32.totalorder %s15, 0
    %p109 = por %p107, %p108
    %p110 = scmp.ne.s32.totalorder %s96, %s97
    %p111 = scmp.eq.s32.totalorder %s16, 1
    %p112 = por %p110, %p111
    %p114 = scmp.ne.s32.totalorder %s97, %s113
    %p115 = scmp.eq.s32.totalorder %s16, 0
    %p116 = por %p114, %p115
    %p117 = scmp.le.s32.totalorder 1, %s10
    %p118 = scmp.lt.s32.totalorder %s10, 3
    %p119 = pnand %p117, %p118
    %p120 = pneg %p119
    // Predicated region
    $region9: #{unet4_forward.30} parent=5 // pred_check
      _
    $region10: #{unet4_forward.30} parent=5 // pred_check_branch
      %122 = sbr.rel (%p119) target = $region12
    $region11: #{unet4_forward.30} parent=5 // pred_region
      %s123 = ssub.s32 %s10, 1
      // Predicated region
      $region13: #{unet4_forward.30} parent=11 // pred_check
        %p124 = pneg %p57
      $region14: #{unet4_forward.30} parent=11 // pred_check_branch
        %126 = sbr.rel (%p124) target = $region16
      $region15: #{unet4_forward.30} parent=11 // pred_region
        _
      $region16: #{unet4_forward.30} parent=11 // pred_fallthru
        _
    $region12: #{unet4_forward.30} parent=5 // pred_fallthru
      _
    %p127 = scmp.lt.s32.totalorder %s10, 2
    // Predicated region
    $region17: #{unet4_forward.30} parent=5 // pred_check
      %p128 = pneg %p127
    $region18: #{unet4_forward.30} parent=5 // pred_check_branch
      %130 = sbr.rel (%p128) target = $region20
    $region19: #{unet4_forward.30} parent=5 // pred_region
      // Predicated region
      $region21: #{unet4_forward.30} parent=19 // pred_check
        %p131 = pneg %p30
      $region22: #{unet4_forward.30} parent=19 // pred_check_branch
        %133 = sbr.rel (%p131) target = $region24
      $region23: #{unet4_forward.30} parent=19 // pred_region
        %s134 = smul.u32 32, %s10
        %p135 = scmp.lt.s32.totalorder %s134, 63
        %s136 = scalar_select %p135, %s134, 63
        %s137 = smul.addr %s136, 3
        %s138 = smul.addr %s137, 8
        %s139 = scalar_lea.vmem %s0, %s138
        %s140 = smul.u32 32, %s10
      $region24: #{unet4_forward.30} parent=19 // pred_fallthru
        _
    $region20: #{unet4_forward.30} parent=5 // pred_fallthru
      _
    %p141 = scmp.le.s32.totalorder 1, %s10
    %p142 = scmp.lt.s32.totalorder %s10, 3
    %p143 = pnand %p141, %p142
    %p144 = pneg %p143
    // Predicated region
    $region25: #{unet4_forward.30} parent=5 // pred_check
      _
    $region26: #{unet4_forward.30} parent=5 // pred_check_branch
      %146 = sbr.rel (%p143) target = $region28
    $region27: #{unet4_forward.30} parent=5 // pred_region
      %s147 = ssub.s32 %s10, 1
      %s148 = smul.u32 32, %s15
      %p149 = scmp.lt.s32.totalorder %s148, 63
      %s150 = scalar_select %p149, %s148, 63
      %s151 = smul.addr %s150, 3
      %s152 = smul.addr %s151, 8
      %s153 = scalar_lea.vmem %s0, %s152
      %p154 = pneg %p36
      %p155 = pneg %p33
      %p156 = pneg %p57
      %p157 = pneg %p54
      %p158 = pneg %p83
      %p159 = pneg %p80
      %s160 = smul.u32 32, %s15
      %p161 = scmp.lt.s32.totalorder %s160, 63
      %s162 = scalar_select %p161, %s160, 63
      %s163 = smul.addr %s162, 8
      %s164 = scalar_lea.vmem %s2, %s163
      %p165 = pneg %p109
      %p166 = pneg %p106
      %p167 = scmp.lt.s32.totalorder %s15, 1
      %s168 = scalar_select %p167, %s15, 1
      %s169 = smul.addr %s168, 2
      %s170 = scalar_lea.vmem %s3, %s169
      %s171 = smul.u32 32, %s15
      %p172 = scmp.lt.s32.totalorder %s171, 63
      %s173 = scalar_select %p172, %s171, 63
      %s174 = smul.addr %s173, 3
      %s175 = smul.addr %s174, 8
      %s176 = scalar_lea.vmem %s0, %s175
      %s177 = smul.u32 32, %s15
      %s178 = smul.u32 32, %s15
      %p179 = scmp.lt.s32.totalorder %s178, 63
      %s180 = scalar_select %p179, %s178, 63
      %s181 = smul.addr %s180, 8
      %s182 = scalar_lea.vmem %s2, %s181
      %s183 = smul.u32 32, %s15
      %p184 = scmp.lt.s32.totalorder %s15, 1
      %s185 = scalar_select %p184, %s15, 1
      %s186 = smul.addr %s185, 2
      %s187 = scalar_lea.vmem %s3, %s186
      %v188 = vld [vmem:[%s176] sm:$0xff]
      %v189 = vld [vmem:[%s176 + $0x8] sm:$0xff]
      %v190 = vld [vmem:[%s176 + $0x10] sm:$0xff]
      %v191 = vld [vmem:[%s176 + $0x18] sm:$0xff]
      %v192 = vld [vmem:[%s176 + $0x20] sm:$0xff]
      %v193 = vld [vmem:[%s176 + $0x28] sm:$0xff]
      %v194 = vld [vmem:[%s176 + $0x30] sm:$0xff]
      %v195 = vld [vmem:[%s176 + $0x38] sm:$0xff]
      %v196 = vld [vmem:[%s176 + $0x40] sm:$0xff]
      %v197 = vld [vmem:[%s176 + $0x48] sm:$0xff]
      %v198 = vld [vmem:[%s176 + $0x50] sm:$0xff]
      %v199 = vld [vmem:[%s176 + $0x58] sm:$0xff]
      %v200 = vld [vmem:[%s176 + $0x60] sm:$0xff]
      %v201 = vld [vmem:[%s176 + $0x68] sm:$0xff]
      %v202 = vld [vmem:[%s176 + $0x70] sm:$0xff]
      %v203 = vld [vmem:[%s176 + $0x78] sm:$0xff]
      %v204 = vld [vmem:[%s176 + $0x80] sm:$0xff]
      %v205 = vld [vmem:[%s176 + $0x88] sm:$0xff]
      %v206 = vld [vmem:[%s176 + $0x90] sm:$0xff]
      %v207 = vld [vmem:[%s176 + $0x98] sm:$0xff]
      %v208 = vld [vmem:[%s176 + $0xa0] sm:$0xff]
      %v209 = vld [vmem:[%s176 + $0xa8] sm:$0xff]
      %v210 = vld [vmem:[%s176 + $0xb0] sm:$0xff]
      %v211 = vld [vmem:[%s176 + $0xb8] sm:$0xff]
      %v212 = vld [vmem:[%s176 + $0xc0] sm:$0xff]
      %v213 = vld [vmem:[%s176 + $0xc8] sm:$0xff]
      %v214 = vld [vmem:[%s176 + $0xd0] sm:$0xff]
      %v215 = vld [vmem:[%s176 + $0xd8] sm:$0xff]
      %v216 = vld [vmem:[%s176 + $0xe0] sm:$0xff]
      %v217 = vld [vmem:[%s176 + $0xe8] sm:$0xff]
      %v218 = vld [vmem:[%s176 + $0xf0] sm:$0xff]
      %v219 = vld [vmem:[%s176 + $0xf8] sm:$0xff]
      %v220 = vld [vmem:[%s176 + $0x100] sm:$0xff]
      %v221 = vld [vmem:[%s176 + $0x108] sm:$0xff]
      %v222 = vld [vmem:[%s176 + $0x110] sm:$0xff]
      %v223 = vld [vmem:[%s176 + $0x118] sm:$0xff]
      %v224 = vld [vmem:[%s176 + $0x120] sm:$0xff]
      %v225 = vld [vmem:[%s176 + $0x128] sm:$0xff]
      %v226 = vld [vmem:[%s176 + $0x130] sm:$0xff]
      %v227 = vld [vmem:[%s176 + $0x138] sm:$0xff]
      %v228 = vld [vmem:[%s176 + $0x140] sm:$0xff]
      %v229 = vld [vmem:[%s176 + $0x148] sm:$0xff]
      %v230 = vld [vmem:[%s176 + $0x150] sm:$0xff]
      %v231 = vld [vmem:[%s176 + $0x158] sm:$0xff]
      %v232 = vld [vmem:[%s176 + $0x160] sm:$0xff]
      %v233 = vld [vmem:[%s176 + $0x168] sm:$0xff]
      %v234 = vld [vmem:[%s176 + $0x170] sm:$0xff]
      %v235 = vld [vmem:[%s176 + $0x178] sm:$0xff]
      %v236 = vld [vmem:[%s176 + $0x180] sm:$0xff]
      %v237 = vld [vmem:[%s176 + $0x188] sm:$0xff]
      %v238 = vld [vmem:[%s176 + $0x190] sm:$0xff]
      %v239 = vld [vmem:[%s176 + $0x198] sm:$0xff]
      %v240 = vld [vmem:[%s176 + $0x1a0] sm:$0xff]
      %v241 = vld [vmem:[%s176 + $0x1a8] sm:$0xff]
      %v242 = vld [vmem:[%s176 + $0x1b0] sm:$0xff]
      %v243 = vld [vmem:[%s176 + $0x1b8] sm:$0xff]
      %v244 = vld [vmem:[%s176 + $0x1c0] sm:$0xff]
      %v245 = vld [vmem:[%s176 + $0x1c8] sm:$0xff]
      %v246 = vld [vmem:[%s176 + $0x1d0] sm:$0xff]
      %v247 = vld [vmem:[%s176 + $0x1d8] sm:$0xff]
      %v248 = vld [vmem:[%s176 + $0x1e0] sm:$0xff]
      %v249 = vld [vmem:[%s176 + $0x1e8] sm:$0xff]
      %v250 = vld [vmem:[%s176 + $0x1f0] sm:$0xff]
      %v251 = vld [vmem:[%s176 + $0x1f8] sm:$0xff]
      %v252 = vld [vmem:[%s176 + $0x200] sm:$0xff]
      %v253 = vld [vmem:[%s176 + $0x208] sm:$0xff]
      %v254 = vld [vmem:[%s176 + $0x210] sm:$0xff]
      %v255 = vld [vmem:[%s176 + $0x218] sm:$0xff]
      %v256 = vld [vmem:[%s176 + $0x220] sm:$0xff]
      %v257 = vld [vmem:[%s176 + $0x228] sm:$0xff]
      %v258 = vld [vmem:[%s176 + $0x230] sm:$0xff]
      %v259 = vld [vmem:[%s176 + $0x238] sm:$0xff]
      %v260 = vld [vmem:[%s176 + $0x240] sm:$0xff]
      %v261 = vld [vmem:[%s176 + $0x248] sm:$0xff]
      %v262 = vld [vmem:[%s176 + $0x250] sm:$0xff]
      %v263 = vld [vmem:[%s176 + $0x258] sm:$0xff]
      %v264 = vld [vmem:[%s176 + $0x260] sm:$0xff]
      %v265 = vld [vmem:[%s176 + $0x268] sm:$0xff]
      %v266 = vld [vmem:[%s176 + $0x270] sm:$0xff]
      %v267 = vld [vmem:[%s176 + $0x278] sm:$0xff]
      %v268 = vld [vmem:[%s176 + $0x280] sm:$0xff]
      %v269 = vld [vmem:[%s176 + $0x288] sm:$0xff]
      %v270 = vld [vmem:[%s176 + $0x290] sm:$0xff]
      %v271 = vld [vmem:[%s176 + $0x298] sm:$0xff]
      %v272 = vld [vmem:[%s176 + $0x2a0] sm:$0xff]
      %v273 = vld [vmem:[%s176 + $0x2a8] sm:$0xff]
      %v274 = vld [vmem:[%s176 + $0x2b0] sm:$0xff]
      %v275 = vld [vmem:[%s176 + $0x2b8] sm:$0xff]
      %v276 = vld [vmem:[%s176 + $0x2c0] sm:$0xff]
      %v277 = vld [vmem:[%s176 + $0x2c8] sm:$0xff]
      %v278 = vld [vmem:[%s176 + $0x2d0] sm:$0xff]
      %v279 = vld [vmem:[%s176 + $0x2d8] sm:$0xff]
      %v280 = vld [vmem:[%s176 + $0x2e0] sm:$0xff]
      %v281 = vld [vmem:[%s176 + $0x2e8] sm:$0xff]
      %v282 = vld [vmem:[%s176 + $0x2f0] sm:$0xff]
      %v283 = vld [vmem:[%s176 + $0x2f8] sm:$0xff]
      %v284 = vld [vmem:[%s1] sm:$0xff]
      %v285 = vld [vmem:[%s1 + $0x8] sm:$0xff]
      %v286 = vld [vmem:[%s1 + $0x10] sm:$0xff]
      %v287 = vld [vmem:[%s1 + $0x18] sm:$0xff]
      %v288 = vld [vmem:[%s1 + $0x20] sm:$0xff]
      %v289 = vld [vmem:[%s1 + $0x28] sm:$0xff]
      %v290 = vld [vmem:[%s1 + $0x30] sm:$0xff]
      %v291 = vld [vmem:[%s1 + $0x38] sm:$0xff]
      %v292 = vld [vmem:[%s1 + $0x40] sm:$0xff]
      %v293 = vld [vmem:[%s1 + $0x48] sm:$0xff]
      %v294 = vld [vmem:[%s1 + $0x50] sm:$0xff]
      %v295 = vld [vmem:[%s1 + $0x58] sm:$0xff]
      %v296 = vld [vmem:[%s1 + $0x60] sm:$0xff]
      %v297 = vld [vmem:[%s1 + $0x68] sm:$0xff]
      %v298 = vld [vmem:[%s1 + $0x70] sm:$0xff]
      %v299 = vld [vmem:[%s1 + $0x78] sm:$0xff]
      %v300 = vld [vmem:[%s1 + $0x80] sm:$0xff]
      %v301 = vld [vmem:[%s1 + $0x88] sm:$0xff]
      %v302 = vld [vmem:[%s1 + $0x90] sm:$0xff]
      %v303 = vld [vmem:[%s1 + $0x98] sm:$0xff]
      %v304 = vld [vmem:[%s1 + $0xa0] sm:$0xff]
      %v305 = vld [vmem:[%s1 + $0xa8] sm:$0xff]
      %v306 = vld [vmem:[%s1 + $0xb0] sm:$0xff]
      %v307 = vld [vmem:[%s1 + $0xb8] sm:$0xff]
      %v308 = vld [vmem:[%s1 + $0xc0] sm:$0xff]
      %v309 = vld [vmem:[%s1 + $0xc8] sm:$0xff]
      %v310 = vld [vmem:[%s1 + $0xd0] sm:$0xff]
      %v311 = vld [vmem:[%s1 + $0xd8] sm:$0xff]
      %v312 = vld [vmem:[%s1 + $0xe0] sm:$0xff]
      %v313 = vld [vmem:[%s1 + $0xe8] sm:$0xff]
      %v314 = vld [vmem:[%s1 + $0xf0] sm:$0xff]
      %v315 = vld [vmem:[%s1 + $0xf8] sm:$0xff]
      %v316 = vld [vmem:[%s1 + $0x100] sm:$0xff]
      %v317 = vld [vmem:[%s1 + $0x108] sm:$0xff]
      %v318 = vld [vmem:[%s1 + $0x110] sm:$0xff]
      %v319 = vld [vmem:[%s1 + $0x118] sm:$0xff]
      %vm320 = vcmask 261120
      %v322 = vsel %vm320, %v190, 0
      %v325 = vsel %vm320, %v193, 0
      %v328 = vsel %vm320, %v196, 0
      %v331 = vsel %vm320, %v199, 0
      %v334 = vsel %vm320, %v202, 0
      %v337 = vsel %vm320, %v205, 0
      %v340 = vsel %vm320, %v208, 0
      %v343 = vsel %vm320, %v211, 0
      %v346 = vsel %vm320, %v214, 0
      %v349 = vsel %vm320, %v217, 0
      %v352 = vsel %vm320, %v220, 0
      %v355 = vsel %vm320, %v223, 0
      %v358 = vsel %vm320, %v226, 0
      %v361 = vsel %vm320, %v229, 0
      %v364 = vsel %vm320, %v232, 0
      %v367 = vsel %vm320, %v235, 0
      %v370 = vsel %vm320, %v238, 0
      %v373 = vsel %vm320, %v241, 0
      %v376 = vsel %vm320, %v244, 0
      %v379 = vsel %vm320, %v247, 0
      %v382 = vsel %vm320, %v250, 0
      %v385 = vsel %vm320, %v253, 0
      %v388 = vsel %vm320, %v256, 0
      %v391 = vsel %vm320, %v259, 0
      %v394 = vsel %vm320, %v262, 0
      %v397 = vsel %vm320, %v265, 0
      %v400 = vsel %vm320, %v268, 0
      %v403 = vsel %vm320, %v271, 0
      %v406 = vsel %vm320, %v274, 0
      %v409 = vsel %vm320, %v277, 0
      %v412 = vsel %vm320, %v280, 0
      %v415 = vsel %vm320, %v283, 0
      %417 = vmatprep.subr.mxu0 0.0
      %418 = vmatpush1.msra.mxu0 %v284
      %419 = vmatprep.subr.mxu0 0.0
      %420 = vmatpush1.msra.mxu0 %v285
      %421 = vmatprep.subr.mxu0 0.0
      %422 = vmatpush1.msra.mxu0 %v286
      %423 = vmatprep.subr.mxu0 0.0
      %424 = vmatpush1.msra.mxu0 %v287
      %425 = vmatprep.subr.mxu0 0.0
      %426 = vmatpush1.msra.mxu0 %v288
      %427 = vmatprep.subr.mxu0 0.0
      %428 = vmatpush1.msra.mxu0 %v289
      %429 = vmatprep.subr.mxu0 0.0
      %430 = vmatpush1.msra.mxu0 %v290
      %431 = vmatprep.subr.mxu0 0.0
      %432 = vmatpush1.msra.mxu0 %v291
      %433 = vmatprep.subr.mxu0 0.0
      %434 = vmatpush1.msra.mxu0 %v292
      %435 = vmatprep.subr.mxu0 0.0
      %436 = vmatpush1.msra.mxu0 %v293
      %437 = vmatprep.subr.mxu0 0.0
      %438 = vmatpush1.msra.mxu0 %v294
      %439 = vmatprep.subr.mxu0 0.0
      %440 = vmatpush1.msra.mxu0 %v295
      %441 = vmatprep.subr.mxu0 0.0
      %442 = vmatpush1.msra.mxu0 %v296
      %443 = vmatprep.subr.mxu0 0.0
      %444 = vmatpush1.msra.mxu0 %v297
      %445 = vmatprep.subr.mxu0 0.0
      %446 = vmatpush1.msra.mxu0 %v298
      %447 = vmatprep.subr.mxu0 0.0
      %448 = vmatpush1.msra.mxu0 %v299
      %449 = vmatprep.subr.mxu0 0.0
      %450 = vmatpush1.msra.mxu0 %v300
      %451 = vmatprep.subr.mxu0 0.0
      %452 = vmatpush1.msra.mxu0 %v301
      %453 = vmatprep.subr.mxu0 0.0
      %454 = vmatpush1.msra.mxu0 %v302
      %455 = vmatprep.subr.mxu0 0.0
      %456 = vmatpush1.msra.mxu0 %v303
      %457 = vmatprep.subr.mxu0 0.0
      %458 = vmatpush1.msra.mxu0 %v304
      %459 = vmatprep.subr.mxu0 0.0
      %460 = vmatpush1.msra.mxu0 %v305
      %461 = vmatprep.subr.mxu0 0.0
      %462 = vmatpush1.msra.mxu0 %v306
      %463 = vmatprep.subr.mxu0 0.0
      %464 = vmatpush1.msra.mxu0 %v307
      %465 = vmatprep.subr.mxu0 0.0
      %466 = vmatpush1.msra.mxu0 %v308
      %467 = vmatprep.subr.mxu0 0.0
      %468 = vmatpush1.msra.mxu0 %v309
      %469 = vmatprep.subr.mxu0 0.0
      %470 = vmatpush1.msra.mxu0 %v310
      %471 = vmatprep.subr.mxu0 0.0
      %472 = vmatpush1.msra.mxu0 %v311
      %473 = vmatprep.subr.mxu0 0.0
      %474 = vmatpush1.msra.mxu0 %v312
      %475 = vmatprep.subr.mxu0 0.0
      %476 = vmatpush1.msra.mxu0 %v313
      %477 = vmatprep.subr.mxu0 0.0
      %478 = vmatpush1.msra.mxu0 %v314
      %479 = vmatprep.subr.mxu0 0.0
      %480 = vmatpush1.msra.mxu0 %v315
      %481 = vmatprep.mubr.f32.mxu0 %v189
      %482 = vmatmul.mubr.f32.gmra.mrb[0].mxu0 %v188
      %v483 = vpop.f32.mrb[0].mxu0
      %v484 = vadd.f32 0.0, %v483
      %v485 = vpop.f32.mrb[0].mxu0
      %486 = vmatprep.mubr.f32.mxu0 %v192
      %487 = vmatmul.mubr.f32.gmra.mrb[0].mxu0 %v191
      %v488 = vpop.f32.mrb[0].mxu0
      %v489 = vadd.f32 0.0, %v488
      %v490 = vpop.f32.mrb[0].mxu0
      %491 = vmatprep.mubr.f32.mxu0 %v195
      %492 = vmatmul.mubr.f32.gmra.mrb[0].mxu0 %v194
      %v493 = vpop.f32.mrb[0].mxu0
      %v494 = vadd.f32 0.0, %v493
      %v495 = vpop.f32.mrb[0].mxu0
      %496 = vmatprep.mubr.f32.mxu0 %v198
      %497 = vmatmul.mubr.f32.gmra.mrb[0].mxu0 %v197
      %v498 = vpop.f32.mrb[0].mxu0
      %v499 = vadd.f32 0.0, %v498
      %v500 = vpop.f32.mrb[0].mxu0
      %501 = vmatprep.mubr.f32.mxu0 %v201
      %502 = vmatmul.mubr.f32.gmra.mrb[0].mxu0 %v200
      %v503 = vpop.f32.mrb[0].mxu0
      %v504 = vadd.f32 0.0, %v503
      %v505 = vpop.f32.mrb[0].mxu0
      %506 = vmatprep.mubr.f32.mxu0 %v204
      %507 = vmatmul.mubr.f32.gmra.mrb[0].mxu0 %v203
      %v508 = vpop.f32.mrb[0].mxu0
      %v509 = vadd.f32 0.0, %v508
      %v510 = vpop.f32.mrb[0].mxu0
      %511 = vmatprep.mubr.f32.mxu0 %v207
      %512 = vmatmul.mubr.f32.gmra.mrb[0].mxu0 %v206
      %v513 = vpop.f32.mrb[0].mxu0
      %v514 = vadd.f32 0.0, %v513
      %v515 = vpop.f32.mrb[0].mxu0
      %516 = vmatprep.mubr.f32.mxu0 %v210
      %517 = vmatmul.mubr.f32.gmra.mrb[0].mxu0 %v209
      %v518 = vpop.f32.mrb[0].mxu0
      %v519 = vadd.f32 0.0, %v518
      %v520 = vpop.f32.mrb[0].mxu0
      %521 = vmatprep.mubr.f32.mxu0 %v213
      %522 = vmatmul.mubr.f32.gmra.mrb[0].mxu0 %v212
      %v523 = vpop.f32.mrb[0].mxu0
      %v524 = vadd.f32 0.0, %v523
      %v525 = vpop.f32.mrb[0].mxu0
      %526 = vmatprep.mubr.f32.mxu0 %v216
      %527 = vmatmul.mubr.f32.gmra.mrb[0].mxu0 %v215
      %v528 = vpop.f32.mrb[0].mxu0
      %v529 = vadd.f32 0.0, %v528
      %v530 = vpop.f32.mrb[0].mxu0
      %531 = vmatprep.mubr.f32.mxu0 %v219
      %532 = vmatmul.mubr.f32.gmra.mrb[0].mxu0 %v218
      %v533 = vpop.f32.mrb[0].mxu0
      %v534 = vadd.f32 0.0, %v533
      %v535 = vpop.f32.mrb[0].mxu0
      %536 = vmatprep.mubr.f32.mxu0 %v222
      %537 = vmatmul.mubr.f32.gmra.mrb[0].mxu0 %v221
      %v538 = vpop.f32.mrb[0].mxu0
      %v539 = vadd.f32 0.0, %v538
      %v540 = vpop.f32.mrb[0].mxu0
      %541 = vmatprep.mubr.f32.mxu0 %v225
      %542 = vmatmul.mubr.f32.gmra.mrb[0].mxu0 %v224
      %v543 = vpop.f32.mrb[0].mxu0
      %v544 = vadd.f32 0.0, %v543
      %v545 = vpop.f32.mrb[0].mxu0
      %546 = vmatprep.mubr.f32.mxu0 %v228
      %547 = vmatmul.mubr.f32.gmra.mrb[0].mxu0 %v227
      %v548 = vpop.f32.mrb[0].mxu0
      %v549 = vadd.f32 0.0, %v548
      %v550 = vpop.f32.mrb[0].mxu0
      %551 = vmatprep.mubr.f32.mxu0 %v231
      %552 = vmatmul.mubr.f32.gmra.mrb[0].mxu0 %v230
      %v553 = vpop.f32.mrb[0].mxu0
      %v554 = vadd.f32 0.0, %v553
      %v555 = vpop.f32.mrb[0].mxu0
      %556 = vmatprep.mubr.f32.mxu0 %v234
      %557 = vmatmul.mubr.f32.gmra.mrb[0].mxu0 %v233
      %v558 = vpop.f32.mrb[0].mxu0
      %v559 = vadd.f32 0.0, %v558
      %v560 = vpop.f32.mrb[0].mxu0
      %561 = vmatprep.mubr.f32.mxu0 %v237
      %562 = vmatmul.mubr.f32.gmra.mrb[0].mxu0 %v236
      %v563 = vpop.f32.mrb[0].mxu0
      %v564 = vadd.f32 0.0, %v563
      %v565 = vpop.f32.mrb[0].mxu0
      %566 = vmatprep.mubr.f32.mxu0 %v240
      %567 = vmatmul.mubr.f32.gmra.mrb[0].mxu0 %v239
      %v568 = vpop.f32.mrb[0].mxu0
      %v569 = vadd.f32 0.0, %v568
      %v570 = vpop.f32.mrb[0].mxu0
      %571 = vmatprep.mubr.f32.mxu0 %v243
      %572 = vmatmul.mubr.f32.gmra.mrb[0].mxu0 %v242
      %v573 = vpop.f32.mrb[0].mxu0
      %v574 = vadd.f32 0.0, %v573
      %v575 = vpop.f32.mrb[0].mxu0
      %576 = vmatprep.mubr.f32.mxu0 %v246
      %577 = vmatmul.mubr.f32.gmra.mrb[0].mxu0 %v245
      %v578 = vpop.f32.mrb[0].mxu0
      %v579 = vadd.f32 0.0, %v578
      %v580 = vpop.f32.mrb[0].mxu0
      %581 = vmatprep.mubr.f32.mxu0 %v249
      %582 = vmatmul.mubr.f32.gmra.mrb[0].mxu0 %v248
      %v583 = vpop.f32.mrb[0].mxu0
      %v584 = vadd.f32 0.0, %v583
      %v585 = vpop.f32.mrb[0].mxu0
      %586 = vmatprep.mubr.f32.mxu0 %v252
      %587 = vmatmul.mubr.f32.gmra.mrb[0].mxu0 %v251
      %v588 = vpop.f32.mrb[0].mxu0
      %v589 = vadd.f32 0.0, %v588
      %v590 = vpop.f32.mrb[0].mxu0
      %591 = vmatprep.mubr.f32.mxu0 %v255
      %592 = vmatmul.mubr.f32.gmra.mrb[0].mxu0 %v254
      %v593 = vpop.f32.mrb[0].mxu0
      %v594 = vadd.f32 0.0, %v593
      %v595 = vpop.f32.mrb[0].mxu0
      %596 = vmatprep.mubr.f32.mxu0 %v258
      %597 = vmatmul.mubr.f32.gmra.mrb[0].mxu0 %v257
      %v598 = vpop.f32.mrb[0].mxu0
      %v599 = vadd.f32 0.0, %v598
      %v600 = vpop.f32.mrb[0].mxu0
      %601 = vmatprep.mubr.f32.mxu0 %v261
      %602 = vmatmul.mubr.f32.gmra.mrb[0].mxu0 %v260
      %v603 = vpop.f32.mrb[0].mxu0
      %v604 = vadd.f32 0.0, %v603
      %v605 = vpop.f32.mrb[0].mxu0
      %606 = vmatprep.mubr.f32.mxu0 %v264
      %607 = vmatmul.mubr.f32.gmra.mrb[0].mxu0 %v263
      %v608 = vpop.f32.mrb[0].mxu0
      %v609 = vadd.f32 0.0, %v608
      %v610 = vpop.f32.mrb[0].mxu0
      %611 = vmatprep.mubr.f32.mxu0 %v267
      %612 = vmatmul.mubr.f32.gmra.mrb[0].mxu0 %v266
      %v613 = vpop.f32.mrb[0].mxu0
      %v614 = vadd.f32 0.0, %v613
      %v615 = vpop.f32.mrb[0].mxu0
      %616 = vmatprep.mubr.f32.mxu0 %v270
      %617 = vmatmul.mubr.f32.gmra.mrb[0].mxu0 %v269
      %v618 = vpop.f32.mrb[0].mxu0
      %v619 = vadd.f32 0.0, %v618
      %v620 = vpop.f32.mrb[0].mxu0
      %621 = vmatprep.mubr.f32.mxu0 %v273
      %622 = vmatmul.mubr.f32.gmra.mrb[0].mxu0 %v272
      %v623 = vpop.f32.mrb[0].mxu0
      %v624 = vadd.f32 0.0, %v623
      %v625 = vpop.f32.mrb[0].mxu0
      %626 = vmatprep.mubr.f32.mxu0 %v276
      %627 = vmatmul.mubr.f32.gmra.mrb[0].mxu0 %v275
      %v628 = vpop.f32.mrb[0].mxu0
      %v629 = vadd.f32 0.0, %v628
      %v630 = vpop.f32.mrb[0].mxu0
      %631 = vmatprep.mubr.f32.mxu0 %v279
      %632 = vmatmul.mubr.f32.gmra.mrb[0].mxu0 %v278
      %v633 = vpop.f32.mrb[0].mxu0
      %v634 = vadd.f32 0.0, %v633
      %v635 = vpop.f32.mrb[0].mxu0
      %636 = vmatprep.mubr.f32.mxu0 %v282
      %637 = vmatmul.mubr.f32.gmra.mrb[0].mxu0 %v281
      %v638 = vpop.f32.mrb[0].mxu0
      %v639 = vadd.f32 0.0, %v638
      %v640 = vpop.f32.mrb[0].mxu0
      %641 = vdwg.mxu0
      %642 = vmatprep.subr.mxu0 0.0
      %643 = vmatpush1.msra.mxu0 %v316
      %644 = vmatprep.subr.mxu0 0.0
      %645 = vmatpush1.msra.mxu0 %v317
      %646 = vmatprep.subr.mxu0 0.0
      %647 = vmatpush1.msra.mxu0 %v318
      %648 = vmatprep.subr.mxu0 0.0
      %649 = vmatpush1.msra.mxu0 %v319
      %650 = vmatprep.subr.mxu0 0.0
      %651 = vmatpush1.msra.mxu0 0.0
      %652 = vmatprep.subr.mxu0 0.0
      %653 = vmatpush1.msra.mxu0 0.0
      %654 = vmatprep.subr.mxu0 0.0
      %655 = vmatpush1.msra.mxu0 0.0
      %656 = vmatprep.subr.mxu0 0.0
      %657 = vmatpush1.msra.mxu0 0.0
      %658 = vmatprep.subr.mxu0 0.0
      %659 = vmatpush1.msra.mxu0 0.0
      %660 = vmatprep.subr.mxu0 0.0
      %661 = vmatpush1.msra.mxu0 0.0
      %662 = vmatprep.subr.mxu0 0.0
      %663 = vmatpush1.msra.mxu0 0.0
      %664 = vmatprep.subr.mxu0 0.0
      %665 = vmatpush1.msra.mxu0 0.0
      %666 = vmatprep.subr.mxu0 0.0
      %667 = vmatpush1.msra.mxu0 0.0
      %668 = vmatprep.subr.mxu0 0.0
      %669 = vmatpush1.msra.mxu0 0.0
      %670 = vmatprep.subr.mxu0 0.0
      %671 = vmatpush1.msra.mxu0 0.0
      %672 = vmatprep.subr.mxu0 0.0
      %673 = vmatpush1.msra.mxu0 0.0
      %674 = vmatprep.subr.mxu0 0.0
      %675 = vmatpush1.msra.mxu0 0.0
      %676 = vmatprep.subr.mxu0 0.0
      %677 = vmatpush1.msra.mxu0 0.0
      %678 = vmatprep.subr.mxu0 0.0
      %679 = vmatpush1.msra.mxu0 0.0
      %680 = vmatprep.subr.mxu0 0.0
      %681 = vmatpush1.msra.mxu0 0.0
      %682 = vmatprep.subr.mxu0 0.0
      %683 = vmatpush1.msra.mxu0 0.0
      %684 = vmatprep.subr.mxu0 0.0
      %685 = vmatpush1.msra.mxu0 0.0
      %686 = vmatprep.subr.mxu0 0.0
      %687 = vmatpush1.msra.mxu0 0.0
      %688 = vmatprep.subr.mxu0 0.0
      %689 = vmatpush1.msra.mxu0 0.0
      %690 = vmatprep.subr.mxu0 0.0
      %691 = vmatpush1.msra.mxu0 0.0
      %692 = vmatprep.subr.mxu0 0.0
      %693 = vmatpush1.msra.mxu0 0.0
      %694 = vmatprep.subr.mxu0 0.0
      %695 = vmatpush1.msra.mxu0 0.0
      %696 = vmatprep.subr.mxu0 0.0
      %697 = vmatpush1.msra.mxu0 0.0
      %698 = vmatprep.subr.mxu0 0.0
      %699 = vmatpush1.msra.mxu0 0.0
      %700 = vmatprep.subr.mxu0 0.0
      %701 = vmatpush1.msra.mxu0 0.0
      %702 = vmatprep.subr.mxu0 0.0
      %703 = vmatpush1.msra.mxu0 0.0
      %704 = vmatprep.subr.mxu0 0.0
      %705 = vmatpush1.msra.mxu0 0.0
      %706 = vmatprep.mubr.f32.mxu0 0.0
      %707 = vmatmul.mubr.f32.gmra.mrb[0].mxu0 %v322
      %v708 = vpop.f32.mrb[0].mxu0
      %v709 = vadd.f32 %v484, %v708
      %v710 = vpop.f32.mrb[0].mxu0
      %711 = vmatprep.mubr.f32.mxu0 0.0
      %712 = vmatmul.mubr.f32.gmra.mrb[0].mxu0 %v325
      %v713 = vpop.f32.mrb[0].mxu0
      %v714 = vadd.f32 %v489, %v713
      %v715 = vpop.f32.mrb[0].mxu0
      %716 = vmatprep.mubr.f32.mxu0 0.0
      %717 = vmatmul.mubr.f32.gmra.mrb[0].mxu0 %v328
      %v718 = vpop.f32.mrb[0].mxu0
      %v719 = vadd.f32 %v494, %v718
      %v720 = vpop.f32.mrb[0].mxu0
      %721 = vmatprep.mubr.f32.mxu0 0.0
      %722 = vmatmul.mubr.f32.gmra.mrb[0].mxu0 %v331
      %v723 = vpop.f32.mrb[0].mxu0
      %v724 = vadd.f32 %v499, %v723
      %v725 = vpop.f32.mrb[0].mxu0
      %726 = vmatprep.mubr.f32.mxu0 0.0
      %727 = vmatmul.mubr.f32.gmra.mrb[0].mxu0 %v334
      %v728 = vpop.f32.mrb[0].mxu0
      %v729 = vadd.f32 %v504, %v728
      %v730 = vpop.f32.mrb[0].mxu0
      %731 = vmatprep.mubr.f32.mxu0 0.0
      %732 = vmatmul.mubr.f32.gmra.mrb[0].mxu0 %v337
      %v733 = vpop.f32.mrb[0].mxu0
      %v734 = vadd.f32 %v509, %v733
      %v735 = vpop.f32.mrb[0].mxu0
      %736 = vmatprep.mubr.f32.mxu0 0.0
      %737 = vmatmul.mubr.f32.gmra.mrb[0].mxu0 %v340
      %v738 = vpop.f32.mrb[0].mxu0
      %v739 = vadd.f32 %v514, %v738
      %v740 = vpop.f32.mrb[0].mxu0
      %741 = vmatprep.mubr.f32.mxu0 0.0
      %742 = vmatmul.mubr.f32.gmra.mrb[0].mxu0 %v343
      %v743 = vpop.f32.mrb[0].mxu0
      %v744 = vadd.f32 %v519, %v743
      %v745 = vpop.f32.mrb[0].mxu0
      %746 = vmatprep.mubr.f32.mxu0 0.0
      %747 = vmatmul.mubr.f32.gmra.mrb[0].mxu0 %v346
      %v748 = vpop.f32.mrb[0].mxu0
      %v749 = vadd.f32 %v524, %v748
      %v750 = vpop.f32.mrb[0].mxu0
      %751 = vmatprep.mubr.f32.mxu0 0.0
      %752 = vmatmul.mubr.f32.gmra.mrb[0].mxu0 %v349
      %v753 = vpop.f32.mrb[0].mxu0
      %v754 = vadd.f32 %v529, %v753
      %v755 = vpop.f32.mrb[0].mxu0
      %756 = vmatprep.mubr.f32.mxu0 0.0
      %757 = vmatmul.mubr.f32.gmra.mrb[0].mxu0 %v352
      %v758 = vpop.f32.mrb[0].mxu0
      %v759 = vadd.f32 %v534, %v758
      %v760 = vpop.f32.mrb[0].mxu0
      %761 = vmatprep.mubr.f32.mxu0 0.0
      %762 = vmatmul.mubr.f32.gmra.mrb[0].mxu0 %v355
      %v763 = vpop.f32.mrb[0].mxu0
      %v764 = vadd.f32 %v539, %v763
      %v765 = vpop.f32.mrb[0].mxu0
      %766 = vmatprep.mubr.f32.mxu0 0.0
      %767 = vmatmul.mubr.f32.gmra.mrb[0].mxu0 %v358
      %v768 = vpop.f32.mrb[0].mxu0
      %v769 = vadd.f32 %v544, %v768
      %v770 = vpop.f32.mrb[0].mxu0
      %771 = vmatprep.mubr.f32.mxu0 0.0
      %772 = vmatmul.mubr.f32.gmra.mrb[0].mxu0 %v361
      %v773 = vpop.f32.mrb[0].mxu0
      %v774 = vadd.f32 %v549, %v773
      %v775 = vpop.f32.mrb[0].mxu0
      %776 = vmatprep.mubr.f32.mxu0 0.0
      %777 = vmatmul.mubr.f32.gmra.mrb[0].mxu0 %v364
      %v778 = vpop.f32.mrb[0].mxu0
      %v779 = vadd.f32 %v554, %v778
      %v780 = vpop.f32.mrb[0].mxu0
      %781 = vmatprep.mubr.f32.mxu0 0.0
      %782 = vmatmul.mubr.f32.gmra.mrb[0].mxu0 %v367
      %v783 = vpop.f32.mrb[0].mxu0
      %v784 = vadd.f32 %v559, %v783
      %v785 = vpop.f32.mrb[0].mxu0
      %786 = vmatprep.mubr.f32.mxu0 0.0
      %787 = vmatmul.mubr.f32.gmra.mrb[0].mxu0 %v370
      %v788 = vpop.f32.mrb[0].mxu0
      %v789 = vadd.f32 %v564, %v788
      %v790 = vpop.f32.mrb[0].mxu0
      %791 = vmatprep.mubr.f32.mxu0 0.0
      %792 = vmatmul.mubr.f32.gmra.mrb[0].mxu0 %v373
      %v793 = vpop.f32.mrb[0].mxu0
      %v794 = vadd.f32 %v569, %v793
      %v795 = vpop.f32.mrb[0].mxu0
      %796 = vmatprep.mubr.f32.mxu0 0.0
      %797 = vmatmul.mubr.f32.gmra.mrb[0].mxu0 %v376
      %v798 = vpop.f32.mrb[0].mxu0
      %v799 = vadd.f32 %v574, %v798
      %v800 = vpop.f32.mrb[0].mxu0
      %801 = vmatprep.mubr.f32.mxu0 0.0
      %802 = vmatmul.mubr.f32.gmra.mrb[0].mxu0 %v379
      %v803 = vpop.f32.mrb[0].mxu0
      %v804 = vadd.f32 %v579, %v803
      %v805 = vpop.f32.mrb[0].mxu0
      %806 = vmatprep.mubr.f32.mxu0 0.0
      %807 = vmatmul.mubr.f32.gmra.mrb[0].mxu0 %v382
      %v808 = vpop.f32.mrb[0].mxu0
      %v809 = vadd.f32 %v584, %v808
      %v810 = vpop.f32.mrb[0].mxu0
      %811 = vmatprep.mubr.f32.mxu0 0.0
      %812 = vmatmul.mubr.f32.gmra.mrb[0].mxu0 %v385
      %v813 = vpop.f32.mrb[0].mxu0
      %v814 = vadd.f32 %v589, %v813
      %v815 = vpop.f32.mrb[0].mxu0
      %816 = vmatprep.mubr.f32.mxu0 0.0
      %817 = vmatmul.mubr.f32.gmra.mrb[0].mxu0 %v388
      %v818 = vpop.f32.mrb[0].mxu0
      %v819 = vadd.f32 %v594, %v818
      %v820 = vpop.f32.mrb[0].mxu0
      %821 = vmatprep.mubr.f32.mxu0 0.0
      %822 = vmatmul.mubr.f32.gmra.mrb[0].mxu0 %v391
      %v823 = vpop.f32.mrb[0].mxu0
      %v824 = vadd.f32 %v599, %v823
      %v825 = vpop.f32.mrb[0].mxu0
      %826 = vmatprep.mubr.f32.mxu0 0.0
      %827 = vmatmul.mubr.f32.gmra.mrb[0].mxu0 %v394
      %v828 = vpop.f32.mrb[0].mxu0
      %v829 = vadd.f32 %v604, %v828
      %v830 = vpop.f32.mrb[0].mxu0
      %831 = vmatprep.mubr.f32.mxu0 0.0
      %832 = vmatmul.mubr.f32.gmra.mrb[0].mxu0 %v397
      %v833 = vpop.f32.mrb[0].mxu0
      %v834 = vadd.f32 %v609, %v833
      %v835 = vpop.f32.mrb[0].mxu0
      %836 = vmatprep.mubr.f32.mxu0 0.0
      %837 = vmatmul.mubr.f32.gmra.mrb[0].mxu0 %v400
      %v838 = vpop.f32.mrb[0].mxu0
      %v839 = vadd.f32 %v614, %v838
      %v840 = vpop.f32.mrb[0].mxu0
      %841 = vmatprep.mubr.f32.mxu0 0.0
      %842 = vmatmul.mubr.f32.gmra.mrb[0].mxu0 %v403
      %v843 = vpop.f32.mrb[0].mxu0
      %v844 = vadd.f32 %v619, %v843
      %v845 = vpop.f32.mrb[0].mxu0
      %846 = vmatprep.mubr.f32.mxu0 0.0
      %847 = vmatmul.mubr.f32.gmra.mrb[0].mxu0 %v406
      %v848 = vpop.f32.mrb[0].mxu0
      %v849 = vadd.f32 %v624, %v848
      %v850 = vpop.f32.mrb[0].mxu0
      %851 = vmatprep.mubr.f32.mxu0 0.0
      %852 = vmatmul.mubr.f32.gmra.mrb[0].mxu0 %v409
      %v853 = vpop.f32.mrb[0].mxu0
      %v854 = vadd.f32 %v629, %v853
      %v855 = vpop.f32.mrb[0].mxu0
      %856 = vmatprep.mubr.f32.mxu0 0.0
      %857 = vmatmul.mubr.f32.gmra.mrb[0].mxu0 %v412
      %v858 = vpop.f32.mrb[0].mxu0
      %v859 = vadd.f32 %v634, %v858
      %v860 = vpop.f32.mrb[0].mxu0
      %861 = vmatprep.mubr.f32.mxu0 0.0
      %862 = vmatmul.mubr.f32.gmra.mrb[0].mxu0 %v415
      %v863 = vpop.f32.mrb[0].mxu0
      %v864 = vadd.f32 %v639, %v863
      %v865 = vpop.f32.mrb[0].mxu0
      %866 = vdwg.mxu0
      %vm867 = vcmask 64512
      %868 = vst.msk [vmem:[%s182] sm:$0xff] %vm867, %v709
      %869 = vst.msk [vmem:[%s182 + $0x8] sm:$0xff] %vm867, %v714
      %870 = vst.msk [vmem:[%s182 + $0x10] sm:$0xff] %vm867, %v719
      %871 = vst.msk [vmem:[%s182 + $0x18] sm:$0xff] %vm867, %v724
      %872 = vst.msk [vmem:[%s182 + $0x20] sm:$0xff] %vm867, %v729
      %873 = vst.msk [vmem:[%s182 + $0x28] sm:$0xff] %vm867, %v734
      %874 = vst.msk [vmem:[%s182 + $0x30] sm:$0xff] %vm867, %v739
      %875 = vst.msk [vmem:[%s182 + $0x38] sm:$0xff] %vm867, %v744
      %876 = vst.msk [vmem:[%s182 + $0x40] sm:$0xff] %vm867, %v749
      %877 = vst.msk [vmem:[%s182 + $0x48] sm:$0xff] %vm867, %v754
      %878 = vst.msk [vmem:[%s182 + $0x50] sm:$0xff] %vm867, %v759
      %879 = vst.msk [vmem:[%s182 + $0x58] sm:$0xff] %vm867, %v764
      %880 = vst.msk [vmem:[%s182 + $0x60] sm:$0xff] %vm867, %v769
      %881 = vst.msk [vmem:[%s182 + $0x68] sm:$0xff] %vm867, %v774
      %882 = vst.msk [vmem:[%s182 + $0x70] sm:$0xff] %vm867, %v779
      %883 = vst.msk [vmem:[%s182 + $0x78] sm:$0xff] %vm867, %v784
      %884 = vst.msk [vmem:[%s182 + $0x80] sm:$0xff] %vm867, %v789
      %885 = vst.msk [vmem:[%s182 + $0x88] sm:$0xff] %vm867, %v794
      %886 = vst.msk [vmem:[%s182 + $0x90] sm:$0xff] %vm867, %v799
      %887 = vst.msk [vmem:[%s182 + $0x98] sm:$0xff] %vm867, %v804
      %888 = vst.msk [vmem:[%s182 + $0xa0] sm:$0xff] %vm867, %v809
      %889 = vst.msk [vmem:[%s182 + $0xa8] sm:$0xff] %vm867, %v814
      %890 = vst.msk [vmem:[%s182 + $0xb0] sm:$0xff] %vm867, %v819
      %891 = vst.msk [vmem:[%s182 + $0xb8] sm:$0xff] %vm867, %v824
      %892 = vst.msk [vmem:[%s182 + $0xc0] sm:$0xff] %vm867, %v829
      %893 = vst.msk [vmem:[%s182 + $0xc8] sm:$0xff] %vm867, %v834
      %894 = vst.msk [vmem:[%s182 + $0xd0] sm:$0xff] %vm867, %v839
      %895 = vst.msk [vmem:[%s182 + $0xd8] sm:$0xff] %vm867, %v844
      %896 = vst.msk [vmem:[%s182 + $0xe0] sm:$0xff] %vm867, %v849
      %897 = vst.msk [vmem:[%s182 + $0xe8] sm:$0xff] %vm867, %v854
      %898 = vst.msk [vmem:[%s182 + $0xf0] sm:$0xff] %vm867, %v859
      %899 = vst.msk [vmem:[%s182 + $0xf8] sm:$0xff] %vm867, %v864
      %v900 = vsel %vm867, %v709, 0.0
      %v901 = vsel %vm867, %v714, 0.0
      %v902 = vadd.f32 %v900, %v901
      %v903 = vsel %vm867, %v719, 0.0
      %v904 = vadd.f32 %v902, %v903
      %v905 = vsel %vm867, %v724, 0.0
      %v906 = vadd.f32 %v904, %v905
      %v907 = vsel %vm867, %v729, 0.0
      %v908 = vadd.f32 %v906, %v907
      %v909 = vsel %vm867, %v734, 0.0
      %v910 = vadd.f32 %v908, %v909
      %v911 = vsel %vm867, %v739, 0.0
      %v912 = vadd.f32 %v910, %v911
      %v913 = vsel %vm867, %v744, 0.0
      %v914 = vadd.f32 %v912, %v913
      %v915 = vsel %vm867, %v749, 0.0
      %v916 = vadd.f32 %v914, %v915
      %v917 = vsel %vm867, %v754, 0.0
      %v918 = vadd.f32 %v916, %v917
      %v919 = vsel %vm867, %v759, 0.0
      %v920 = vadd.f32 %v918, %v919
      %v921 = vsel %vm867, %v764, 0.0
      %v922 = vadd.f32 %v920, %v921
      %v923 = vsel %vm867, %v769, 0.0
      %v924 = vadd.f32 %v922, %v923
      %v925 = vsel %vm867, %v774, 0.0
      %v926 = vadd.f32 %v924, %v925
      %v927 = vsel %vm867, %v779, 0.0
      %v928 = vadd.f32 %v926, %v927
      %v929 = vsel %vm867, %v784, 0.0
      %v930 = vadd.f32 %v928, %v929
      %v931 = vsel %vm867, %v789, 0.0
      %v932 = vadd.f32 %v930, %v931
      %v933 = vsel %vm867, %v794, 0.0
      %v934 = vadd.f32 %v932, %v933
      %v935 = vsel %vm867, %v799, 0.0
      %v936 = vadd.f32 %v934, %v935
      %v937 = vsel %vm867, %v804, 0.0
      %v938 = vadd.f32 %v936, %v937
      %v939 = vsel %vm867, %v809, 0.0
      %v940 = vadd.f32 %v938, %v939
      %v941 = vsel %vm867, %v814, 0.0
      %v942 = vadd.f32 %v940, %v941
      %v943 = vsel %vm867, %v819, 0.0
      %v944 = vadd.f32 %v942, %v943
      %v945 = vsel %vm867, %v824, 0.0
      %v946 = vadd.f32 %v944, %v945
      %v947 = vsel %vm867, %v829, 0.0
      %v948 = vadd.f32 %v946, %v947
      %v949 = vsel %vm867, %v834, 0.0
      %v950 = vadd.f32 %v948, %v949
      %v951 = vsel %vm867, %v839, 0.0
      %v952 = vadd.f32 %v950, %v951
      %v953 = vsel %vm867, %v844, 0.0
      %v954 = vadd.f32 %v952, %v953
      %v955 = vsel %vm867, %v849, 0.0
      %v956 = vadd.f32 %v954, %v955
      %v957 = vsel %vm867, %v854, 0.0
      %v958 = vadd.f32 %v956, %v957
      %v959 = vsel %vm867, %v859, 0.0
      %v960 = vadd.f32 %v958, %v959
      %v961 = vsel %vm867, %v864, 0.0
      %v962 = vadd.f32 %v960, %v961
      %v963 = vrot.slane %v962, 4
      %v964 = vadd.f32 %v962, %v963
      %v965 = vrot.slane %v964, 2
      %v966 = vadd.f32 %v964, %v965
      %v967 = vrot.slane %v966, 1
      %v968 = vadd.f32 %v966, %v967
      %v969 = vmul.f32 %v709, %v709
      %v970 = vmul.f32 %v714, %v714
      %v971 = vmul.f32 %v719, %v719
      %v972 = vmul.f32 %v724, %v724
      %v973 = vmul.f32 %v729, %v729
      %v974 = vmul.f32 %v734, %v734
      %v975 = vmul.f32 %v739, %v739
      %v976 = vmul.f32 %v744, %v744
      %v977 = vmul.f32 %v749, %v749
      %v978 = vmul.f32 %v754, %v754
      %v979 = vmul.f32 %v759, %v759
      %v980 = vmul.f32 %v764, %v764
      %v981 = vmul.f32 %v769, %v769
      %v982 = vmul.f32 %v774, %v774
      %v983 = vmul.f32 %v779, %v779
      %v984 = vmul.f32 %v784, %v784
      %v985 = vmul.f32 %v789, %v789
      %v986 = vmul.f32 %v794, %v794
      %v987 = vmul.f32 %v799, %v799
      %v988 = vmul.f32 %v804, %v804
      %v989 = vmul.f32 %v809, %v809
      %v990 = vmul.f32 %v814, %v814
      %v991 = vmul.f32 %v819, %v819
      %v992 = vmul.f32 %v824, %v824
      %v993 = vmul.f32 %v829, %v829
      %v994 = vmul.f32 %v834, %v834
      %v995 = vmul.f32 %v839, %v839
      %v996 = vmul.f32 %v844, %v844
      %v997 = vmul.f32 %v849, %v849
      %v998 = vmul.f32 %v854, %v854
      %v999 = vmul.f32 %v859, %v859
      %v1000 = vmul.f32 %v864, %v864
      %v1001 = vsel %vm867, %v969, 0.0
      %v1002 = vsel %vm867, %v970, 0.0
      %v1003 = vadd.f32 %v1001, %v1002
      %v1004 = vsel %vm867, %v971, 0.0
      %v1005 = vadd.f32 %v1003, %v1004
      %v1006 = vsel %vm867, %v972, 0.0
      %v1007 = vadd.f32 %v1005, %v1006
      %v1008 = vsel %vm867, %v973, 0.0
      %v1009 = vadd.f32 %v1007, %v1008
      %v1010 = vsel %vm867, %v974, 0.0
      %v1011 = vadd.f32 %v1009, %v1010
      %v1012 = vsel %vm867, %v975, 0.0
      %v1013 = vadd.f32 %v1011, %v1012
      %v1014 = vsel %vm867, %v976, 0.0
      %v1015 = vadd.f32 %v1013, %v1014
      %v1016 = vsel %vm867, %v977, 0.0
      %v1017 = vadd.f32 %v1015, %v1016
      %v1018 = vsel %vm867, %v978, 0.0
      %v1019 = vadd.f32 %v1017, %v1018
      %v1020 = vsel %vm867, %v979, 0.0
      %v1021 = vadd.f32 %v1019, %v1020
      %v1022 = vsel %vm867, %v980, 0.0
      %v1023 = vadd.f32 %v1021, %v1022
      %v1024 = vsel %vm867, %v981, 0.0
      %v1025 = vadd.f32 %v1023, %v1024
      %v1026 = vsel %vm867, %v982, 0.0
      %v1027 = vadd.f32 %v1025, %v1026
      %v1028 = vsel %vm867, %v983, 0.0
      %v1029 = vadd.f32 %v1027, %v1028
      %v1030 = vsel %vm867, %v984, 0.0
      %v1031 = vadd.f32 %v1029, %v1030
      %v1032 = vsel %vm867, %v985, 0.0
      %v1033 = vadd.f32 %v1031, %v1032
      %v1034 = vsel %vm867, %v986, 0.0
      %v1035 = vadd.f32 %v1033, %v1034
      %v1036 = vsel %vm867, %v987, 0.0
      %v1037 = vadd.f32 %v1035, %v1036
      %v1038 = vsel %vm867, %v988, 0.0
      %v1039 = vadd.f32 %v1037, %v1038
      %v1040 = vsel %vm867, %v989, 0.0
      %v1041 = vadd.f32 %v1039, %v1040
      %v1042 = vsel %vm867, %v990, 0.0
      %v1043 = vadd.f32 %v1041, %v1042
      %v1044 = vsel %vm867, %v991, 0.0
      %v1045 = vadd.f32 %v1043, %v1044
      %v1046 = vsel %vm867, %v992, 0.0
      %v1047 = vadd.f32 %v1045, %v1046
      %v1048 = vsel %vm867, %v993, 0.0
      %v1049 = vadd.f32 %v1047, %v1048
      %v1050 = vsel %vm867, %v994, 0.0
      %v1051 = vadd.f32 %v1049, %v1050
      %v1052 = vsel %vm867, %v995, 0.0
      %v1053 = vadd.f32 %v1051, %v1052
      %v1054 = vsel %vm867, %v996, 0.0
      %v1055 = vadd.f32 %v1053, %v1054
      %v1056 = vsel %vm867, %v997, 0.0
      %v1057 = vadd.f32 %v1055, %v1056
      %v1058 = vsel %vm867, %v998, 0.0
      %v1059 = vadd.f32 %v1057, %v1058
      %v1060 = vsel %vm867, %v999, 0.0
      %v1061 = vadd.f32 %v1059, %v1060
      %v1062 = vsel %vm867, %v1000, 0.0
      %v1063 = vadd.f32 %v1061, %v1062
      %v1064 = vrot.slane %v1063, 4
      %v1065 = vadd.f32 %v1063, %v1064
      %v1066 = vrot.slane %v1065, 2
      %v1067 = vadd.f32 %v1065, %v1066
      %v1068 = vrot.slane %v1067, 1
      %v1069 = vadd.f32 %v1067, %v1068
      %vm1070 = vcmask 1040384
      %v1071 = vsel %vm1070, %v968, %v1069
      %vm1072 = vcmask 58368
      %1073 = vst.msk [vmem:[%s187] sm:$0x3] %vm1072, %v1071
      %s1074 = smul.u32 32, %s15
      %p1075 = scmp.lt.s32.totalorder %s1074, 63
      %s1076 = scalar_select %p1075, %s1074, 63
      %s1077 = smul.addr %s1076, 8
      %s1078 = scalar_lea.vmem %s2, %s1077
      %p1079 = scmp.lt.s32.totalorder %s15, 1
      %s1080 = scalar_select %p1079, %s15, 1
      %s1081 = smul.addr %s1080, 2
      %s1082 = scalar_lea.vmem %s3, %s1081
      // Predicated region
      $region29: #{unet4_forward.30} parent=27 // pred_check
        %p1083 = pneg %p80
      $region30: #{unet4_forward.30} parent=27 // pred_check_branch
        %1085 = sbr.rel (%p1083) target = $region32
      $region31: #{unet4_forward.30} parent=27 // pred_region
        %s1086 = smul.u32 32, %s15
      $region32: #{unet4_forward.30} parent=27 // pred_fallthru
        _
      // Predicated region
      $region33: #{unet4_forward.30} parent=27 // pred_check
        %p1087 = pneg %p106
      $region34: #{unet4_forward.30} parent=27 // pred_check_branch
        %1089 = sbr.rel (%p1087) target = $region36
      $region35: #{unet4_forward.30} parent=27 // pred_region
        _
      $region36: #{unet4_forward.30} parent=27 // pred_fallthru
        _
    $region28: #{unet4_forward.30} parent=5 // pred_fallthru
      _
    %p1090 = scmp.le.s32.totalorder 2, %s10
    // Predicated region
    $region37: #{unet4_forward.30} parent=5 // pred_check
      %p1091 = pneg %p1090
    $region38: #{unet4_forward.30} parent=5 // pred_check_branch
      %1093 = sbr.rel (%p1091) target = $region40
    $region39: #{unet4_forward.30} parent=5 // pred_region
      %s1094 = ssub.s32 %s10, 2
      // Predicated region
      $region41: #{unet4_forward.30} parent=39 // pred_check
        %p1095 = pneg %p86
      $region42: #{unet4_forward.30} parent=39 // pred_check_branch
        %1097 = sbr.rel (%p1095) target = $region44
      $region43: #{unet4_forward.30} parent=39 // pred_region
        %s1098 = smul.u32 32, %s16
        %p1099 = scmp.lt.s32.totalorder %s1098, 63
        %s1100 = scalar_select %p1099, %s1098, 63
        %s1101 = smul.addr %s1100, 8
        %s1102 = scalar_lea.vmem %s2, %s1101
      $region44: #{unet4_forward.30} parent=39 // pred_fallthru
        _
      // Predicated region
      $region45: #{unet4_forward.30} parent=39 // pred_check
        %p1103 = pneg %p112
      $region46: #{unet4_forward.30} parent=39 // pred_check_branch
        %1105 = sbr.rel (%p1103) target = $region48
      $region47: #{unet4_forward.30} parent=39 // pred_region
        %p1106 = scmp.lt.s32.totalorder %s16, 1
        %s1107 = scalar_select %p1106, %s16, 1
        %s1108 = smul.addr %s1107, 2
        %s1109 = scalar_lea.vmem %s3, %s1108
      $region48: #{unet4_forward.30} parent=39 // pred_fallthru
        _
    $region40: #{unet4_forward.30} parent=5 // pred_fallthru
      _
  $region6: #{unet4_forward.30} parent=0 // loop_footer
    %s14 = sadd.s32 1, %s10
  $region7: #{unet4_forward.30} parent=0 // loop_footer_branch
    %9 = sbr.rel target = $region3
  $region8: #{unet4_forward.30} parent=0 // loop_exit
    _

</llo_original>
